<compile_context>
chip_gen: v7x
topology: tpu7x:2x2x1
jax: 0.10.0
libtpu: 0.0.40
codegen_flags: <defaults>
</compile_context>

<pallas_src>
import math
from functools import partial

import jax
import jax.numpy as jnp
from jax.experimental import pallas as pl
from jax.experimental.pallas import tpu as pltpu


# ----------------------------- Pallas kernel ------------------------------ #
def _matmul_bias_kernel(a_ref, b_ref, bias_ref, o_ref, *, relu):
    # Full-K block: one MXU pass per (M-tile, N) -- no accumulator scratch,
    # no init/finalize branches.  Epilogue (bias + ReLU) in f32.
    acc = jnp.dot(a_ref[...], b_ref[...], preferred_element_type=jnp.float32)
    out = acc + bias_ref[...]
    if relu:
        out = jnp.maximum(out, 0.0)
    o_ref[...] = out.astype(o_ref.dtype)


def _pick_tm(M):
    # Tile M only when it divides exactly (full-dim blocks are exempt from the
    # (8,128) rule, so no padding is ever required).  >1 M-block gives the
    # pipeline something to overlap and lets v7x shard across both TCs.
    for tm in (512, 256, 128):
        if M % tm == 0 and M // tm >= 2:
            return tm
    return M


def pallas_matmul_bias(a, b, bias, relu=False):
    """out = relu?(a @ b + bias).  a:(M,K) b:(K,N) bias:(N,).
    No padding: K and N are full blocks; M is tiled only when it divides."""
    M, K = a.shape
    K2, N = b.shape
    assert K == K2
    # bf16 operands: half the HBM->VMEM DMA, native MXU path on v5e/v6e/v7x.
    a = a.astype(jnp.bfloat16)
    b = b.astype(jnp.bfloat16)
    bias2d = bias.reshape(1, N).astype(jnp.float32)

    tm = _pick_tm(M)
    grid = (M // tm,)
    cost = pl.CostEstimate(
        flops=2 * M * K * N,
        transcendentals=0,
        bytes_accessed=M * K * 2 + K * N * 2 + N * 4 + M * N * 4)

    return pl.pallas_call(
        partial(_matmul_bias_kernel, relu=relu),
        out_shape=jax.ShapeDtypeStruct((M, N), jnp.float32),
        grid=grid,
        in_specs=[
            pl.BlockSpec((tm, K), lambda i: (i, 0)),
            pl.BlockSpec((K, N), lambda i: (0, 0)),
            pl.BlockSpec((1, N), lambda i: (0, 0)),
        ],
        out_specs=pl.BlockSpec((tm, N), lambda i: (i, 0)),
        compiler_params=pltpu.CompilerParams(
            dimension_semantics=("parallel",)),
        cost_estimate=cost,
    )(a, b, bias2d)


# ------------------------------ conv as matmul ----------------------------- #
def _im2col(x, kh, kw, stride, padding):
    """x: NHWC -> (N*Ho*Wo, kh*kw*C) patches (channel-minor, matches
    w.reshape(kh*kw*cin, cout))."""
    N, H, W, C = x.shape
    xp = jnp.pad(x, ((0, 0), (padding, padding), (padding, padding), (0, 0)))
    Ho = (H + 2 * padding - kh) // stride + 1
    Wo = (W + 2 * padding - kw) // stride + 1
    cols = []
    for i in range(kh):
        for j in range(kw):
            cols.append(
                xp[:, i:i + stride * Ho:stride, j:j + stride * Wo:stride, :])
    patches = jnp.concatenate(cols, axis=-1).reshape(N * Ho * Wo, kh * kw * C)
    return patches, Ho, Wo


def _rows(x, kh, kw, padding):
    """Patch rows for a stride-1 conv; 1x1 convs are a pure reshape."""
    N, H, W, C = x.shape
    if kh == 1 and kw == 1 and padding == 0:
        return x.reshape(N * H * W, C), H, W
    return _im2col(x, kh, kw, 1, padding)


def conv2d(x, w, b, stride=1, padding=0, relu=False):
    """x: NHWC, w: (kh, kw, cin, cout), b: (cout,)."""
    N, H, W, C = x.shape
    kh, kw, cin, cout = w.shape
    if stride == 1:
        patches, Ho, Wo = _rows(x, kh, kw, padding)
    else:
        patches, Ho, Wo = _im2col(x, kh, kw, stride, padding)
    y = pallas_matmul_bias(patches, w.reshape(kh * kw * cin, cout), b, relu=relu)
    return y.reshape(N, Ho, Wo, cout)


def conv2d_multi(xs, w, b, padding=0, relu=False):
    """Shared-weight stride-1 conv over several feature maps in ONE matmul
    (rows of all levels concatenated along M)."""
    kh, kw, cin, cout = w.shape
    rows, meta = [], []
    for x in xs:
        N = x.shape[0]
        p, Ho, Wo = _rows(x, kh, kw, padding)
        rows.append(p)
        meta.append((N, Ho, Wo))
    a = jnp.concatenate(rows, axis=0)
    y = pallas_matmul_bias(a, w.reshape(kh * kw * cin, cout), b, relu=relu)
    outs, off = [], 0
    for (N, Ho, Wo) in meta:
        m = N * Ho * Wo
        outs.append(y[off:off + m].reshape(N, Ho, Wo, cout))
        off += m
    return outs


def conv2d_multi_packed(xs, ws, bs, padding=0, relu=False):
    """Per-level weights with identical (kh,kw,cin) packed along N, level rows
    concatenated along M -> one matmul instead of len(xs).  Each level keeps
    only its own output columns (tiny redundant FLOPs, far fewer launches)."""
    kh, kw, cin, _ = ws[0].shape
    rows, meta = [], []
    for x in xs:
        N = x.shape[0]
        p, Ho, Wo = _rows(x, kh, kw, padding)
        rows.append(p)
        meta.append((N, Ho, Wo))
    a = jnp.concatenate(rows, axis=0)
    wmat = jnp.concatenate(
        [w.reshape(kh * kw * cin, w.shape[-1]) for w in ws], axis=1)
    bvec = jnp.concatenate(bs, axis=0)
    y = pallas_matmul_bias(a, wmat, bvec, relu=relu)
    outs, off_m, off_n = [], 0, 0
    for (N, Ho, Wo), w in zip(meta, ws):
        m, n = N * Ho * Wo, w.shape[-1]
        outs.append(y[off_m:off_m + m, off_n:off_n + n].reshape(N, Ho, Wo, n))
        off_m += m
        off_n += n
    return outs


def upsample2x_nearest(x):
    x = jnp.repeat(x, 2, axis=1)
    return jnp.repeat(x, 2, axis=2)


def coord_feature(x):
    N, H, W, _ = x.shape
    ys = jnp.linspace(-1.0, 1.0, H)
    xs = jnp.linspace(-1.0, 1.0, W)
    yy = jnp.broadcast_to(ys[:, None], (H, W))
    xx = jnp.broadcast_to(xs[None, :], (H, W))
    coord = jnp.stack([xx, yy], axis=-1)
    return jnp.broadcast_to(coord[None], (N, H, W, 2)).astype(x.dtype)


# ------------------------------- parameters -------------------------------- #
def conv_init(key, kh, kw, cin, cout):
    fan_in = kh * kw * cin
    w = jax.random.normal(key, (kh, kw, cin, cout), jnp.float32) / math.sqrt(fan_in)
    b = jnp.zeros((cout,), jnp.float32)
    return (w, b)


def init_params(key, fpn_ch=32, num_classes=4, grids=(8, 4, 2)):
    keys = iter(jax.random.split(key, 32))
    p = {}
    # backbone (ResNet-style strided stages, shrunk)
    p['stem'] = conv_init(next(keys), 3, 3, 3, 8)
    p['s2'] = conv_init(next(keys), 3, 3, 8, 16)
    p['s3'] = conv_init(next(keys), 3, 3, 16, 32)
    p['s4'] = conv_init(next(keys), 3, 3, 32, 64)
    # FPN neck
    for i, cin in enumerate((16, 32, 64)):
        p[f'lat{i}'] = conv_init(next(keys), 1, 1, cin, fpn_ch)
        p[f'fpn{i}'] = conv_init(next(keys), 3, 3, fpn_ch, fpn_ch)
    # SOLO head (trunk convs shared across levels; grid-dependent mask output)
    p['mask_conv'] = conv_init(next(keys), 3, 3, fpn_ch + 2, fpn_ch)
    for i, S in enumerate(grids):
        p[f'mask_out{i}'] = conv_init(next(keys), 1, 1, fpn_ch, S * S)
    p['cate_conv'] = conv_init(next(keys), 3, 3, fpn_ch, fpn_ch)
    p['cate_out'] = conv_init(next(keys), 3, 3, fpn_ch, num_classes)
    return p


# -------------------------------- forward ---------------------------------- #
def solo_v1_forward(params, x_nchw, grids=(8, 4, 2)):
    x = jnp.transpose(x_nchw, (0, 2, 3, 1)).astype(jnp.float32)  # NCHW -> NHWC

    # ---- backbone ----
    c1 = conv2d(x, *params['stem'], stride=2, padding=1, relu=True)   # 16x16x8
    c2 = conv2d(c1, *params['s2'], stride=2, padding=1, relu=True)    # 8x8x16
    c3 = conv2d(c2, *params['s3'], stride=2, padding=1, relu=True)    # 4x4x32
    c4 = conv2d(c3, *params['s4'], stride=2, padding=1, relu=True)    # 2x2x64
    feats = [c2, c3, c4]

    # ---- FPN neck (lateral 1x1 + top-down nearest upsample + 3x3 smooth) ----
    lats = [conv2d(f, *params[f'lat{i}']) for i, f in enumerate(feats)]
    lats[1] = lats[1] + upsample2x_nearest(lats[2])
    lats[0] = lats[0] + upsample2x_nearest(lats[1])
    # per-level smooth weights packed along N -> one pallas_call for 3 levels
    pyramid = conv2d_multi_packed(
        lats,
        [params[f'fpn{i}'][0] for i in range(3)],
        [params[f'fpn{i}'][1] for i in range(3)],
        padding=1)

    # ---- SOLO head: mask branch (CoordConv -> shared 3x3 -> per-level 1x1) ---
    mask_in = [jnp.concatenate([p, coord_feature(p)], axis=-1) for p in pyramid]
    mask_feat = conv2d_multi(mask_in, *params['mask_conv'], padding=1, relu=True)
    mask_outs = conv2d_multi_packed(
        mask_feat,
        [params[f'mask_out{i}'][0] for i in range(3)],
        [params[f'mask_out{i}'][1] for i in range(3)],
        padding=0)
    mask_preds = []
    for m, S in zip(mask_outs, grids):
        N, H, W, _ = m.shape
        # NOTE: half-pixel (align_corners=False) bilinear semantics, matching
        # the default F.interpolate(align_corners=False) in the reference.
        m = jax.image.resize(m, (N, 2 * H, 2 * W, S * S), method='bilinear')
        mask_preds.append(jnp.transpose(m, (0, 3, 1, 2)))  # N, S^2, 2H, 2W

    # ---- SOLO head: category branch (resize to SxS -> shared 3x3 convs) -----
    cate_in = []
    for p, S in zip(pyramid, grids):
        N, H, W, C = p.shape
        if (H, W) != (S, S):
            p = jax.image.resize(p, (N, S, S, C), method='bilinear')
        cate_in.append(p)
    cate_feat = conv2d_multi(cate_in, *params['cate_conv'], padding=1, relu=True)
    cate_outs = conv2d_multi(cate_feat, *params['cate_out'], padding=1)
    cate_preds = [jnp.transpose(c, (0, 3, 1, 2)) for c in cate_outs]

    # TODO(synk): eval-time post_process (points-NMS / matrix-NMS + scoring)
    # has no clean Pallas equivalent; raw head predictions are returned.
    return mask_preds, cate_preds


if __name__ == "__main__":
    key = jax.random.PRNGKey(0)
    kx, kp = jax.random.split(key)
    x = jax.random.normal(kx, (2, 3, 32, 32), jnp.float32)  # NCHW like PyTorch
    params = init_params(kp)

    fwd = jax.jit(solo_v1_forward)
    mask_preds, cate_preds = fwd(params, x)
    jax.block_until_ready((mask_preds, cate_preds))

    assert mask_preds[0].shape == (2, 64, 16, 16)
    assert mask_preds[1].shape == (2, 16, 8, 8)
    assert mask_preds[2].shape == (2, 4, 4, 4)
    assert cate_preds[0].shape == (2, 4, 8, 8)
    assert cate_preds[2].shape == (2, 4, 2, 2)
    print("KERNEL_OK")
</pallas_src>

<mosaic_0001>
module attributes {stable_mosaic.version = 11 : i64} {
  func.func @_matmul_bias_kernel(%arg0: i32, %arg1: memref<256x27xbf16, #tpu.memory_space<vmem>>, %arg2: memref<27x8xbf16, #tpu.memory_space<vmem>>, %arg3: memref<1x8xf32, #tpu.memory_space<vmem>>, %arg4: memref<256x8xf32, #tpu.memory_space<vmem>>) attributes {dimension_semantics = [#tpu.dimension_semantics<parallel>], iteration_bounds = array<i64: 2>, scalar_prefetch = 0 : i64, scratch_operands = 0 : i64, tpu.core_type = #tpu.core_type<tc>, window_params = [{transform_indices = @transform_0, window_bounds = array<i64: 256, 27>}, {pipeline_mode = #tpu.pipeline_mode<synchronous>, transform_indices = @transform_1, window_bounds = array<i64: 27, 8>}, {pipeline_mode = #tpu.pipeline_mode<synchronous>, transform_indices = @transform_2, window_bounds = array<i64: 1, 8>}, {transform_indices = @transform_3, window_bounds = array<i64: 256, 8>}]} {
    %c0 = arith.constant 0 : index
    %c0_0 = arith.constant 0 : index
    %0 = vector.load %arg1[%c0, %c0_0] : memref<256x27xbf16, #tpu.memory_space<vmem>>, vector<256x27xbf16>
    %c0_1 = arith.constant 0 : index
    %c0_2 = arith.constant 0 : index
    %1 = vector.load %arg2[%c0_1, %c0_2] : memref<27x8xbf16, #tpu.memory_space<vmem>>, vector<27x8xbf16>
    %cst = arith.constant dense<0.000000e+00> : vector<256x8xf32>
    %2 = tpu.matmul %0, %1, %cst {dimension_numbers = #tpu.dot_dimension_numbers<[1], [0], [0], [1], [0, 0, 1, 1], [], []>} : vector<256x27xbf16>, vector<27x8xbf16>, vector<256x8xf32> -> vector<256x8xf32>
    %c0_3 = arith.constant 0 : index
    %c0_4 = arith.constant 0 : index
    %3 = vector.load %arg3[%c0_3, %c0_4] : memref<1x8xf32, #tpu.memory_space<vmem>>, vector<1x8xf32>
    %4 = vector.broadcast %3 : vector<1x8xf32> to vector<256x8xf32>
    %5 = arith.addf %2, %4 : vector<256x8xf32>
    %cst_5 = arith.constant 0.000000e+00 : f32
    %6 = vector.broadcast %cst_5 : f32 to vector<256x8xf32>
    %7 = arith.maximumf %5, %6 : vector<256x8xf32>
    %c0_6 = arith.constant 0 : index
    %c0_7 = arith.constant 0 : index
    %8 = vector.load %arg4[%c0_6, %c0_7] : memref<256x8xf32, #tpu.memory_space<vmem>>, vector<256x8xf32>
    tpu.vector_store %arg4[%c0_6, %c0_7], %7 {strides = array<i32>} : memref<256x8xf32, #tpu.memory_space<vmem>>, vector<256x8xf32>,
    return
  }
  func.func @transform_0(%arg0: i32) -> (i32, i32) {
    %c0_i32 = arith.constant 0 : i32
    %c0_i32_0 = arith.constant 0 : i32
    return %arg0, %c0_i32 : i32, i32
  }
  func.func @transform_1(%arg0: i32) -> (i32, i32) {
    %c0_i32 = arith.constant 0 : i32
    %c0_i32_0 = arith.constant 0 : i32
    %c0_i32_1 = arith.constant 0 : i32
    return %c0_i32, %c0_i32_0 : i32, i32
  }
  func.func @transform_2(%arg0: i32) -> (i32, i32) {
    %c0_i32 = arith.constant 0 : i32
    %c0_i32_0 = arith.constant 0 : i32
    %c0_i32_1 = arith.constant 0 : i32
    return %c0_i32, %c0_i32_0 : i32, i32
  }
  func.func @transform_3(%arg0: i32) -> (i32, i32) {
    %c0_i32 = arith.constant 0 : i32
    %c0_i32_0 = arith.constant 0 : i32
    return %arg0, %c0_i32 : i32, i32
  }
}

module attributes {stable_mosaic.version = 11 : i64} {
  func.func @_matmul_bias_kernel(%arg0: i32, %arg1: memref<128x72xbf16, #tpu.memory_space<vmem>>, %arg2: memref<72x16xbf16, #tpu.memory_space<vmem>>, %arg3: memref<1x16xf32, #tpu.memory_space<vmem>>, %arg4: memref<128x16xf32, #tpu.memory_space<vmem>>) attributes {dimension_semantics = [#tpu.dimension_semantics<parallel>], iteration_bounds = array<i64: 1>, scalar_prefetch = 0 : i64, scratch_operands = 0 : i64, tpu.core_type = #tpu.core_type<tc>, window_params = [{transform_indices = @transform_0, window_bounds = array<i64: 128, 72>}, {pipeline_mode = #tpu.pipeline_mode<synchronous>, transform_indices = @transform_1, window_bounds = array<i64: 72, 16>}, {pipeline_mode = #tpu.pipeline_mode<synchronous>, transform_indices = @transform_2, window_bounds = array<i64: 1, 16>}, {transform_indices = @transform_3, window_bounds = array<i64: 128, 16>}]} {
    %c0 = arith.constant 0 : index
    %c0_0 = arith.constant 0 : index
    %0 = vector.load %arg1[%c0, %c0_0] : memref<128x72xbf16, #tpu.memory_space<vmem>>, vector<128x72xbf16>
    %c0_1 = arith.constant 0 : index
    %c0_2 = arith.constant 0 : index
    %1 = vector.load %arg2[%c0_1, %c0_2] : memref<72x16xbf16, #tpu.memory_space<vmem>>, vector<72x16xbf16>
    %cst = arith.constant dense<0.000000e+00> : vector<128x16xf32>
    %2 = tpu.matmul %0, %1, %cst {dimension_numbers = #tpu.dot_dimension_numbers<[1], [0], [0], [1], [0, 0, 1, 1], [], []>} : vector<128x72xbf16>, vector<72x16xbf16>, vector<128x16xf32> -> vector<128x16xf32>
    %c0_3 = arith.constant 0 : index
    %c0_4 = arith.constant 0 : index
    %3 = vector.load %arg3[%c0_3, %c0_4] : memref<1x16xf32, #tpu.memory_space<vmem>>, vector<1x16xf32>
    %4 = vector.broadcast %3 : vector<1x16xf32> to vector<128x16xf32>
    %5 = arith.addf %2, %4 : vector<128x16xf32>
    %cst_5 = arith.constant 0.000000e+00 : f32
    %6 = vector.broadcast %cst_5 : f32 to vector<128x16xf32>
    %7 = arith.maximumf %5, %6 : vector<128x16xf32>
    %c0_6 = arith.constant 0 : index
    %c0_7 = arith.constant 0 : index
    %8 = vector.load %arg4[%c0_6, %c0_7] : memref<128x16xf32, #tpu.memory_space<vmem>>, vector<128x16xf32>
    tpu.vector_store %arg4[%c0_6, %c0_7], %7 {strides = array<i32>} : memref<128x16xf32, #tpu.memory_space<vmem>>, vector<128x16xf32>,
    return
  }
  func.func @transform_0(%arg0: i32) -> (i32, i32) {
    %c0_i32 = arith.constant 0 : i32
    %c0_i32_0 = arith.constant 0 : i32
    return %arg0, %c0_i32 : i32, i32
  }
  func.func @transform_1(%arg0: i32) -> (i32, i32) {
    %c0_i32 = arith.constant 0 : i32
    %c0_i32_0 = arith.constant 0 : i32
    %c0_i32_1 = arith.constant 0 : i32
    return %c0_i32, %c0_i32_0 : i32, i32
  }
  func.func @transform_2(%arg0: i32) -> (i32, i32) {
    %c0_i32 = arith.constant 0 : i32
    %c0_i32_0 = arith.constant 0 : i32
    %c0_i32_1 = arith.constant 0 : i32
    return %c0_i32, %c0_i32_0 : i32, i32
  }
  func.func @transform_3(%arg0: i32) -> (i32, i32) {
    %c0_i32 = arith.constant 0 : i32
    %c0_i32_0 = arith.constant 0 : i32
    return %arg0, %c0_i32 : i32, i32
  }
}

module attributes {stable_mosaic.version = 11 : i64} {
  func.func @_matmul_bias_kernel(%arg0: i32, %arg1: memref<32x144xbf16, #tpu.memory_space<vmem>>, %arg2: memref<144x32xbf16, #tpu.memory_space<vmem>>, %arg3: memref<1x32xf32, #tpu.memory_space<vmem>>, %arg4: memref<32x32xf32, #tpu.memory_space<vmem>>) attributes {dimension_semantics = [#tpu.dimension_semantics<parallel>], iteration_bounds = array<i64: 1>, scalar_prefetch = 0 : i64, scratch_operands = 0 : i64, tpu.core_type = #tpu.core_type<tc>, window_params = [{transform_indices = @transform_0, window_bounds = array<i64: 32, 144>}, {pipeline_mode = #tpu.pipeline_mode<synchronous>, transform_indices = @transform_1, window_bounds = array<i64: 144, 32>}, {pipeline_mode = #tpu.pipeline_mode<synchronous>, transform_indices = @transform_2, window_bounds = array<i64: 1, 32>}, {transform_indices = @transform_3, window_bounds = array<i64: 32, 32>}]} {
    %c0 = arith.constant 0 : index
    %c0_0 = arith.constant 0 : index
    %0 = vector.load %arg1[%c0, %c0_0] : memref<32x144xbf16, #tpu.memory_space<vmem>>, vector<32x144xbf16>
    %c0_1 = arith.constant 0 : index
    %c0_2 = arith.constant 0 : index
    %1 = vector.load %arg2[%c0_1, %c0_2] : memref<144x32xbf16, #tpu.memory_space<vmem>>, vector<144x32xbf16>
    %cst = arith.constant dense<0.000000e+00> : vector<32x32xf32>
    %2 = tpu.matmul %0, %1, %cst {dimension_numbers = #tpu.dot_dimension_numbers<[1], [0], [0], [1], [0, 0, 1, 1], [], []>} : vector<32x144xbf16>, vector<144x32xbf16>, vector<32x32xf32> -> vector<32x32xf32>
    %c0_3 = arith.constant 0 : index
    %c0_4 = arith.constant 0 : index
    %3 = vector.load %arg3[%c0_3, %c0_4] : memref<1x32xf32, #tpu.memory_space<vmem>>, vector<1x32xf32>
    %4 = vector.broadcast %3 : vector<1x32xf32> to vector<32x32xf32>
    %5 = arith.addf %2, %4 : vector<32x32xf32>
    %cst_5 = arith.constant 0.000000e+00 : f32
    %6 = vector.broadcast %cst_5 : f32 to vector<32x32xf32>
    %7 = arith.maximumf %5, %6 : vector<32x32xf32>
    %c0_6 = arith.constant 0 : index
    %c0_7 = arith.constant 0 : index
    %8 = vector.load %arg4[%c0_6, %c0_7] : memref<32x32xf32, #tpu.memory_space<vmem>>, vector<32x32xf32>
    tpu.vector_store %arg4[%c0_6, %c0_7], %7 {strides = array<i32>} : memref<32x32xf32, #tpu.memory_space<vmem>>, vector<32x32xf32>,
    return
  }
  func.func @transform_0(%arg0: i32) -> (i32, i32) {
    %c0_i32 = arith.constant 0 : i32
    %c0_i32_0 = arith.constant 0 : i32
    return %arg0, %c0_i32 : i32, i32
  }
  func.func @transform_1(%arg0: i32) -> (i32, i32) {
    %c0_i32 = arith.constant 0 : i32
    %c0_i32_0 = arith.constant 0 : i32
    %c0_i32_1 = arith.constant 0 : i32
    return %c0_i32, %c0_i32_0 : i32, i32
  }
  func.func @transform_2(%arg0: i32) -> (i32, i32) {
    %c0_i32 = arith.constant 0 : i32
    %c0_i32_0 = arith.constant 0 : i32
    %c0_i32_1 = arith.constant 0 : i32
    return %c0_i32, %c0_i32_0 : i32, i32
  }
  func.func @transform_3(%arg0: i32) -> (i32, i32) {
    %c0_i32 = arith.constant 0 : i32
    %c0_i32_0 = arith.constant 0 : i32
    return %arg0, %c0_i32 : i32, i32
  }
}

module attributes {stable_mosaic.version = 11 : i64} {
  func.func @_matmul_bias_kernel(%arg0: i32, %arg1: memref<8x288xbf16, #tpu.memory_space<vmem>>, %arg2: memref<288x64xbf16, #tpu.memory_space<vmem>>, %arg3: memref<1x64xf32, #tpu.memory_space<vmem>>, %arg4: memref<8x64xf32, #tpu.memory_space<vmem>>) attributes {dimension_semantics = [#tpu.dimension_semantics<parallel>], iteration_bounds = array<i64: 1>, scalar_prefetch = 0 : i64, scratch_operands = 0 : i64, tpu.core_type = #tpu.core_type<tc>, window_params = [{transform_indices = @transform_0, window_bounds = array<i64: 8, 288>}, {pipeline_mode = #tpu.pipeline_mode<synchronous>, transform_indices = @transform_1, window_bounds = array<i64: 288, 64>}, {pipeline_mode = #tpu.pipeline_mode<synchronous>, transform_indices = @transform_2, window_bounds = array<i64: 1, 64>}, {transform_indices = @transform_3, window_bounds = array<i64: 8, 64>}]} {
    %c0 = arith.constant 0 : index
    %c0_0 = arith.constant 0 : index
    %0 = vector.load %arg1[%c0, %c0_0] : memref<8x288xbf16, #tpu.memory_space<vmem>>, vector<8x288xbf16>
    %c0_1 = arith.constant 0 : index
    %c0_2 = arith.constant 0 : index
    %1 = vector.load %arg2[%c0_1, %c0_2] : memref<288x64xbf16, #tpu.memory_space<vmem>>, vector<288x64xbf16>
    %cst = arith.constant dense<0.000000e+00> : vector<8x64xf32>
    %2 = tpu.matmul %0, %1, %cst {dimension_numbers = #tpu.dot_dimension_numbers<[1], [0], [0], [1], [0, 0, 1, 1], [], []>} : vector<8x288xbf16>, vector<288x64xbf16>, vector<8x64xf32> -> vector<8x64xf32>
    %c0_3 = arith.constant 0 : index
    %c0_4 = arith.constant 0 : index
    %3 = vector.load %arg3[%c0_3, %c0_4] : memref<1x64xf32, #tpu.memory_space<vmem>>, vector<1x64xf32>
    %4 = vector.broadcast %3 : vector<1x64xf32> to vector<8x64xf32>
    %5 = arith.addf %2, %4 : vector<8x64xf32>
    %cst_5 = arith.constant 0.000000e+00 : f32
    %6 = vector.broadcast %cst_5 : f32 to vector<8x64xf32>
    %7 = arith.maximumf %5, %6 : vector<8x64xf32>
    %c0_6 = arith.constant 0 : index
    %c0_7 = arith.constant 0 : index
    %8 = vector.load %arg4[%c0_6, %c0_7] : memref<8x64xf32, #tpu.memory_space<vmem>>, vector<8x64xf32>
    tpu.vector_store %arg4[%c0_6, %c0_7], %7 {strides = array<i32>} : memref<8x64xf32, #tpu.memory_space<vmem>>, vector<8x64xf32>,
    return
  }
  func.func @transform_0(%arg0: i32) -> (i32, i32) {
    %c0_i32 = arith.constant 0 : i32
    %c0_i32_0 = arith.constant 0 : i32
    return %arg0, %c0_i32 : i32, i32
  }
  func.func @transform_1(%arg0: i32) -> (i32, i32) {
    %c0_i32 = arith.constant 0 : i32
    %c0_i32_0 = arith.constant 0 : i32
    %c0_i32_1 = arith.constant 0 : i32
    return %c0_i32, %c0_i32_0 : i32, i32
  }
  func.func @transform_2(%arg0: i32) -> (i32, i32) {
    %c0_i32 = arith.constant 0 : i32
    %c0_i32_0 = arith.constant 0 : i32
    %c0_i32_1 = arith.constant 0 : i32
    return %c0_i32, %c0_i32_0 : i32, i32
  }
  func.func @transform_3(%arg0: i32) -> (i32, i32) {
    %c0_i32 = arith.constant 0 : i32
    %c0_i32_0 = arith.constant 0 : i32
    return %arg0, %c0_i32 : i32, i32
  }
}

module attributes {stable_mosaic.version = 11 : i64} {
  func.func @_matmul_bias_kernel(%arg0: i32, %arg1: memref<8x64xbf16, #tpu.memory_space<vmem>>, %arg2: memref<64x32xbf16, #tpu.memory_space<vmem>>, %arg3: memref<1x32xf32, #tpu.memory_space<vmem>>, %arg4: memref<8x32xf32, #tpu.memory_space<vmem>>) attributes {dimension_semantics = [#tpu.dimension_semantics<parallel>], iteration_bounds = array<i64: 1>, scalar_prefetch = 0 : i64, scratch_operands = 0 : i64, tpu.core_type = #tpu.core_type<tc>, window_params = [{transform_indices = @transform_0, window_bounds = array<i64: 8, 64>}, {pipeline_mode = #tpu.pipeline_mode<synchronous>, transform_indices = @transform_1, window_bounds = array<i64: 64, 32>}, {pipeline_mode = #tpu.pipeline_mode<synchronous>, transform_indices = @transform_2, window_bounds = array<i64: 1, 32>}, {transform_indices = @transform_3, window_bounds = array<i64: 8, 32>}]} {
    %c0 = arith.constant 0 : index
    %c0_0 = arith.constant 0 : index
    %0 = vector.load %arg1[%c0, %c0_0] : memref<8x64xbf16, #tpu.memory_space<vmem>>, vector<8x64xbf16>
    %c0_1 = arith.constant 0 : index
    %c0_2 = arith.constant 0 : index
    %1 = vector.load %arg2[%c0_1, %c0_2] : memref<64x32xbf16, #tpu.memory_space<vmem>>, vector<64x32xbf16>
    %cst = arith.constant dense<0.000000e+00> : vector<8x32xf32>
    %2 = tpu.matmul %0, %1, %cst {dimension_numbers = #tpu.dot_dimension_numbers<[1], [0], [0], [1], [0, 0, 1, 1], [], []>} : vector<8x64xbf16>, vector<64x32xbf16>, vector<8x32xf32> -> vector<8x32xf32>
    %c0_3 = arith.constant 0 : index
    %c0_4 = arith.constant 0 : index
    %3 = vector.load %arg3[%c0_3, %c0_4] : memref<1x32xf32, #tpu.memory_space<vmem>>, vector<1x32xf32>
    %4 = vector.broadcast %3 : vector<1x32xf32> to vector<8x32xf32>
    %5 = arith.addf %2, %4 : vector<8x32xf32>
    %c0_5 = arith.constant 0 : index
    %c0_6 = arith.constant 0 : index
    %6 = vector.load %arg4[%c0_5, %c0_6] : memref<8x32xf32, #tpu.memory_space<vmem>>, vector<8x32xf32>
    tpu.vector_store %arg4[%c0_5, %c0_6], %5 {strides = array<i32>} : memref<8x32xf32, #tpu.memory_space<vmem>>, vector<8x32xf32>,
    return
  }
  func.func @transform_0(%arg0: i32) -> (i32, i32) {
    %c0_i32 = arith.constant 0 : i32
    %c0_i32_0 = arith.constant 0 : i32
    return %arg0, %c0_i32 : i32, i32
  }
  func.func @transform_1(%arg0: i32) -> (i32, i32) {
    %c0_i32 = arith.constant 0 : i32
    %c0_i32_0 = arith.constant 0 : i32
    %c0_i32_1 = arith.constant 0 : i32
    return %c0_i32, %c0_i32_0 : i32, i32
  }
  func.func @transform_2(%arg0: i32) -> (i32, i32) {
    %c0_i32 = arith.constant 0 : i32
    %c0_i32_0 = arith.constant 0 : i32
    %c0_i32_1 = arith.constant 0 : i32
    return %c0_i32, %c0_i32_0 : i32, i32
  }
  func.func @transform_3(%arg0: i32) -> (i32, i32) {
    %c0_i32 = arith.constant 0 : i32
    %c0_i32_0 = arith.constant 0 : i32
    return %arg0, %c0_i32 : i32, i32
  }
}

module attributes {stable_mosaic.version = 11 : i64} {
  func.func @_matmul_bias_kernel(%arg0: i32, %arg1: memref<32x32xbf16, #tpu.memory_space<vmem>>, %arg2: memref<32x32xbf16, #tpu.memory_space<vmem>>, %arg3: memref<1x32xf32, #tpu.memory_space<vmem>>, %arg4: memref<32x32xf32, #tpu.memory_space<vmem>>) attributes {dimension_semantics = [#tpu.dimension_semantics<parallel>], iteration_bounds = array<i64: 1>, scalar_prefetch = 0 : i64, scratch_operands = 0 : i64, tpu.core_type = #tpu.core_type<tc>, window_params = [{transform_indices = @transform_0, window_bounds = array<i64: 32, 32>}, {pipeline_mode = #tpu.pipeline_mode<synchronous>, transform_indices = @transform_1, window_bounds = array<i64: 32, 32>}, {pipeline_mode = #tpu.pipeline_mode<synchronous>, transform_indices = @transform_2, window_bounds = array<i64: 1, 32>}, {transform_indices = @transform_3, window_bounds = array<i64: 32, 32>}]} {
    %c0 = arith.constant 0 : index
    %c0_0 = arith.constant 0 : index
    %0 = vector.load %arg1[%c0, %c0_0] : memref<32x32xbf16, #tpu.memory_space<vmem>>, vector<32x32xbf16>
    %c0_1 = arith.constant 0 : index
    %c0_2 = arith.constant 0 : index
    %1 = vector.load %arg2[%c0_1, %c0_2] : memref<32x32xbf16, #tpu.memory_space<vmem>>, vector<32x32xbf16>
    %cst = arith.constant dense<0.000000e+00> : vector<32x32xf32>
    %2 = tpu.matmul %0, %1, %cst {dimension_numbers = #tpu.dot_dimension_numbers<[1], [0], [0], [1], [0, 0, 1, 1], [], []>} : vector<32x32xbf16>, vector<32x32xbf16>, vector<32x32xf32> -> vector<32x32xf32>
    %c0_3 = arith.constant 0 : index
    %c0_4 = arith.constant 0 : index
    %3 = vector.load %arg3[%c0_3, %c0_4] : memref<1x32xf32, #tpu.memory_space<vmem>>, vector<1x32xf32>
    %4 = vector.broadcast %3 : vector<1x32xf32> to vector<32x32xf32>
    %5 = arith.addf %2, %4 : vector<32x32xf32>
    %c0_5 = arith.constant 0 : index
    %c0_6 = arith.constant 0 : index
    %6 = vector.load %arg4[%c0_5, %c0_6] : memref<32x32xf32, #tpu.memory_space<vmem>>, vector<32x32xf32>
    tpu.vector_store %arg4[%c0_5, %c0_6], %5 {strides = array<i32>} : memref<32x32xf32, #tpu.memory_space<vmem>>, vector<32x32xf32>,
    return
  }
  func.func @transform_0(%arg0: i32) -> (i32, i32) {
    %c0_i32 = arith.constant 0 : i32
    %c0_i32_0 = arith.constant 0 : i32
    return %arg0, %c0_i32 : i32, i32
  }
  func.func @transform_1(%arg0: i32) -> (i32, i32) {
    %c0_i32 = arith.constant 0 : i32
    %c0_i32_0 = arith.constant 0 : i32
    %c0_i32_1 = arith.constant 0 : i32
    return %c0_i32, %c0_i32_0 : i32, i32
  }
  func.func @transform_2(%arg0: i32) -> (i32, i32) {
    %c0_i32 = arith.constant 0 : i32
    %c0_i32_0 = arith.constant 0 : i32
    %c0_i32_1 = arith.constant 0 : i32
    return %c0_i32, %c0_i32_0 : i32, i32
  }
  func.func @transform_3(%arg0: i32) -> (i32, i32) {
    %c0_i32 = arith.constant 0 : i32
    %c0_i32_0 = arith.constant 0 : i32
    return %arg0, %c0_i32 : i32, i32
  }
}

module attributes {stable_mosaic.version = 11 : i64} {
  func.func @_matmul_bias_kernel(%arg0: i32, %arg1: memref<128x16xbf16, #tpu.memory_space<vmem>>, %arg2: memref<16x32xbf16, #tpu.memory_space<vmem>>, %arg3: memref<1x32xf32, #tpu.memory_space<vmem>>, %arg4: memref<128x32xf32, #tpu.memory_space<vmem>>) attributes {dimension_semantics = [#tpu.dimension_semantics<parallel>], iteration_bounds = array<i64: 1>, scalar_prefetch = 0 : i64, scratch_operands = 0 : i64, tpu.core_type = #tpu.core_type<tc>, window_params = [{transform_indices = @transform_0, window_bounds = array<i64: 128, 16>}, {pipeline_mode = #tpu.pipeline_mode<synchronous>, transform_indices = @transform_1, window_bounds = array<i64: 16, 32>}, {pipeline_mode = #tpu.pipeline_mode<synchronous>, transform_indices = @transform_2, window_bounds = array<i64: 1, 32>}, {transform_indices = @transform_3, window_bounds = array<i64: 128, 32>}]} {
    %c0 = arith.constant 0 : index
    %c0_0 = arith.constant 0 : index
    %0 = vector.load %arg1[%c0, %c0_0] : memref<128x16xbf16, #tpu.memory_space<vmem>>, vector<128x16xbf16>
    %c0_1 = arith.constant 0 : index
    %c0_2 = arith.constant 0 : index
    %1 = vector.load %arg2[%c0_1, %c0_2] : memref<16x32xbf16, #tpu.memory_space<vmem>>, vector<16x32xbf16>
    %cst = arith.constant dense<0.000000e+00> : vector<128x32xf32>
    %2 = tpu.matmul %0, %1, %cst {dimension_numbers = #tpu.dot_dimension_numbers<[1], [0], [0], [1], [0, 0, 1, 1], [], []>} : vector<128x16xbf16>, vector<16x32xbf16>, vector<128x32xf32> -> vector<128x32xf32>
    %c0_3 = arith.constant 0 : index
    %c0_4 = arith.constant 0 : index
    %3 = vector.load %arg3[%c0_3, %c0_4] : memref<1x32xf32, #tpu.memory_space<vmem>>, vector<1x32xf32>
    %4 = vector.broadcast %3 : vector<1x32xf32> to vector<128x32xf32>
    %5 = arith.addf %2, %4 : vector<128x32xf32>
    %c0_5 = arith.constant 0 : index
    %c0_6 = arith.constant 0 : index
    %6 = vector.load %arg4[%c0_5, %c0_6] : memref<128x32xf32, #tpu.memory_space<vmem>>, vector<128x32xf32>
    tpu.vector_store %arg4[%c0_5, %c0_6], %5 {strides = array<i32>} : memref<128x32xf32, #tpu.memory_space<vmem>>, vector<128x32xf32>,
    return
  }
  func.func @transform_0(%arg0: i32) -> (i32, i32) {
    %c0_i32 = arith.constant 0 : i32
    %c0_i32_0 = arith.constant 0 : i32
    return %arg0, %c0_i32 : i32, i32
  }
  func.func @transform_1(%arg0: i32) -> (i32, i32) {
    %c0_i32 = arith.constant 0 : i32
    %c0_i32_0 = arith.constant 0 : i32
    %c0_i32_1 = arith.constant 0 : i32
    return %c0_i32, %c0_i32_0 : i32, i32
  }
  func.func @transform_2(%arg0: i32) -> (i32, i32) {
    %c0_i32 = arith.constant 0 : i32
    %c0_i32_0 = arith.constant 0 : i32
    %c0_i32_1 = arith.constant 0 : i32
    return %c0_i32, %c0_i32_0 : i32, i32
  }
  func.func @transform_3(%arg0: i32) -> (i32, i32) {
    %c0_i32 = arith.constant 0 : i32
    %c0_i32_0 = arith.constant 0 : i32
    return %arg0, %c0_i32 : i32, i32
  }
}

module attributes {stable_mosaic.version = 11 : i64} {
  func.func @_matmul_bias_kernel(%arg0: i32, %arg1: memref<168x288xbf16, #tpu.memory_space<vmem>>, %arg2: memref<288x96xbf16, #tpu.memory_space<vmem>>, %arg3: memref<1x96xf32, #tpu.memory_space<vmem>>, %arg4: memref<168x96xf32, #tpu.memory_space<vmem>>) attributes {dimension_semantics = [#tpu.dimension_semantics<parallel>], iteration_bounds = array<i64: 1>, scalar_prefetch = 0 : i64, scratch_operands = 0 : i64, tpu.core_type = #tpu.core_type<tc>, window_params = [{transform_indices = @transform_0, window_bounds = array<i64: 168, 288>}, {pipeline_mode = #tpu.pipeline_mode<synchronous>, transform_indices = @transform_1, window_bounds = array<i64: 288, 96>}, {pipeline_mode = #tpu.pipeline_mode<synchronous>, transform_indices = @transform_2, window_bounds = array<i64: 1, 96>}, {transform_indices = @transform_3, window_bounds = array<i64: 168, 96>}]} {
    %c0 = arith.constant 0 : index
    %c0_0 = arith.constant 0 : index
    %0 = vector.load %arg1[%c0, %c0_0] : memref<168x288xbf16, #tpu.memory_space<vmem>>, vector<168x288xbf16>
    %c0_1 = arith.constant 0 : index
    %c0_2 = arith.constant 0 : index
    %1 = vector.load %arg2[%c0_1, %c0_2] : memref<288x96xbf16, #tpu.memory_space<vmem>>, vector<288x96xbf16>
    %cst = arith.constant dense<0.000000e+00> : vector<168x96xf32>
    %2 = tpu.matmul %0, %1, %cst {dimension_numbers = #tpu.dot_dimension_numbers<[1], [0], [0], [1], [0, 0, 1, 1], [], []>} : vector<168x288xbf16>, vector<288x96xbf16>, vector<168x96xf32> -> vector<168x96xf32>
    %c0_3 = arith.constant 0 : index
    %c0_4 = arith.constant 0 : index
    %3 = vector.load %arg3[%c0_3, %c0_4] : memref<1x96xf32, #tpu.memory_space<vmem>>, vector<1x96xf32>
    %4 = vector.broadcast %3 : vector<1x96xf32> to vector<168x96xf32>
    %5 = arith.addf %2, %4 : vector<168x96xf32>
    %c0_5 = arith.constant 0 : index
    %c0_6 = arith.constant 0 : index
    %6 = vector.load %arg4[%c0_5, %c0_6] : memref<168x96xf32, #tpu.memory_space<vmem>>, vector<168x96xf32>
    tpu.vector_store %arg4[%c0_5, %c0_6], %5 {strides = array<i32>} : memref<168x96xf32, #tpu.memory_space<vmem>>, vector<168x96xf32>,
    return
  }
  func.func @transform_0(%arg0: i32) -> (i32, i32) {
    %c0_i32 = arith.constant 0 : i32
    %c0_i32_0 = arith.constant 0 : i32
    return %arg0, %c0_i32 : i32, i32
  }
  func.func @transform_1(%arg0: i32) -> (i32, i32) {
    %c0_i32 = arith.constant 0 : i32
    %c0_i32_0 = arith.constant 0 : i32
    %c0_i32_1 = arith.constant 0 : i32
    return %c0_i32, %c0_i32_0 : i32, i32
  }
  func.func @transform_2(%arg0: i32) -> (i32, i32) {
    %c0_i32 = arith.constant 0 : i32
    %c0_i32_0 = arith.constant 0 : i32
    %c0_i32_1 = arith.constant 0 : i32
    return %c0_i32, %c0_i32_0 : i32, i32
  }
  func.func @transform_3(%arg0: i32) -> (i32, i32) {
    %c0_i32 = arith.constant 0 : i32
    %c0_i32_0 = arith.constant 0 : i32
    return %arg0, %c0_i32 : i32, i32
  }
}

module attributes {stable_mosaic.version = 11 : i64} {
  func.func @_matmul_bias_kernel(%arg0: i32, %arg1: memref<168x288xbf16, #tpu.memory_space<vmem>>, %arg2: memref<288x32xbf16, #tpu.memory_space<vmem>>, %arg3: memref<1x32xf32, #tpu.memory_space<vmem>>, %arg4: memref<168x32xf32, #tpu.memory_space<vmem>>) attributes {dimension_semantics = [#tpu.dimension_semantics<parallel>], iteration_bounds = array<i64: 1>, scalar_prefetch = 0 : i64, scratch_operands = 0 : i64, tpu.core_type = #tpu.core_type<tc>, window_params = [{transform_indices = @transform_0, window_bounds = array<i64: 168, 288>}, {pipeline_mode = #tpu.pipeline_mode<synchronous>, transform_indices = @transform_1, window_bounds = array<i64: 288, 32>}, {pipeline_mode = #tpu.pipeline_mode<synchronous>, transform_indices = @transform_2, window_bounds = array<i64: 1, 32>}, {transform_indices = @transform_3, window_bounds = array<i64: 168, 32>}]} {
    %c0 = arith.constant 0 : index
    %c0_0 = arith.constant 0 : index
    %0 = vector.load %arg1[%c0, %c0_0] : memref<168x288xbf16, #tpu.memory_space<vmem>>, vector<168x288xbf16>
    %c0_1 = arith.constant 0 : index
    %c0_2 = arith.constant 0 : index
    %1 = vector.load %arg2[%c0_1, %c0_2] : memref<288x32xbf16, #tpu.memory_space<vmem>>, vector<288x32xbf16>
    %cst = arith.constant dense<0.000000e+00> : vector<168x32xf32>
    %2 = tpu.matmul %0, %1, %cst {dimension_numbers = #tpu.dot_dimension_numbers<[1], [0], [0], [1], [0, 0, 1, 1], [], []>} : vector<168x288xbf16>, vector<288x32xbf16>, vector<168x32xf32> -> vector<168x32xf32>
    %c0_3 = arith.constant 0 : index
    %c0_4 = arith.constant 0 : index
    %3 = vector.load %arg3[%c0_3, %c0_4] : memref<1x32xf32, #tpu.memory_space<vmem>>, vector<1x32xf32>
    %4 = vector.broadcast %3 : vector<1x32xf32> to vector<168x32xf32>
    %5 = arith.addf %2, %4 : vector<168x32xf32>
    %cst_5 = arith.constant 0.000000e+00 : f32
    %6 = vector.broadcast %cst_5 : f32 to vector<168x32xf32>
    %7 = arith.maximumf %5, %6 : vector<168x32xf32>
    %c0_6 = arith.constant 0 : index
    %c0_7 = arith.constant 0 : index
    %8 = vector.load %arg4[%c0_6, %c0_7] : memref<168x32xf32, #tpu.memory_space<vmem>>, vector<168x32xf32>
    tpu.vector_store %arg4[%c0_6, %c0_7], %7 {strides = array<i32>} : memref<168x32xf32, #tpu.memory_space<vmem>>, vector<168x32xf32>,
    return
  }
  func.func @transform_0(%arg0: i32) -> (i32, i32) {
    %c0_i32 = arith.constant 0 : i32
    %c0_i32_0 = arith.constant 0 : i32
    return %arg0, %c0_i32 : i32, i32
  }
  func.func @transform_1(%arg0: i32) -> (i32, i32) {
    %c0_i32 = arith.constant 0 : i32
    %c0_i32_0 = arith.constant 0 : i32
    %c0_i32_1 = arith.constant 0 : i32
    return %c0_i32, %c0_i32_0 : i32, i32
  }
  func.func @transform_2(%arg0: i32) -> (i32, i32) {
    %c0_i32 = arith.constant 0 : i32
    %c0_i32_0 = arith.constant 0 : i32
    %c0_i32_1 = arith.constant 0 : i32
    return %c0_i32, %c0_i32_0 : i32, i32
  }
  func.func @transform_3(%arg0: i32) -> (i32, i32) {
    %c0_i32 = arith.constant 0 : i32
    %c0_i32_0 = arith.constant 0 : i32
    return %arg0, %c0_i32 : i32, i32
  }
}

module attributes {stable_mosaic.version = 11 : i64} {
  func.func @_matmul_bias_kernel(%arg0: i32, %arg1: memref<168x288xbf16, #tpu.memory_space<vmem>>, %arg2: memref<288x4xbf16, #tpu.memory_space<vmem>>, %arg3: memref<1x4xf32, #tpu.memory_space<vmem>>, %arg4: memref<168x4xf32, #tpu.memory_space<vmem>>) attributes {dimension_semantics = [#tpu.dimension_semantics<parallel>], iteration_bounds = array<i64: 1>, scalar_prefetch = 0 : i64, scratch_operands = 0 : i64, tpu.core_type = #tpu.core_type<tc>, window_params = [{transform_indices = @transform_0, window_bounds = array<i64: 168, 288>}, {pipeline_mode = #tpu.pipeline_mode<synchronous>, transform_indices = @transform_1, window_bounds = array<i64: 288, 4>}, {pipeline_mode = #tpu.pipeline_mode<synchronous>, transform_indices = @transform_2, window_bounds = array<i64: 1, 4>}, {transform_indices = @transform_3, window_bounds = array<i64: 168, 4>}]} {
    %c0 = arith.constant 0 : index
    %c0_0 = arith.constant 0 : index
    %0 = vector.load %arg1[%c0, %c0_0] : memref<168x288xbf16, #tpu.memory_space<vmem>>, vector<168x288xbf16>
    %c0_1 = arith.constant 0 : index
    %c0_2 = arith.constant 0 : index
    %1 = vector.load %arg2[%c0_1, %c0_2] : memref<288x4xbf16, #tpu.memory_space<vmem>>, vector<288x4xbf16>
    %cst = arith.constant dense<0.000000e+00> : vector<168x4xf32>
    %2 = tpu.matmul %0, %1, %cst {dimension_numbers = #tpu.dot_dimension_numbers<[1], [0], [0], [1], [0, 0, 1, 1], [], []>} : vector<168x288xbf16>, vector<288x4xbf16>, vector<168x4xf32> -> vector<168x4xf32>
    %c0_3 = arith.constant 0 : index
    %c0_4 = arith.constant 0 : index
    %3 = vector.load %arg3[%c0_3, %c0_4] : memref<1x4xf32, #tpu.memory_space<vmem>>, vector<1x4xf32>
    %4 = vector.broadcast %3 : vector<1x4xf32> to vector<168x4xf32>
    %5 = arith.addf %2, %4 : vector<168x4xf32>
    %c0_5 = arith.constant 0 : index
    %c0_6 = arith.constant 0 : index
    %6 = vector.load %arg4[%c0_5, %c0_6] : memref<168x4xf32, #tpu.memory_space<vmem>>, vector<168x4xf32>
    tpu.vector_store %arg4[%c0_5, %c0_6], %5 {strides = array<i32>} : memref<168x4xf32, #tpu.memory_space<vmem>>, vector<168x4xf32>,
    return
  }
  func.func @transform_0(%arg0: i32) -> (i32, i32) {
    %c0_i32 = arith.constant 0 : i32
    %c0_i32_0 = arith.constant 0 : i32
    return %arg0, %c0_i32 : i32, i32
  }
  func.func @transform_1(%arg0: i32) -> (i32, i32) {
    %c0_i32 = arith.constant 0 : i32
    %c0_i32_0 = arith.constant 0 : i32
    %c0_i32_1 = arith.constant 0 : i32
    return %c0_i32, %c0_i32_0 : i32, i32
  }
  func.func @transform_2(%arg0: i32) -> (i32, i32) {
    %c0_i32 = arith.constant 0 : i32
    %c0_i32_0 = arith.constant 0 : i32
    %c0_i32_1 = arith.constant 0 : i32
    return %c0_i32, %c0_i32_0 : i32, i32
  }
  func.func @transform_3(%arg0: i32) -> (i32, i32) {
    %c0_i32 = arith.constant 0 : i32
    %c0_i32_0 = arith.constant 0 : i32
    return %arg0, %c0_i32 : i32, i32
  }
}

module attributes {stable_mosaic.version = 11 : i64} {
  func.func @_matmul_bias_kernel(%arg0: i32, %arg1: memref<168x306xbf16, #tpu.memory_space<vmem>>, %arg2: memref<306x32xbf16, #tpu.memory_space<vmem>>, %arg3: memref<1x32xf32, #tpu.memory_space<vmem>>, %arg4: memref<168x32xf32, #tpu.memory_space<vmem>>) attributes {dimension_semantics = [#tpu.dimension_semantics<parallel>], iteration_bounds = array<i64: 1>, scalar_prefetch = 0 : i64, scratch_operands = 0 : i64, tpu.core_type = #tpu.core_type<tc>, window_params = [{transform_indices = @transform_0, window_bounds = array<i64: 168, 306>}, {pipeline_mode = #tpu.pipeline_mode<synchronous>, transform_indices = @transform_1, window_bounds = array<i64: 306, 32>}, {pipeline_mode = #tpu.pipeline_mode<synchronous>, transform_indices = @transform_2, window_bounds = array<i64: 1, 32>}, {transform_indices = @transform_3, window_bounds = array<i64: 168, 32>}]} {
    %c0 = arith.constant 0 : index
    %c0_0 = arith.constant 0 : index
    %0 = vector.load %arg1[%c0, %c0_0] : memref<168x306xbf16, #tpu.memory_space<vmem>>, vector<168x306xbf16>
    %c0_1 = arith.constant 0 : index
    %c0_2 = arith.constant 0 : index
    %1 = vector.load %arg2[%c0_1, %c0_2] : memref<306x32xbf16, #tpu.memory_space<vmem>>, vector<306x32xbf16>
    %cst = arith.constant dense<0.000000e+00> : vector<168x32xf32>
    %2 = tpu.matmul %0, %1, %cst {dimension_numbers = #tpu.dot_dimension_numbers<[1], [0], [0], [1], [0, 0, 1, 1], [], []>} : vector<168x306xbf16>, vector<306x32xbf16>, vector<168x32xf32> -> vector<168x32xf32>
    %c0_3 = arith.constant 0 : index
    %c0_4 = arith.constant 0 : index
    %3 = vector.load %arg3[%c0_3, %c0_4] : memref<1x32xf32, #tpu.memory_space<vmem>>, vector<1x32xf32>
    %4 = vector.broadcast %3 : vector<1x32xf32> to vector<168x32xf32>
    %5 = arith.addf %2, %4 : vector<168x32xf32>
    %cst_5 = arith.constant 0.000000e+00 : f32
    %6 = vector.broadcast %cst_5 : f32 to vector<168x32xf32>
    %7 = arith.maximumf %5, %6 : vector<168x32xf32>
    %c0_6 = arith.constant 0 : index
    %c0_7 = arith.constant 0 : index
    %8 = vector.load %arg4[%c0_6, %c0_7] : memref<168x32xf32, #tpu.memory_space<vmem>>, vector<168x32xf32>
    tpu.vector_store %arg4[%c0_6, %c0_7], %7 {strides = array<i32>} : memref<168x32xf32, #tpu.memory_space<vmem>>, vector<168x32xf32>,
    return
  }
  func.func @transform_0(%arg0: i32) -> (i32, i32) {
    %c0_i32 = arith.constant 0 : i32
    %c0_i32_0 = arith.constant 0 : i32
    return %arg0, %c0_i32 : i32, i32
  }
  func.func @transform_1(%arg0: i32) -> (i32, i32) {
    %c0_i32 = arith.constant 0 : i32
    %c0_i32_0 = arith.constant 0 : i32
    %c0_i32_1 = arith.constant 0 : i32
    return %c0_i32, %c0_i32_0 : i32, i32
  }
  func.func @transform_2(%arg0: i32) -> (i32, i32) {
    %c0_i32 = arith.constant 0 : i32
    %c0_i32_0 = arith.constant 0 : i32
    %c0_i32_1 = arith.constant 0 : i32
    return %c0_i32, %c0_i32_0 : i32, i32
  }
  func.func @transform_3(%arg0: i32) -> (i32, i32) {
    %c0_i32 = arith.constant 0 : i32
    %c0_i32_0 = arith.constant 0 : i32
    return %arg0, %c0_i32 : i32, i32
  }
}

module attributes {stable_mosaic.version = 11 : i64} {
  func.func @_matmul_bias_kernel(%arg0: i32, %arg1: memref<168x32xbf16, #tpu.memory_space<vmem>>, %arg2: memref<32x84xbf16, #tpu.memory_space<vmem>>, %arg3: memref<1x84xf32, #tpu.memory_space<vmem>>, %arg4: memref<168x84xf32, #tpu.memory_space<vmem>>) attributes {dimension_semantics = [#tpu.dimension_semantics<parallel>], iteration_bounds = array<i64: 1>, scalar_prefetch = 0 : i64, scratch_operands = 0 : i64, tpu.core_type = #tpu.core_type<tc>, window_params = [{transform_indices = @transform_0, window_bounds = array<i64: 168, 32>}, {pipeline_mode = #tpu.pipeline_mode<synchronous>, transform_indices = @transform_1, window_bounds = array<i64: 32, 84>}, {pipeline_mode = #tpu.pipeline_mode<synchronous>, transform_indices = @transform_2, window_bounds = array<i64: 1, 84>}, {transform_indices = @transform_3, window_bounds = array<i64: 168, 84>}]} {
    %c0 = arith.constant 0 : index
    %c0_0 = arith.constant 0 : index
    %0 = vector.load %arg1[%c0, %c0_0] : memref<168x32xbf16, #tpu.memory_space<vmem>>, vector<168x32xbf16>
    %c0_1 = arith.constant 0 : index
    %c0_2 = arith.constant 0 : index
    %1 = vector.load %arg2[%c0_1, %c0_2] : memref<32x84xbf16, #tpu.memory_space<vmem>>, vector<32x84xbf16>
    %cst = arith.constant dense<0.000000e+00> : vector<168x84xf32>
    %2 = tpu.matmul %0, %1, %cst {dimension_numbers = #tpu.dot_dimension_numbers<[1], [0], [0], [1], [0, 0, 1, 1], [], []>} : vector<168x32xbf16>, vector<32x84xbf16>, vector<168x84xf32> -> vector<168x84xf32>
    %c0_3 = arith.constant 0 : index
    %c0_4 = arith.constant 0 : index
    %3 = vector.load %arg3[%c0_3, %c0_4] : memref<1x84xf32, #tpu.memory_space<vmem>>, vector<1x84xf32>
    %4 = vector.broadcast %3 : vector<1x84xf32> to vector<168x84xf32>
    %5 = arith.addf %2, %4 : vector<168x84xf32>
    %c0_5 = arith.constant 0 : index
    %c0_6 = arith.constant 0 : index
    %6 = vector.load %arg4[%c0_5, %c0_6] : memref<168x84xf32, #tpu.memory_space<vmem>>, vector<168x84xf32>
    tpu.vector_store %arg4[%c0_5, %c0_6], %5 {strides = array<i32>} : memref<168x84xf32, #tpu.memory_space<vmem>>, vector<168x84xf32>,
    return
  }
  func.func @transform_0(%arg0: i32) -> (i32, i32) {
    %c0_i32 = arith.constant 0 : i32
    %c0_i32_0 = arith.constant 0 : i32
    return %arg0, %c0_i32 : i32, i32
  }
  func.func @transform_1(%arg0: i32) -> (i32, i32) {
    %c0_i32 = arith.constant 0 : i32
    %c0_i32_0 = arith.constant 0 : i32
    %c0_i32_1 = arith.constant 0 : i32
    return %c0_i32, %c0_i32_0 : i32, i32
  }
  func.func @transform_2(%arg0: i32) -> (i32, i32) {
    %c0_i32 = arith.constant 0 : i32
    %c0_i32_0 = arith.constant 0 : i32
    %c0_i32_1 = arith.constant 0 : i32
    return %c0_i32, %c0_i32_0 : i32, i32
  }
  func.func @transform_3(%arg0: i32) -> (i32, i32) {
    %c0_i32 = arith.constant 0 : i32
    %c0_i32_0 = arith.constant 0 : i32
    return %arg0, %c0_i32 : i32, i32
  }
}

</mosaic_0001>

<llo_original>
// kernel: solo_v1_forward.12
$region0: #{solo_v1_forward.12}
  #allocation0 [shape = 'u32[]', space=smem, size = 0x4, offset = 0x4, fixed_abs, tag = 'smem constant byte address 0x4 - core index']
  #allocation1 [shape = 'u32[144,128]{1,0:T(1,128)}', space=vmem, size = 0x12000, scoped, tag = 'internal scratch']
  %s0 = inlined_call_operand.vmem [shape: bf16[512,27], index: 0, kind: input, shape index: {}]
  %s1 = inlined_call_operand.vmem [shape: bf16[27,8], index: 1, kind: input, shape index: {}]
  %s2 = inlined_call_operand.vmem [shape: f32[1,8], index: 2, kind: input, shape index: {}]
  %s3 = inlined_call_operand.vmem [shape: f32[512,8], index: 3, kind: output, shape index: {}]
  %s4 = sld [smem:[#allocation0]]
  $region45: #{solo_v1_forward.12} parent=0
    _
  %s6 = ssub.s32 1, %s4
  %s7 = scalar_select 0, %s6, %s4
  loop: start=0, step=1, limit=4
  $region2: #{solo_v1_forward.12} parent=0 // loop_pre_header
    _
  $region3: #{solo_v1_forward.12} parent=0 // loop_header
    %s9 = sphi 0, %s13
    %p10 = scmp.ge.s32.totalorder %s9, 4
    %s19 = sphi 0, %s21
    %s22 = sphi 0, %s19
    %s23 = sphi 0, %s22
    %s39 = sphi 0, %s23
    %s43 = sphi 0, %s43
    %s45 = sphi 0, %s43
    %s46 = sphi 0, %s45
    %s60 = sphi 0, %s46
    %s64 = sphi 0, %s64
    %s66 = sphi 0, %s64
    %s67 = sphi 0, %s66
    %s81 = sphi 0, %s67
    %s87 = sphi 0, %s89
    %s90 = sphi 0, %s87
    %s91 = sphi 0, %s90
    %s107 = sphi 0, %s91
  $region4: #{solo_v1_forward.12} parent=0 // loop_header_branch
    %12 = sbr.rel (%p10) target = $region8
  $region5: #{solo_v1_forward.12} parent=0 // loop_body
    %s14 = ssub.s32 %s9, 1
    %s15 = ssub.s32 %s9, 2
    %s16 = sadd.s32 %s9, 1
    %s17 = ssub.s32 %s9, %s16
    %p18 = scmp.eq.s32.totalorder %s17, 0
    %s20 = sadd.s32 %s19, 1
    %s21 = scalar_select %p18, %s19, %s20
    %p24 = pneg %p18
    %p25 = scmp.eq.s32.totalorder %s9, 1
    %p26 = por %p24, %p25
    %p27 = scmp.ne.s32.totalorder %s19, %s22
    %p28 = scmp.eq.s32.totalorder %s9, 0
    %p29 = por %p27, %p28
    %p30 = scmp.ne.s32.totalorder %s19, %s22
    %p31 = scmp.eq.s32.totalorder %s14, 1
    %p32 = por %p30, %p31
    %p33 = scmp.ne.s32.totalorder %s22, %s23
    %p34 = scmp.eq.s32.totalorder %s14, 0
    %p35 = por %p33, %p34
    %p36 = scmp.ne.s32.totalorder %s22, %s23
    %p37 = scmp.eq.s32.totalorder %s15, 1
    %p38 = por %p36, %p37
    %p40 = scmp.ne.s32.totalorder %s23, %s39
    %p41 = scmp.eq.s32.totalorder %s15, 0
    %p42 = por %p40, %p41
    %s44 = sadd.s32 %s43, 1
    %p47 = scmp.eq.s32.totalorder %s9, 1
    %p48 = scmp.ne.s32.totalorder %s43, %s45
    %p49 = scmp.eq.s32.totalorder %s9, 0
    %p50 = por %p48, %p49
    %p51 = scmp.ne.s32.totalorder %s43, %s45
    %p52 = scmp.eq.s32.totalorder %s14, 1
    %p53 = por %p51, %p52
    %p54 = scmp.ne.s32.totalorder %s45, %s46
    %p55 = scmp.eq.s32.totalorder %s14, 0
    %p56 = por %p54, %p55
    %p57 = scmp.ne.s32.totalorder %s45, %s46
    %p58 = scmp.eq.s32.totalorder %s15, 1
    %p59 = por %p57, %p58
    %p61 = scmp.ne.s32.totalorder %s46, %s60
    %p62 = scmp.eq.s32.totalorder %s15, 0
    %p63 = por %p61, %p62
    %s65 = sadd.s32 %s64, 1
    %p68 = scmp.eq.s32.totalorder %s9, 1
    %p69 = scmp.ne.s32.totalorder %s64, %s66
    %p70 = scmp.eq.s32.totalorder %s9, 0
    %p71 = por %p69, %p70
    %p72 = scmp.ne.s32.totalorder %s64, %s66
    %p73 = scmp.eq.s32.totalorder %s14, 1
    %p74 = por %p72, %p73
    %p75 = scmp.ne.s32.totalorder %s66, %s67
    %p76 = scmp.eq.s32.totalorder %s14, 0
    %p77 = por %p75, %p76
    %p78 = scmp.ne.s32.totalorder %s66, %s67
    %p79 = scmp.eq.s32.totalorder %s15, 1
    %p80 = por %p78, %p79
    %p82 = scmp.ne.s32.totalorder %s67, %s81
    %p83 = scmp.eq.s32.totalorder %s15, 0
    %p84 = por %p82, %p83
    %s85 = ssub.s32 %s9, %s16
    %p86 = scmp.eq.s32.totalorder %s85, 0
    %s88 = sadd.s32 %s87, 1
    %s89 = scalar_select %p86, %s87, %s88
    %p92 = pneg %p86
    %p93 = scmp.eq.s32.totalorder %s9, 1
    %p94 = por %p92, %p93
    %p95 = scmp.ne.s32.totalorder %s87, %s90
    %p96 = scmp.eq.s32.totalorder %s9, 0
    %p97 = por %p95, %p96
    %p98 = scmp.ne.s32.totalorder %s87, %s90
    %p99 = scmp.eq.s32.totalorder %s14, 1
    %p100 = por %p98, %p99
    %p101 = scmp.ne.s32.totalorder %s90, %s91
    %p102 = scmp.eq.s32.totalorder %s14, 0
    %p103 = por %p101, %p102
    %p104 = scmp.ne.s32.totalorder %s90, %s91
    %p105 = scmp.eq.s32.totalorder %s15, 1
    %p106 = por %p104, %p105
    %p108 = scmp.ne.s32.totalorder %s91, %s107
    %p109 = scmp.eq.s32.totalorder %s15, 0
    %p110 = por %p108, %p109
    %p111 = scmp.le.s32.totalorder 1, %s9
    %p112 = scmp.lt.s32.totalorder %s9, 3
    %p113 = pnand %p111, %p112
    %p114 = pneg %p113
    // Predicated region
    $region9: #{solo_v1_forward.12} parent=5 // pred_check
      _
    $region10: #{solo_v1_forward.12} parent=5 // pred_check_branch
      %116 = sbr.rel (%p113) target = $region12
    $region11: #{solo_v1_forward.12} parent=5 // pred_region
      %s117 = ssub.s32 %s9, 1
      // Predicated region
      $region13: #{solo_v1_forward.12} parent=11 // pred_check
        %p118 = pneg %p56
      $region14: #{solo_v1_forward.12} parent=11 // pred_check_branch
        %120 = sbr.rel (%p118) target = $region16
      $region15: #{solo_v1_forward.12} parent=11 // pred_region
        _
      $region16: #{solo_v1_forward.12} parent=11 // pred_fallthru
        _
      // Predicated region
      $region17: #{solo_v1_forward.12} parent=11 // pred_check
        %p121 = pneg %p77
      $region18: #{solo_v1_forward.12} parent=11 // pred_check_branch
        %123 = sbr.rel (%p121) target = $region20
      $region19: #{solo_v1_forward.12} parent=11 // pred_region
        _
      $region20: #{solo_v1_forward.12} parent=11 // pred_fallthru
        _
    $region12: #{solo_v1_forward.12} parent=5 // pred_fallthru
      _
    %p124 = scmp.lt.s32.totalorder %s9, 2
    // Predicated region
    $region21: #{solo_v1_forward.12} parent=5 // pred_check
      %p125 = pneg %p124
    $region22: #{solo_v1_forward.12} parent=5 // pred_check_branch
      %127 = sbr.rel (%p125) target = $region24
    $region23: #{solo_v1_forward.12} parent=5 // pred_region
      // Predicated region
      $region25: #{solo_v1_forward.12} parent=23 // pred_check
        %p128 = pneg %p29
      $region26: #{solo_v1_forward.12} parent=23 // pred_check_branch
        %130 = sbr.rel (%p128) target = $region28
      $region27: #{solo_v1_forward.12} parent=23 // pred_region
        %s131 = smul.u32 32, %s9
        %p132 = scmp.lt.s32.totalorder %s131, 63
        %s133 = scalar_select %p132, %s131, 63
        %s134 = smul.addr %s133, 4
        %s135 = scalar_lea.vmem %s0, %s134
        %s136 = smul.u32 32, %s9
      $region28: #{solo_v1_forward.12} parent=23 // pred_fallthru
        _
    $region24: #{solo_v1_forward.12} parent=5 // pred_fallthru
      _
    %p137 = scmp.le.s32.totalorder 1, %s9
    %p138 = scmp.lt.s32.totalorder %s9, 3
    %p139 = pnand %p137, %p138
    %p140 = pneg %p139
    // Predicated region
    $region29: #{solo_v1_forward.12} parent=5 // pred_check
      _
    $region30: #{solo_v1_forward.12} parent=5 // pred_check_branch
      %142 = sbr.rel (%p139) target = $region32
    $region31: #{solo_v1_forward.12} parent=5 // pred_region
      %s143 = ssub.s32 %s9, 1
      %s144 = smul.u32 32, %s14
      %p145 = scmp.lt.s32.totalorder %s144, 63
      %s146 = scalar_select %p145, %s144, 63
      %s147 = smul.addr %s146, 4
      %s148 = scalar_lea.vmem %s0, %s147
      %p149 = pneg %p35
      %p150 = pneg %p32
      %p151 = pneg %p56
      %p152 = pneg %p53
      %p153 = pneg %p77
      %p154 = pneg %p74
      %p155 = pneg %p103
      %p156 = pneg %p100
      %s157 = smul.u32 32, %s14
      %p158 = scmp.lt.s32.totalorder %s157, 63
      %s159 = scalar_select %p158, %s157, 63
      %s160 = smul.addr %s159, 8
      %s161 = scalar_lea.vmem %s3, %s160
      %s162 = smul.u32 32, %s14
      %p163 = scmp.lt.s32.totalorder %s162, 63
      %s164 = scalar_select %p163, %s162, 63
      %s165 = smul.addr %s164, 4
      %s166 = scalar_lea.vmem %s0, %s165
      %s167 = smul.u32 32, %s14
      %s168 = smul.u32 32, %s14
      %p169 = scmp.lt.s32.totalorder %s168, 63
      %s170 = scalar_select %p169, %s168, 63
      %s171 = smul.addr %s170, 8
      %s172 = scalar_lea.vmem %s3, %s171
      %s173 = smul.u32 32, %s14
      %v175 = vld [vmem:[%s166] sm:$0xf]
      %v176 = vld [vmem:[%s166 + $0x4] sm:$0xf]
      %v177 = vld [vmem:[%s166 + $0x8] sm:$0xf]
      %v178 = vld [vmem:[%s166 + $0xc] sm:$0xf]
      %v179 = vld [vmem:[%s166 + $0x10] sm:$0xf]
      %v180 = vld [vmem:[%s166 + $0x14] sm:$0xf]
      %v181 = vld [vmem:[%s166 + $0x18] sm:$0xf]
      %v182 = vld [vmem:[%s166 + $0x1c] sm:$0xf]
      %v183 = vld [vmem:[%s166 + $0x20] sm:$0xf]
      %v184 = vld [vmem:[%s166 + $0x24] sm:$0xf]
      %v185 = vld [vmem:[%s166 + $0x28] sm:$0xf]
      %v186 = vld [vmem:[%s166 + $0x2c] sm:$0xf]
      %v187 = vld [vmem:[%s166 + $0x30] sm:$0xf]
      %v188 = vld [vmem:[%s166 + $0x34] sm:$0xf]
      %v189 = vld [vmem:[%s166 + $0x38] sm:$0xf]
      %v190 = vld [vmem:[%s166 + $0x3c] sm:$0xf]
      %v191 = vld [vmem:[%s166 + $0x40] sm:$0xf]
      %v192 = vld [vmem:[%s166 + $0x44] sm:$0xf]
      %v193 = vld [vmem:[%s166 + $0x48] sm:$0xf]
      %v194 = vld [vmem:[%s166 + $0x4c] sm:$0xf]
      %v195 = vld [vmem:[%s166 + $0x50] sm:$0xf]
      %v196 = vld [vmem:[%s166 + $0x54] sm:$0xf]
      %v197 = vld [vmem:[%s166 + $0x58] sm:$0xf]
      %v198 = vld [vmem:[%s166 + $0x5c] sm:$0xf]
      %v199 = vld [vmem:[%s166 + $0x60] sm:$0xf]
      %v200 = vld [vmem:[%s166 + $0x64] sm:$0xf]
      %v201 = vld [vmem:[%s166 + $0x68] sm:$0xf]
      %v202 = vld [vmem:[%s166 + $0x6c] sm:$0xf]
      %v203 = vld [vmem:[%s166 + $0x70] sm:$0xf]
      %v204 = vld [vmem:[%s166 + $0x74] sm:$0xf]
      %v205 = vld [vmem:[%s166 + $0x78] sm:$0xf]
      %v206 = vld [vmem:[%s166 + $0x7c] sm:$0xf]
      %v207 = vld [vmem:[%s1] sm:$0xf]
      %v208 = vld [vmem:[%s1 + $0x4] sm:$0xf]
      %v209 = vld [vmem:[%s1 + $0x8] sm:$0xf]
      %v210 = vld [vmem:[%s1 + $0xc] sm:$0x3]
      %v211 = vld [vmem:[%s2] sm:$0x1]
      %v213 = vlaneseq
      %v214 = vshrl.u32 %v213, 7
      %v215 = vsub.s32 0, %v214
      %v216 = vrot.slane %v211, %v215
      %v250 = vunpack.c.l.b16 %v175
      %v251 = vunpack.c.l.b16 %v176
      %v252 = vunpack.c.l.b16 %v177
      %v253 = vunpack.c.l.b16 %v178
      %v254 = vunpack.c.l.b16 %v179
      %v255 = vunpack.c.l.b16 %v180
      %v256 = vunpack.c.l.b16 %v181
      %v257 = vunpack.c.l.b16 %v182
      %v258 = vunpack.c.l.b16 %v183
      %v259 = vunpack.c.l.b16 %v184
      %v260 = vunpack.c.l.b16 %v185
      %v261 = vunpack.c.l.b16 %v186
      %v262 = vunpack.c.l.b16 %v187
      %v263 = vunpack.c.l.b16 %v188
      %v264 = vunpack.c.l.b16 %v189
      %v265 = vunpack.c.l.b16 %v190
      %v266 = vunpack.c.l.b16 %v191
      %v267 = vunpack.c.l.b16 %v192
      %v268 = vunpack.c.l.b16 %v193
      %v269 = vunpack.c.l.b16 %v194
      %v270 = vunpack.c.l.b16 %v195
      %v271 = vunpack.c.l.b16 %v196
      %v272 = vunpack.c.l.b16 %v197
      %v273 = vunpack.c.l.b16 %v198
      %v274 = vunpack.c.l.b16 %v199
      %v275 = vunpack.c.l.b16 %v200
      %v276 = vunpack.c.l.b16 %v201
      %v277 = vunpack.c.l.b16 %v202
      %v278 = vunpack.c.l.b16 %v203
      %v279 = vunpack.c.l.b16 %v204
      %v280 = vunpack.c.l.b16 %v205
      %v281 = vunpack.c.l.b16 %v206
      %v282 = vpack.c.b16 %v251, %v250
      %v283 = vpack.c.b16 %v253, %v252
      %v284 = vpack.c.b16 %v255, %v254
      %v285 = vpack.c.b16 %v257, %v256
      %v286 = vpack.c.b16 %v259, %v258
      %v287 = vpack.c.b16 %v261, %v260
      %v288 = vpack.c.b16 %v263, %v262
      %v289 = vpack.c.b16 %v265, %v264
      %v290 = vpack.c.b16 %v267, %v266
      %v291 = vpack.c.b16 %v269, %v268
      %v292 = vpack.c.b16 %v271, %v270
      %v293 = vpack.c.b16 %v273, %v272
      %v294 = vpack.c.b16 %v275, %v274
      %v295 = vpack.c.b16 %v277, %v276
      %v296 = vpack.c.b16 %v279, %v278
      %v297 = vpack.c.b16 %v281, %v280
      %v302 = vunpack.c.l.b16 %v207
      %v303 = vunpack.c.l.b16 %v208
      %v304 = vunpack.c.l.b16 %v209
      %v305 = vunpack.c.l.b16 %v210
      %v306 = vpack.c.b16 %v303, %v302
      %v307 = vpack.c.b16 %v305, %v304
      %vm309 = vcmask 220160
      %v311 = vsel %vm309, %v282, 0
      %v314 = vsel %vm309, %v283, 0
      %v317 = vsel %vm309, %v284, 0
      %v320 = vsel %vm309, %v285, 0
      %v323 = vsel %vm309, %v286, 0
      %v326 = vsel %vm309, %v287, 0
      %v329 = vsel %vm309, %v288, 0
      %v332 = vsel %vm309, %v289, 0
      %v335 = vsel %vm309, %v290, 0
      %v338 = vsel %vm309, %v291, 0
      %v341 = vsel %vm309, %v292, 0
      %v344 = vsel %vm309, %v293, 0
      %v347 = vsel %vm309, %v294, 0
      %v350 = vsel %vm309, %v295, 0
      %v353 = vsel %vm309, %v296, 0
      %v356 = vsel %vm309, %v297, 0
      %vm358 = vcmask 1044480
      %vm359 = vcmask 1045504
      %v360 = vsel %vm358, 4294967295, 65535
      %v361 = vsel %vm359, %v360, 0
      %v363 = vand.u32 %v307, %v361
      %365 = vmatprep.subr.bf16.mxu0 0
      %366 = vmatpush1.bf16.msra.mxu0 %v306
      %367 = vmatprep.subr.bf16.mxu0 0
      %368 = vmatpush1.bf16.msra.mxu0 %v363
      %369 = vmatprep.subr.bf16.mxu0 0
      %370 = vmatpush1.bf16.msra.mxu0 0
      %371 = vmatprep.subr.bf16.mxu0 0
      %372 = vmatpush1.bf16.msra.mxu0 0
      %373 = vmatprep.subr.bf16.mxu0 0
      %374 = vmatpush1.bf16.msra.mxu0 0
      %375 = vmatprep.subr.bf16.mxu0 0
      %376 = vmatpush1.bf16.msra.mxu0 0
      %377 = vmatprep.subr.bf16.mxu0 0
      %378 = vmatpush1.bf16.msra.mxu0 0
      %379 = vmatprep.subr.bf16.mxu0 0
      %380 = vmatpush1.bf16.msra.mxu0 0
      %381 = vmatprep.subr.bf16.mxu0 0
      %382 = vmatpush1.bf16.msra.mxu0 0
      %383 = vmatprep.subr.bf16.mxu0 0
      %384 = vmatpush1.bf16.msra.mxu0 0
      %385 = vmatprep.subr.bf16.mxu0 0
      %386 = vmatpush1.bf16.msra.mxu0 0
      %387 = vmatprep.subr.bf16.mxu0 0
      %388 = vmatpush1.bf16.msra.mxu0 0
      %389 = vmatprep.subr.bf16.mxu0 0
      %390 = vmatpush1.bf16.msra.mxu0 0
      %391 = vmatprep.subr.bf16.mxu0 0
      %392 = vmatpush1.bf16.msra.mxu0 0
      %393 = vmatprep.subr.bf16.mxu0 0
      %394 = vmatpush1.bf16.msra.mxu0 0
      %395 = vmatprep.subr.bf16.mxu0 0
      %396 = vmatpush1.bf16.msra.mxu0 0
      %397 = vmatprep.mubr.bf16.mxu0 0
      %398 = vmatmul.mubr.bf16.gmra.mrb[0].mxu0 %v311
      %v399 = vpop.f32.mrb[0].mxu0
      %v400 = vadd.f32 %v216, %v399
      %v401 = vpop.f32.mrb[0].mxu0
      %v402 = vpop.f32.mrb[0].mxu0
      %v403 = vadd.f32 %v216, %v402
      %v404 = vpop.f32.mrb[0].mxu0
      %405 = vmatprep.mubr.bf16.mxu0 0
      %406 = vmatmul.mubr.bf16.gmra.mrb[0].mxu0 %v314
      %v407 = vpop.f32.mrb[0].mxu0
      %v408 = vadd.f32 %v216, %v407
      %v409 = vpop.f32.mrb[0].mxu0
      %v410 = vpop.f32.mrb[0].mxu0
      %v411 = vadd.f32 %v216, %v410
      %v412 = vpop.f32.mrb[0].mxu0
      %413 = vmatprep.mubr.bf16.mxu0 0
      %414 = vmatmul.mubr.bf16.gmra.mrb[0].mxu0 %v317
      %v415 = vpop.f32.mrb[0].mxu0
      %v416 = vadd.f32 %v216, %v415
      %v417 = vpop.f32.mrb[0].mxu0
      %v418 = vpop.f32.mrb[0].mxu0
      %v419 = vadd.f32 %v216, %v418
      %v420 = vpop.f32.mrb[0].mxu0
      %421 = vmatprep.mubr.bf16.mxu0 0
      %422 = vmatmul.mubr.bf16.gmra.mrb[0].mxu0 %v320
      %v423 = vpop.f32.mrb[0].mxu0
      %v424 = vadd.f32 %v216, %v423
      %v425 = vpop.f32.mrb[0].mxu0
      %v426 = vpop.f32.mrb[0].mxu0
      %v427 = vadd.f32 %v216, %v426
      %v428 = vpop.f32.mrb[0].mxu0
      %429 = vmatprep.mubr.bf16.mxu0 0
      %430 = vmatmul.mubr.bf16.gmra.mrb[0].mxu0 %v323
      %v431 = vpop.f32.mrb[0].mxu0
      %v432 = vadd.f32 %v216, %v431
      %v433 = vpop.f32.mrb[0].mxu0
      %v434 = vpop.f32.mrb[0].mxu0
      %v435 = vadd.f32 %v216, %v434
      %v436 = vpop.f32.mrb[0].mxu0
      %437 = vmatprep.mubr.bf16.mxu0 0
      %438 = vmatmul.mubr.bf16.gmra.mrb[0].mxu0 %v326
      %v439 = vpop.f32.mrb[0].mxu0
      %v440 = vadd.f32 %v216, %v439
      %v441 = vpop.f32.mrb[0].mxu0
      %v442 = vpop.f32.mrb[0].mxu0
      %v443 = vadd.f32 %v216, %v442
      %v444 = vpop.f32.mrb[0].mxu0
      %445 = vmatprep.mubr.bf16.mxu0 0
      %446 = vmatmul.mubr.bf16.gmra.mrb[0].mxu0 %v329
      %v447 = vpop.f32.mrb[0].mxu0
      %v448 = vadd.f32 %v216, %v447
      %v449 = vpop.f32.mrb[0].mxu0
      %v450 = vpop.f32.mrb[0].mxu0
      %v451 = vadd.f32 %v216, %v450
      %v452 = vpop.f32.mrb[0].mxu0
      %453 = vmatprep.mubr.bf16.mxu0 0
      %454 = vmatmul.mubr.bf16.gmra.mrb[0].mxu0 %v332
      %v455 = vpop.f32.mrb[0].mxu0
      %v456 = vadd.f32 %v216, %v455
      %v457 = vpop.f32.mrb[0].mxu0
      %v458 = vpop.f32.mrb[0].mxu0
      %v459 = vadd.f32 %v216, %v458
      %v460 = vpop.f32.mrb[0].mxu0
      %461 = vmatprep.mubr.bf16.mxu0 0
      %462 = vmatmul.mubr.bf16.gmra.mrb[0].mxu0 %v335
      %v463 = vpop.f32.mrb[0].mxu0
      %v464 = vadd.f32 %v216, %v463
      %v465 = vpop.f32.mrb[0].mxu0
      %v466 = vpop.f32.mrb[0].mxu0
      %v467 = vadd.f32 %v216, %v466
      %v468 = vpop.f32.mrb[0].mxu0
      %469 = vmatprep.mubr.bf16.mxu0 0
      %470 = vmatmul.mubr.bf16.gmra.mrb[0].mxu0 %v338
      %v471 = vpop.f32.mrb[0].mxu0
      %v472 = vadd.f32 %v216, %v471
      %v473 = vpop.f32.mrb[0].mxu0
      %v474 = vpop.f32.mrb[0].mxu0
      %v475 = vadd.f32 %v216, %v474
      %v476 = vpop.f32.mrb[0].mxu0
      %477 = vmatprep.mubr.bf16.mxu0 0
      %478 = vmatmul.mubr.bf16.gmra.mrb[0].mxu0 %v341
      %v479 = vpop.f32.mrb[0].mxu0
      %v480 = vadd.f32 %v216, %v479
      %v481 = vpop.f32.mrb[0].mxu0
      %v482 = vpop.f32.mrb[0].mxu0
      %v483 = vadd.f32 %v216, %v482
      %v484 = vpop.f32.mrb[0].mxu0
      %485 = vmatprep.mubr.bf16.mxu0 0
      %486 = vmatmul.mubr.bf16.gmra.mrb[0].mxu0 %v344
      %v487 = vpop.f32.mrb[0].mxu0
      %v488 = vadd.f32 %v216, %v487
      %v489 = vpop.f32.mrb[0].mxu0
      %v490 = vpop.f32.mrb[0].mxu0
      %v491 = vadd.f32 %v216, %v490
      %v492 = vpop.f32.mrb[0].mxu0
      %493 = vmatprep.mubr.bf16.mxu0 0
      %494 = vmatmul.mubr.bf16.gmra.mrb[0].mxu0 %v347
      %v495 = vpop.f32.mrb[0].mxu0
      %v496 = vadd.f32 %v216, %v495
      %v497 = vpop.f32.mrb[0].mxu0
      %v498 = vpop.f32.mrb[0].mxu0
      %v499 = vadd.f32 %v216, %v498
      %v500 = vpop.f32.mrb[0].mxu0
      %501 = vmatprep.mubr.bf16.mxu0 0
      %502 = vmatmul.mubr.bf16.gmra.mrb[0].mxu0 %v350
      %v503 = vpop.f32.mrb[0].mxu0
      %v504 = vadd.f32 %v216, %v503
      %v505 = vpop.f32.mrb[0].mxu0
      %v506 = vpop.f32.mrb[0].mxu0
      %v507 = vadd.f32 %v216, %v506
      %v508 = vpop.f32.mrb[0].mxu0
      %509 = vmatprep.mubr.bf16.mxu0 0
      %510 = vmatmul.mubr.bf16.gmra.mrb[0].mxu0 %v353
      %v511 = vpop.f32.mrb[0].mxu0
      %v512 = vadd.f32 %v216, %v511
      %v513 = vpop.f32.mrb[0].mxu0
      %v514 = vpop.f32.mrb[0].mxu0
      %v515 = vadd.f32 %v216, %v514
      %v516 = vpop.f32.mrb[0].mxu0
      %517 = vmatprep.mubr.bf16.mxu0 0
      %518 = vmatmul.mubr.bf16.gmra.mrb[0].mxu0 %v356
      %v519 = vpop.f32.mrb[0].mxu0
      %v520 = vadd.f32 %v216, %v519
      %v521 = vpop.f32.mrb[0].mxu0
      %v522 = vpop.f32.mrb[0].mxu0
      %v523 = vadd.f32 %v216, %v522
      %v524 = vpop.f32.mrb[0].mxu0
      %525 = vdwg.mxu0
      %v526 = vmax.f32 %v400, 0.0
      %v527 = vmax.f32 %v403, 0.0
      %v528 = vmax.f32 %v408, 0.0
      %v529 = vmax.f32 %v411, 0.0
      %v530 = vmax.f32 %v416, 0.0
      %v531 = vmax.f32 %v419, 0.0
      %v532 = vmax.f32 %v424, 0.0
      %v533 = vmax.f32 %v427, 0.0
      %v534 = vmax.f32 %v432, 0.0
      %v535 = vmax.f32 %v435, 0.0
      %v536 = vmax.f32 %v440, 0.0
      %v537 = vmax.f32 %v443, 0.0
      %v538 = vmax.f32 %v448, 0.0
      %v539 = vmax.f32 %v451, 0.0
      %v540 = vmax.f32 %v456, 0.0
      %v541 = vmax.f32 %v459, 0.0
      %v542 = vmax.f32 %v464, 0.0
      %v543 = vmax.f32 %v467, 0.0
      %v544 = vmax.f32 %v472, 0.0
      %v545 = vmax.f32 %v475, 0.0
      %v546 = vmax.f32 %v480, 0.0
      %v547 = vmax.f32 %v483, 0.0
      %v548 = vmax.f32 %v488, 0.0
      %v549 = vmax.f32 %v491, 0.0
      %v550 = vmax.f32 %v496, 0.0
      %v551 = vmax.f32 %v499, 0.0
      %v552 = vmax.f32 %v504, 0.0
      %v553 = vmax.f32 %v507, 0.0
      %v554 = vmax.f32 %v512, 0.0
      %v555 = vmax.f32 %v515, 0.0
      %v556 = vmax.f32 %v520, 0.0
      %v557 = vmax.f32 %v523, 0.0
      %vm558 = vcmask 64512
      %559 = vst.msk [vmem:[%s172] sm:$0xff] %vm558, %v526
      %560 = vst.msk [vmem:[%s172 + $0x8] sm:$0xff] %vm558, %v527
      %561 = vst.msk [vmem:[%s172 + $0x10] sm:$0xff] %vm558, %v528
      %562 = vst.msk [vmem:[%s172 + $0x18] sm:$0xff] %vm558, %v529
      %563 = vst.msk [vmem:[%s172 + $0x20] sm:$0xff] %vm558, %v530
      %564 = vst.msk [vmem:[%s172 + $0x28] sm:$0xff] %vm558, %v531
      %565 = vst.msk [vmem:[%s172 + $0x30] sm:$0xff] %vm558, %v532
      %566 = vst.msk [vmem:[%s172 + $0x38] sm:$0xff] %vm558, %v533
      %567 = vst.msk [vmem:[%s172 + $0x40] sm:$0xff] %vm558, %v534
      %568 = vst.msk [vmem:[%s172 + $0x48] sm:$0xff] %vm558, %v535
      %569 = vst.msk [vmem:[%s172 + $0x50] sm:$0xff] %vm558, %v536
      %570 = vst.msk [vmem:[%s172 + $0x58] sm:$0xff] %vm558, %v537
      %571 = vst.msk [vmem:[%s172 + $0x60] sm:$0xff] %vm558, %v538
      %572 = vst.msk [vmem:[%s172 + $0x68] sm:$0xff] %vm558, %v539
      %573 = vst.msk [vmem:[%s172 + $0x70] sm:$0xff] %vm558, %v540
      %574 = vst.msk [vmem:[%s172 + $0x78] sm:$0xff] %vm558, %v541
      %575 = vst.msk [vmem:[%s172 + $0x80] sm:$0xff] %vm558, %v542
      %576 = vst.msk [vmem:[%s172 + $0x88] sm:$0xff] %vm558, %v543
      %577 = vst.msk [vmem:[%s172 + $0x90] sm:$0xff] %vm558, %v544
      %578 = vst.msk [vmem:[%s172 + $0x98] sm:$0xff] %vm558, %v545
      %579 = vst.msk [vmem:[%s172 + $0xa0] sm:$0xff] %vm558, %v546
      %580 = vst.msk [vmem:[%s172 + $0xa8] sm:$0xff] %vm558, %v547
      %581 = vst.msk [vmem:[%s172 + $0xb0] sm:$0xff] %vm558, %v548
      %582 = vst.msk [vmem:[%s172 + $0xb8] sm:$0xff] %vm558, %v549
      %583 = vst.msk [vmem:[%s172 + $0xc0] sm:$0xff] %vm558, %v550
      %584 = vst.msk [vmem:[%s172 + $0xc8] sm:$0xff] %vm558, %v551
      %585 = vst.msk [vmem:[%s172 + $0xd0] sm:$0xff] %vm558, %v552
      %586 = vst.msk [vmem:[%s172 + $0xd8] sm:$0xff] %vm558, %v553
      %587 = vst.msk [vmem:[%s172 + $0xe0] sm:$0xff] %vm558, %v554
      %588 = vst.msk [vmem:[%s172 + $0xe8] sm:$0xff] %vm558, %v555
      %589 = vst.msk [vmem:[%s172 + $0xf0] sm:$0xff] %vm558, %v556
      %590 = vst.msk [vmem:[%s172 + $0xf8] sm:$0xff] %vm558, %v557
      %s591 = smul.u32 32, %s14
      %p592 = scmp.lt.s32.totalorder %s591, 63
      %s593 = scalar_select %p592, %s591, 63
      %s594 = smul.addr %s593, 8
      %s595 = scalar_lea.vmem %s3, %s594
      // Predicated region
      $region33: #{solo_v1_forward.12} parent=31 // pred_check
        %p596 = pneg %p100
      $region34: #{solo_v1_forward.12} parent=31 // pred_check_branch
        %598 = sbr.rel (%p596) target = $region36
      $region35: #{solo_v1_forward.12} parent=31 // pred_region
        %s599 = smul.u32 32, %s14
      $region36: #{solo_v1_forward.12} parent=31 // pred_fallthru
        _
    $region32: #{solo_v1_forward.12} parent=5 // pred_fallthru
      _
    %p600 = scmp.le.s32.totalorder 2, %s9
    // Predicated region
    $region37: #{solo_v1_forward.12} parent=5 // pred_check
      %p601 = pneg %p600
    $region38: #{solo_v1_forward.12} parent=5 // pred_check_branch
      %603 = sbr.rel (%p601) target = $region40
    $region39: #{solo_v1_forward.12} parent=5 // pred_region
      %s604 = ssub.s32 %s9, 2
      // Predicated region
      $region41: #{solo_v1_forward.12} parent=39 // pred_check
        %p605 = pneg %p106
      $region42: #{solo_v1_forward.12} parent=39 // pred_check_branch
        %607 = sbr.rel (%p605) target = $region44
      $region43: #{solo_v1_forward.12} parent=39 // pred_region
        %s608 = smul.u32 32, %s15
        %p609 = scmp.lt.s32.totalorder %s608, 63
        %s610 = scalar_select %p609, %s608, 63
        %s611 = smul.addr %s610, 8
        %s612 = scalar_lea.vmem %s3, %s611
      $region44: #{solo_v1_forward.12} parent=39 // pred_fallthru
        _
    $region40: #{solo_v1_forward.12} parent=5 // pred_fallthru
      _
  $region6: #{solo_v1_forward.12} parent=0 // loop_footer
    %s13 = sadd.s32 1, %s9
  $region7: #{solo_v1_forward.12} parent=0 // loop_footer_branch
    %8 = sbr.rel target = $region3
  $region8: #{solo_v1_forward.12} parent=0 // loop_exit
    _

// kernel: solo_v1_forward.13
$region0: #{solo_v1_forward.13}
  #allocation0 [shape = 'u32[]', space=smem, size = 0x4, offset = 0x4, fixed_abs, tag = 'smem constant byte address 0x4 - core index']
  #allocation1 [shape = 'u32[144,128]{1,0:T(1,128)}', space=vmem, size = 0x12000, scoped, tag = 'internal scratch']
  %s0 = inlined_call_operand.vmem [shape: bf16[128,72], index: 0, kind: input, shape index: {}]
  %s1 = inlined_call_operand.vmem [shape: bf16[72,16], index: 1, kind: input, shape index: {}]
  %s2 = inlined_call_operand.vmem [shape: f32[1,16], index: 2, kind: input, shape index: {}]
  %s3 = inlined_call_operand.vmem [shape: f32[128,16], index: 3, kind: output, shape index: {}]
  %s4 = sld [smem:[#allocation0]]
  $region22: #{solo_v1_forward.13} parent=0
    _
  %s6 = ssub.s32 1, %s4
  %s7 = scalar_select 0, %s6, %s4
  // Predicated region
  $region2: #{solo_v1_forward.13} parent=0 // pred_check
    _
  $region3: #{solo_v1_forward.13} parent=0 // pred_check_branch
    %9 = sbr.rel (0) target = $region5
  $region4: #{solo_v1_forward.13} parent=0 // pred_region
    _
  $region5: #{solo_v1_forward.13} parent=0 // pred_fallthru
    _
  // Predicated region
  $region6: #{solo_v1_forward.13} parent=0 // pred_check
    _
  $region7: #{solo_v1_forward.13} parent=0 // pred_check_branch
    %11 = sbr.rel (0) target = $region9
  $region8: #{solo_v1_forward.13} parent=0 // pred_region
    _
  $region9: #{solo_v1_forward.13} parent=0 // pred_fallthru
    _
  // Predicated region
  $region10: #{solo_v1_forward.13} parent=0 // pred_check
    _
  $region11: #{solo_v1_forward.13} parent=0 // pred_check_branch
    %13 = sbr.rel (0) target = $region13
  $region12: #{solo_v1_forward.13} parent=0 // pred_region
    _
  $region13: #{solo_v1_forward.13} parent=0 // pred_fallthru
    _
  %v15 = vld [vmem:[%s0] sm:$0xf]
  %v16 = vld [vmem:[%s0 + $0x4] sm:$0xf]
  %v17 = vld [vmem:[%s0 + $0x8] sm:$0xf]
  %v18 = vld [vmem:[%s0 + $0xc] sm:$0xf]
  %v19 = vld [vmem:[%s0 + $0x10] sm:$0xf]
  %v20 = vld [vmem:[%s0 + $0x14] sm:$0xf]
  %v21 = vld [vmem:[%s0 + $0x18] sm:$0xf]
  %v22 = vld [vmem:[%s0 + $0x1c] sm:$0xf]
  %v23 = vld [vmem:[%s0 + $0x20] sm:$0xf]
  %v24 = vld [vmem:[%s0 + $0x24] sm:$0xf]
  %v25 = vld [vmem:[%s0 + $0x28] sm:$0xf]
  %v26 = vld [vmem:[%s0 + $0x2c] sm:$0xf]
  %v27 = vld [vmem:[%s0 + $0x30] sm:$0xf]
  %v28 = vld [vmem:[%s0 + $0x34] sm:$0xf]
  %v29 = vld [vmem:[%s0 + $0x38] sm:$0xf]
  %v30 = vld [vmem:[%s0 + $0x3c] sm:$0xf]
  %v31 = vld [vmem:[%s1] sm:$0xf]
  %v32 = vld [vmem:[%s1 + $0x4] sm:$0xf]
  %v33 = vld [vmem:[%s1 + $0x8] sm:$0xf]
  %v34 = vld [vmem:[%s1 + $0xc] sm:$0xf]
  %v35 = vld [vmem:[%s1 + $0x10] sm:$0xf]
  %v36 = vld [vmem:[%s1 + $0x14] sm:$0xf]
  %v37 = vld [vmem:[%s1 + $0x18] sm:$0xf]
  %v38 = vld [vmem:[%s1 + $0x1c] sm:$0xf]
  %v39 = vld [vmem:[%s1 + $0x20] sm:$0xf]
  %v40 = vld [vmem:[%s2] sm:$0x1]
  %v42 = vlaneseq
  %v43 = vshrl.u32 %v42, 7
  %v44 = vsub.s32 0, %v43
  %v45 = vrot.slane %v40, %v44
  %v63 = vunpack.c.l.b16 %v15
  %v64 = vunpack.c.l.b16 %v16
  %v65 = vunpack.c.l.b16 %v17
  %v66 = vunpack.c.l.b16 %v18
  %v67 = vunpack.c.l.b16 %v19
  %v68 = vunpack.c.l.b16 %v20
  %v69 = vunpack.c.l.b16 %v21
  %v70 = vunpack.c.l.b16 %v22
  %v71 = vunpack.c.l.b16 %v23
  %v72 = vunpack.c.l.b16 %v24
  %v73 = vunpack.c.l.b16 %v25
  %v74 = vunpack.c.l.b16 %v26
  %v75 = vunpack.c.l.b16 %v27
  %v76 = vunpack.c.l.b16 %v28
  %v77 = vunpack.c.l.b16 %v29
  %v78 = vunpack.c.l.b16 %v30
  %v79 = vpack.c.b16 %v64, %v63
  %v80 = vpack.c.b16 %v66, %v65
  %v81 = vpack.c.b16 %v68, %v67
  %v82 = vpack.c.b16 %v70, %v69
  %v83 = vpack.c.b16 %v72, %v71
  %v84 = vpack.c.b16 %v74, %v73
  %v85 = vpack.c.b16 %v76, %v75
  %v86 = vpack.c.b16 %v78, %v77
  %v96 = vunpack.c.l.b16 %v31
  %v97 = vunpack.c.l.b16 %v32
  %v98 = vunpack.c.l.b16 %v33
  %v99 = vunpack.c.l.b16 %v34
  %v100 = vunpack.c.l.b16 %v35
  %v101 = vunpack.c.l.b16 %v36
  %v102 = vunpack.c.l.b16 %v37
  %v103 = vunpack.c.l.b16 %v38
  %v104 = vunpack.c.l.b16 %v39
  %v105 = vpack.c.b16 %v97, %v96
  %v106 = vpack.c.b16 %v99, %v98
  %v107 = vpack.c.b16 %v101, %v100
  %v108 = vpack.c.b16 %v103, %v102
  %v109 = vpack.c.b16 %v104, %v104
  %vm114 = vcmask 588800
  %v116 = vsel %vm114, %v79, 0
  %v119 = vsel %vm114, %v80, 0
  %v122 = vsel %vm114, %v81, 0
  %v125 = vsel %vm114, %v82, 0
  %v128 = vsel %vm114, %v83, 0
  %v131 = vsel %vm114, %v84, 0
  %v134 = vsel %vm114, %v85, 0
  %v137 = vsel %vm114, %v86, 0
  %vm139 = vcmask 1043456
  %v141 = vsel %vm139, %v109, 0
  %143 = vmatprep.subr.bf16.mxu0 0
  %144 = vmatpush1.bf16.msra.mxu0 %v105
  %145 = vmatprep.subr.bf16.mxu0 0
  %146 = vmatpush1.bf16.msra.mxu0 %v106
  %147 = vmatprep.subr.bf16.mxu0 0
  %148 = vmatpush1.bf16.msra.mxu0 %v107
  %149 = vmatprep.subr.bf16.mxu0 0
  %150 = vmatpush1.bf16.msra.mxu0 %v108
  %151 = vmatprep.subr.bf16.mxu0 0
  %152 = vmatpush1.bf16.msra.mxu0 %v141
  %153 = vmatprep.subr.bf16.mxu0 0
  %154 = vmatpush1.bf16.msra.mxu0 0
  %155 = vmatprep.subr.bf16.mxu0 0
  %156 = vmatpush1.bf16.msra.mxu0 0
  %157 = vmatprep.subr.bf16.mxu0 0
  %158 = vmatpush1.bf16.msra.mxu0 0
  %159 = vmatprep.subr.bf16.mxu0 0
  %160 = vmatpush1.bf16.msra.mxu0 0
  %161 = vmatprep.subr.bf16.mxu0 0
  %162 = vmatpush1.bf16.msra.mxu0 0
  %163 = vmatprep.subr.bf16.mxu0 0
  %164 = vmatpush1.bf16.msra.mxu0 0
  %165 = vmatprep.subr.bf16.mxu0 0
  %166 = vmatpush1.bf16.msra.mxu0 0
  %167 = vmatprep.subr.bf16.mxu0 0
  %168 = vmatpush1.bf16.msra.mxu0 0
  %169 = vmatprep.subr.bf16.mxu0 0
  %170 = vmatpush1.bf16.msra.mxu0 0
  %171 = vmatprep.subr.bf16.mxu0 0
  %172 = vmatpush1.bf16.msra.mxu0 0
  %173 = vmatprep.subr.bf16.mxu0 0
  %174 = vmatpush1.bf16.msra.mxu0 0
  %175 = vmatprep.mubr.bf16.mxu0 0
  %176 = vmatmul.mubr.bf16.gmra.mrb[0].mxu0 %v116
  %v177 = vpop.f32.mrb[0].mxu0
  %v178 = vadd.f32 %v45, %v177
  %v179 = vpop.f32.mrb[0].mxu0
  %v180 = vpop.f32.mrb[0].mxu0
  %v181 = vadd.f32 %v45, %v180
  %v182 = vpop.f32.mrb[0].mxu0
  %183 = vmatprep.mubr.bf16.mxu0 0
  %184 = vmatmul.mubr.bf16.gmra.mrb[0].mxu0 %v119
  %v185 = vpop.f32.mrb[0].mxu0
  %v186 = vadd.f32 %v45, %v185
  %v187 = vpop.f32.mrb[0].mxu0
  %v188 = vpop.f32.mrb[0].mxu0
  %v189 = vadd.f32 %v45, %v188
  %v190 = vpop.f32.mrb[0].mxu0
  %191 = vmatprep.mubr.bf16.mxu0 0
  %192 = vmatmul.mubr.bf16.gmra.mrb[0].mxu0 %v122
  %v193 = vpop.f32.mrb[0].mxu0
  %v194 = vadd.f32 %v45, %v193
  %v195 = vpop.f32.mrb[0].mxu0
  %v196 = vpop.f32.mrb[0].mxu0
  %v197 = vadd.f32 %v45, %v196
  %v198 = vpop.f32.mrb[0].mxu0
  %199 = vmatprep.mubr.bf16.mxu0 0
  %200 = vmatmul.mubr.bf16.gmra.mrb[0].mxu0 %v125
  %v201 = vpop.f32.mrb[0].mxu0
  %v202 = vadd.f32 %v45, %v201
  %v203 = vpop.f32.mrb[0].mxu0
  %v204 = vpop.f32.mrb[0].mxu0
  %v205 = vadd.f32 %v45, %v204
  %v206 = vpop.f32.mrb[0].mxu0
  %207 = vmatprep.mubr.bf16.mxu0 0
  %208 = vmatmul.mubr.bf16.gmra.mrb[0].mxu0 %v128
  %v209 = vpop.f32.mrb[0].mxu0
  %v210 = vadd.f32 %v45, %v209
  %v211 = vpop.f32.mrb[0].mxu0
  %v212 = vpop.f32.mrb[0].mxu0
  %v213 = vadd.f32 %v45, %v212
  %v214 = vpop.f32.mrb[0].mxu0
  %215 = vmatprep.mubr.bf16.mxu0 0
  %216 = vmatmul.mubr.bf16.gmra.mrb[0].mxu0 %v131
  %v217 = vpop.f32.mrb[0].mxu0
  %v218 = vadd.f32 %v45, %v217
  %v219 = vpop.f32.mrb[0].mxu0
  %v220 = vpop.f32.mrb[0].mxu0
  %v221 = vadd.f32 %v45, %v220
  %v222 = vpop.f32.mrb[0].mxu0
  %223 = vmatprep.mubr.bf16.mxu0 0
  %224 = vmatmul.mubr.bf16.gmra.mrb[0].mxu0 %v134
  %v225 = vpop.f32.mrb[0].mxu0
  %v226 = vadd.f32 %v45, %v225
  %v227 = vpop.f32.mrb[0].mxu0
  %v228 = vpop.f32.mrb[0].mxu0
  %v229 = vadd.f32 %v45, %v228
  %v230 = vpop.f32.mrb[0].mxu0
  %231 = vmatprep.mubr.bf16.mxu0 0
  %232 = vmatmul.mubr.bf16.gmra.mrb[0].mxu0 %v137
  %v233 = vpop.f32.mrb[0].mxu0
  %v234 = vadd.f32 %v45, %v233
  %v235 = vpop.f32.mrb[0].mxu0
  %v236 = vpop.f32.mrb[0].mxu0
  %v237 = vadd.f32 %v45, %v236
  %v238 = vpop.f32.mrb[0].mxu0
  %239 = vdwg.mxu0
  %v240 = vmax.f32 %v178, 0.0
  %v241 = vmax.f32 %v181, 0.0
  %v242 = vmax.f32 %v186, 0.0
  %v243 = vmax.f32 %v189, 0.0
  %v244 = vmax.f32 %v194, 0.0
  %v245 = vmax.f32 %v197, 0.0
  %v246 = vmax.f32 %v202, 0.0
  %v247 = vmax.f32 %v205, 0.0
  %v248 = vmax.f32 %v210, 0.0
  %v249 = vmax.f32 %v213, 0.0
  %v250 = vmax.f32 %v218, 0.0
  %v251 = vmax.f32 %v221, 0.0
  %v252 = vmax.f32 %v226, 0.0
  %v253 = vmax.f32 %v229, 0.0
  %v254 = vmax.f32 %v234, 0.0
  %v255 = vmax.f32 %v237, 0.0
  %vm256 = vcmask 130048
  %257 = vst.msk [vmem:[%s3] sm:$0xff] %vm256, %v240
  %258 = vst.msk [vmem:[%s3 + $0x8] sm:$0xff] %vm256, %v241
  %259 = vst.msk [vmem:[%s3 + $0x10] sm:$0xff] %vm256, %v242
  %260 = vst.msk [vmem:[%s3 + $0x18] sm:$0xff] %vm256, %v243
  %261 = vst.msk [vmem:[%s3 + $0x20] sm:$0xff] %vm256, %v244
  %262 = vst.msk [vmem:[%s3 + $0x28] sm:$0xff] %vm256, %v245
  %263 = vst.msk [vmem:[%s3 + $0x30] sm:$0xff] %vm256, %v246
  %264 = vst.msk [vmem:[%s3 + $0x38] sm:$0xff] %vm256, %v247
  %265 = vst.msk [vmem:[%s3 + $0x40] sm:$0xff] %vm256, %v248
  %266 = vst.msk [vmem:[%s3 + $0x48] sm:$0xff] %vm256, %v249
  %267 = vst.msk [vmem:[%s3 + $0x50] sm:$0xff] %vm256, %v250
  %268 = vst.msk [vmem:[%s3 + $0x58] sm:$0xff] %vm256, %v251
  %269 = vst.msk [vmem:[%s3 + $0x60] sm:$0xff] %vm256, %v252
  %270 = vst.msk [vmem:[%s3 + $0x68] sm:$0xff] %vm256, %v253
  %271 = vst.msk [vmem:[%s3 + $0x70] sm:$0xff] %vm256, %v254
  %272 = vst.msk [vmem:[%s3 + $0x78] sm:$0xff] %vm256, %v255
  // Predicated region
  $region14: #{solo_v1_forward.13} parent=0 // pred_check
    _
  $region15: #{solo_v1_forward.13} parent=0 // pred_check_branch
    %274 = sbr.rel (0) target = $region17
  $region16: #{solo_v1_forward.13} parent=0 // pred_region
    _
  $region17: #{solo_v1_forward.13} parent=0 // pred_fallthru
    _
  // Predicated region
  $region18: #{solo_v1_forward.13} parent=0 // pred_check
    _
  $region19: #{solo_v1_forward.13} parent=0 // pred_check_branch
    %276 = sbr.rel (0) target = $region21
  $region20: #{solo_v1_forward.13} parent=0 // pred_region
    _
  $region21: #{solo_v1_forward.13} parent=0 // pred_fallthru
    _

// kernel: solo_v1_forward.14
$region0: #{solo_v1_forward.14}
  #allocation0 [shape = 'u32[]', space=smem, size = 0x4, offset = 0x4, fixed_abs, tag = 'smem constant byte address 0x4 - core index']
  #allocation1 [shape = 'u32[144,128]{1,0:T(1,128)}', space=vmem, size = 0x12000, scoped, tag = 'internal scratch']
  %s0 = inlined_call_operand.vmem [shape: bf16[32,144], index: 0, kind: input, shape index: {}]
  %s1 = inlined_call_operand.vmem [shape: bf16[144,32], index: 1, kind: input, shape index: {}]
  %s2 = inlined_call_operand.vmem [shape: f32[1,32], index: 2, kind: input, shape index: {}]
  %s3 = inlined_call_operand.vmem [shape: f32[32,32], index: 3, kind: output, shape index: {}]
  %s4 = sld [smem:[#allocation0]]
  $region22: #{solo_v1_forward.14} parent=0
    _
  %s6 = ssub.s32 1, %s4
  %s7 = scalar_select 0, %s6, %s4
  // Predicated region
  $region2: #{solo_v1_forward.14} parent=0 // pred_check
    _
  $region3: #{solo_v1_forward.14} parent=0 // pred_check_branch
    %9 = sbr.rel (0) target = $region5
  $region4: #{solo_v1_forward.14} parent=0 // pred_region
    _
  $region5: #{solo_v1_forward.14} parent=0 // pred_fallthru
    _
  // Predicated region
  $region6: #{solo_v1_forward.14} parent=0 // pred_check
    _
  $region7: #{solo_v1_forward.14} parent=0 // pred_check_branch
    %11 = sbr.rel (0) target = $region9
  $region8: #{solo_v1_forward.14} parent=0 // pred_region
    _
  $region9: #{solo_v1_forward.14} parent=0 // pred_fallthru
    _
  // Predicated region
  $region10: #{solo_v1_forward.14} parent=0 // pred_check
    _
  $region11: #{solo_v1_forward.14} parent=0 // pred_check_branch
    %13 = sbr.rel (0) target = $region13
  $region12: #{solo_v1_forward.14} parent=0 // pred_region
    _
  $region13: #{solo_v1_forward.14} parent=0 // pred_fallthru
    _
  %v15 = vld [vmem:[%s0] sm:$0xff]
  %v16 = vld [vmem:[%s0 + $0x8] sm:$0xff]
  %v17 = vld [vmem:[%s0 + $0x10] sm:$0xff]
  %v18 = vld [vmem:[%s0 + $0x18] sm:$0xff]
  %v19 = vld [vmem:[%s1] sm:$0xf]
  %v20 = vld [vmem:[%s1 + $0x4] sm:$0xf]
  %v21 = vld [vmem:[%s1 + $0x8] sm:$0xf]
  %v22 = vld [vmem:[%s1 + $0xc] sm:$0xf]
  %v23 = vld [vmem:[%s1 + $0x10] sm:$0xf]
  %v24 = vld [vmem:[%s1 + $0x14] sm:$0xf]
  %v25 = vld [vmem:[%s1 + $0x18] sm:$0xf]
  %v26 = vld [vmem:[%s1 + $0x1c] sm:$0xf]
  %v27 = vld [vmem:[%s1 + $0x20] sm:$0xf]
  %v28 = vld [vmem:[%s1 + $0x24] sm:$0xf]
  %v29 = vld [vmem:[%s1 + $0x28] sm:$0xf]
  %v30 = vld [vmem:[%s1 + $0x2c] sm:$0xf]
  %v31 = vld [vmem:[%s1 + $0x30] sm:$0xf]
  %v32 = vld [vmem:[%s1 + $0x34] sm:$0xf]
  %v33 = vld [vmem:[%s1 + $0x38] sm:$0xf]
  %v34 = vld [vmem:[%s1 + $0x3c] sm:$0xf]
  %v35 = vld [vmem:[%s1 + $0x40] sm:$0xf]
  %v36 = vld [vmem:[%s1 + $0x44] sm:$0xf]
  %v37 = vld [vmem:[%s2] sm:$0x1]
  %v39 = vlaneseq
  %v40 = vshrl.u32 %v39, 7
  %v41 = vsub.s32 0, %v40
  %v42 = vrot.slane %v37, %v41
  %v48 = vunpack.c.l.b16 %v15
  %v49 = vunpack.c.h.b16 %v15
  %v50 = vunpack.c.l.b16 %v16
  %v51 = vunpack.c.h.b16 %v16
  %v52 = vunpack.c.l.b16 %v17
  %v53 = vunpack.c.h.b16 %v17
  %v54 = vunpack.c.l.b16 %v18
  %v55 = vunpack.c.h.b16 %v18
  %v56 = vpack.c.b16 %v50, %v48
  %v57 = vpack.c.b16 %v51, %v49
  %v58 = vpack.c.b16 %v54, %v52
  %v59 = vpack.c.b16 %v55, %v53
  %v80 = vunpack.c.l.b16 %v19
  %v81 = vunpack.c.l.b16 %v20
  %v82 = vunpack.c.l.b16 %v21
  %v83 = vunpack.c.l.b16 %v22
  %v84 = vunpack.c.l.b16 %v23
  %v85 = vunpack.c.l.b16 %v24
  %v86 = vunpack.c.l.b16 %v25
  %v87 = vunpack.c.l.b16 %v26
  %v88 = vunpack.c.l.b16 %v27
  %v89 = vunpack.c.l.b16 %v28
  %v90 = vunpack.c.l.b16 %v29
  %v91 = vunpack.c.l.b16 %v30
  %v92 = vunpack.c.l.b16 %v31
  %v93 = vunpack.c.l.b16 %v32
  %v94 = vunpack.c.l.b16 %v33
  %v95 = vunpack.c.l.b16 %v34
  %v96 = vunpack.c.l.b16 %v35
  %v97 = vunpack.c.l.b16 %v36
  %v98 = vpack.c.b16 %v81, %v80
  %v99 = vpack.c.b16 %v83, %v82
  %v100 = vpack.c.b16 %v85, %v84
  %v101 = vpack.c.b16 %v87, %v86
  %v102 = vpack.c.b16 %v89, %v88
  %v103 = vpack.c.b16 %v91, %v90
  %v104 = vpack.c.b16 %v93, %v92
  %v105 = vpack.c.b16 %v95, %v94
  %v106 = vpack.c.b16 %v97, %v96
  %vm116 = vcmask 130048
  %v118 = vsel %vm116, %v57, 0
  %v121 = vsel %vm116, %v59, 0
  %123 = vmatprep.subr.bf16.mxu0 0
  %124 = vmatpush1.bf16.msra.mxu0 %v98
  %125 = vmatprep.subr.bf16.mxu0 0
  %126 = vmatpush1.bf16.msra.mxu0 %v99
  %127 = vmatprep.subr.bf16.mxu0 0
  %128 = vmatpush1.bf16.msra.mxu0 %v100
  %129 = vmatprep.subr.bf16.mxu0 0
  %130 = vmatpush1.bf16.msra.mxu0 %v101
  %131 = vmatprep.subr.bf16.mxu0 0
  %132 = vmatpush1.bf16.msra.mxu0 %v102
  %133 = vmatprep.subr.bf16.mxu0 0
  %134 = vmatpush1.bf16.msra.mxu0 %v103
  %135 = vmatprep.subr.bf16.mxu0 0
  %136 = vmatpush1.bf16.msra.mxu0 %v104
  %137 = vmatprep.subr.bf16.mxu0 0
  %138 = vmatpush1.bf16.msra.mxu0 %v105
  %139 = vmatprep.subr.bf16.mxu0 0
  %140 = vmatpush1.bf16.msra.mxu0 %v106
  %141 = vmatprep.subr.bf16.mxu0 0
  %142 = vmatpush1.bf16.msra.mxu0 0
  %143 = vmatprep.subr.bf16.mxu0 0
  %144 = vmatpush1.bf16.msra.mxu0 0
  %145 = vmatprep.subr.bf16.mxu0 0
  %146 = vmatpush1.bf16.msra.mxu0 0
  %147 = vmatprep.subr.bf16.mxu0 0
  %148 = vmatpush1.bf16.msra.mxu0 0
  %149 = vmatprep.subr.bf16.mxu0 0
  %150 = vmatpush1.bf16.msra.mxu0 0
  %151 = vmatprep.subr.bf16.mxu0 0
  %152 = vmatpush1.bf16.msra.mxu0 0
  %153 = vmatprep.subr.bf16.mxu0 0
  %154 = vmatpush1.bf16.msra.mxu0 0
  %155 = vmatprep.mubr.bf16.mxu0 %v118
  %156 = vmatmul.mubr.bf16.gmra.mrb[0].mxu0 %v56
  %v157 = vpop.f32.mrb[0].mxu0
  %v158 = vadd.f32 %v42, %v157
  %v159 = vpop.f32.mrb[0].mxu0
  %v160 = vpop.f32.mrb[0].mxu0
  %v161 = vadd.f32 %v42, %v160
  %v162 = vpop.f32.mrb[0].mxu0
  %163 = vmatprep.mubr.bf16.mxu0 %v121
  %164 = vmatmul.mubr.bf16.gmra.mrb[0].mxu0 %v58
  %v165 = vpop.f32.mrb[0].mxu0
  %v166 = vadd.f32 %v42, %v165
  %v167 = vpop.f32.mrb[0].mxu0
  %v168 = vpop.f32.mrb[0].mxu0
  %v169 = vadd.f32 %v42, %v168
  %v170 = vpop.f32.mrb[0].mxu0
  %171 = vdwg.mxu0
  %v172 = vmax.f32 %v158, 0.0
  %v173 = vmax.f32 %v161, 0.0
  %v174 = vmax.f32 %v166, 0.0
  %v175 = vmax.f32 %v169, 0.0
  %vm176 = vcmask 261120
  %177 = vst.msk [vmem:[%s3] sm:$0xff] %vm176, %v172
  %178 = vst.msk [vmem:[%s3 + $0x8] sm:$0xff] %vm176, %v173
  %179 = vst.msk [vmem:[%s3 + $0x10] sm:$0xff] %vm176, %v174
  %180 = vst.msk [vmem:[%s3 + $0x18] sm:$0xff] %vm176, %v175
  // Predicated region
  $region14: #{solo_v1_forward.14} parent=0 // pred_check
    _
  $region15: #{solo_v1_forward.14} parent=0 // pred_check_branch
    %182 = sbr.rel (0) target = $region17
  $region16: #{solo_v1_forward.14} parent=0 // pred_region
    _
  $region17: #{solo_v1_forward.14} parent=0 // pred_fallthru
    _
  // Predicated region
  $region18: #{solo_v1_forward.14} parent=0 // pred_check
    _
  $region19: #{solo_v1_forward.14} parent=0 // pred_check_branch
    %184 = sbr.rel (0) target = $region21
  $region20: #{solo_v1_forward.14} parent=0 // pred_region
    _
  $region21: #{solo_v1_forward.14} parent=0 // pred_fallthru
    _

// kernel: solo_v1_forward.18
$region0: #{solo_v1_forward.18}
  #allocation0 [shape = 'u32[]', space=smem, size = 0x4, offset = 0x4, fixed_abs, tag = 'smem constant byte address 0x4 - core index']
  #allocation1 [shape = 'u32[144,128]{1,0:T(1,128)}', space=vmem, size = 0x12000, scoped, tag = 'internal scratch']
  %s0 = inlined_call_operand.vmem [shape: bf16[8,64], index: 0, kind: input, shape index: {}]
  %s1 = inlined_call_operand.vmem [shape: bf16[64,32], index: 1, kind: input, shape index: {}]
  %s2 = inlined_call_operand.vmem [shape: f32[1,32], index: 2, kind: input, shape index: {}]
  %s3 = inlined_call_operand.vmem [shape: f32[8,32], index: 3, kind: output, shape index: {}]
  %s4 = sld [smem:[#allocation0]]
  $region22: #{solo_v1_forward.18} parent=0
    _
  %s6 = ssub.s32 1, %s4
  %s7 = scalar_select 0, %s6, %s4
  // Predicated region
  $region2: #{solo_v1_forward.18} parent=0 // pred_check
    _
  $region3: #{solo_v1_forward.18} parent=0 // pred_check_branch
    %9 = sbr.rel (0) target = $region5
  $region4: #{solo_v1_forward.18} parent=0 // pred_region
    _
  $region5: #{solo_v1_forward.18} parent=0 // pred_fallthru
    _
  // Predicated region
  $region6: #{solo_v1_forward.18} parent=0 // pred_check
    _
  $region7: #{solo_v1_forward.18} parent=0 // pred_check_branch
    %11 = sbr.rel (0) target = $region9
  $region8: #{solo_v1_forward.18} parent=0 // pred_region
    _
  $region9: #{solo_v1_forward.18} parent=0 // pred_fallthru
    _
  // Predicated region
  $region10: #{solo_v1_forward.18} parent=0 // pred_check
    _
  $region11: #{solo_v1_forward.18} parent=0 // pred_check_branch
    %13 = sbr.rel (0) target = $region13
  $region12: #{solo_v1_forward.18} parent=0 // pred_region
    _
  $region13: #{solo_v1_forward.18} parent=0 // pred_fallthru
    _
  %v15 = vld [vmem:[%s0] sm:$0xf]
  %v16 = vld [vmem:[%s1] sm:$0xf]
  %v17 = vld [vmem:[%s1 + $0x4] sm:$0xf]
  %v18 = vld [vmem:[%s1 + $0x8] sm:$0xf]
  %v19 = vld [vmem:[%s1 + $0xc] sm:$0xf]
  %v20 = vld [vmem:[%s1 + $0x10] sm:$0xf]
  %v21 = vld [vmem:[%s1 + $0x14] sm:$0xf]
  %v22 = vld [vmem:[%s1 + $0x18] sm:$0xf]
  %v23 = vld [vmem:[%s1 + $0x1c] sm:$0xf]
  %v24 = vld [vmem:[%s2] sm:$0x1]
  %v26 = vlaneseq
  %v27 = vshrl.u32 %v26, 7
  %v28 = vsub.s32 0, %v27
  %v29 = vrot.slane %v24, %v28
  %v39 = vunpack.c.l.b16 %v16
  %v40 = vunpack.c.l.b16 %v17
  %v41 = vunpack.c.l.b16 %v18
  %v42 = vunpack.c.l.b16 %v19
  %v43 = vunpack.c.l.b16 %v20
  %v44 = vunpack.c.l.b16 %v21
  %v45 = vunpack.c.l.b16 %v22
  %v46 = vunpack.c.l.b16 %v23
  %v47 = vpack.c.b16 %v40, %v39
  %v48 = vpack.c.b16 %v42, %v41
  %v49 = vpack.c.b16 %v44, %v43
  %v50 = vpack.c.b16 %v46, %v45
  %vm55 = vcmask 523264
  %v57 = vsel %vm55, %v15, 0
  %59 = vmatprep.subr.bf16.mxu0 0
  %60 = vmatpush1.bf16.msra.mxu0 %v47
  %61 = vmatprep.subr.bf16.mxu0 0
  %62 = vmatpush1.bf16.msra.mxu0 %v48
  %63 = vmatprep.subr.bf16.mxu0 0
  %64 = vmatpush1.bf16.msra.mxu0 %v49
  %65 = vmatprep.subr.bf16.mxu0 0
  %66 = vmatpush1.bf16.msra.mxu0 %v50
  %67 = vmatprep.subr.bf16.mxu0 0
  %68 = vmatpush1.bf16.msra.mxu0 0
  %69 = vmatprep.subr.bf16.mxu0 0
  %70 = vmatpush1.bf16.msra.mxu0 0
  %71 = vmatprep.subr.bf16.mxu0 0
  %72 = vmatpush1.bf16.msra.mxu0 0
  %73 = vmatprep.subr.bf16.mxu0 0
  %74 = vmatpush1.bf16.msra.mxu0 0
  %75 = vmatprep.subr.bf16.mxu0 0
  %76 = vmatpush1.bf16.msra.mxu0 0
  %77 = vmatprep.subr.bf16.mxu0 0
  %78 = vmatpush1.bf16.msra.mxu0 0
  %79 = vmatprep.subr.bf16.mxu0 0
  %80 = vmatpush1.bf16.msra.mxu0 0
  %81 = vmatprep.subr.bf16.mxu0 0
  %82 = vmatpush1.bf16.msra.mxu0 0
  %83 = vmatprep.subr.bf16.mxu0 0
  %84 = vmatpush1.bf16.msra.mxu0 0
  %85 = vmatprep.subr.bf16.mxu0 0
  %86 = vmatpush1.bf16.msra.mxu0 0
  %87 = vmatprep.subr.bf16.mxu0 0
  %88 = vmatpush1.bf16.msra.mxu0 0
  %89 = vmatprep.subr.bf16.mxu0 0
  %90 = vmatpush1.bf16.msra.mxu0 0
  %91 = vmatprep.mubr.bf16.mxu0 0
  %92 = vmatmul.mubr.bf16.gmra.mrb[0].mxu0 %v57
  %v93 = vpop.f32.mrb[0].mxu0
  %v94 = vadd.f32 %v29, %v93
  %v95 = vpop.f32.mrb[0].mxu0
  %v96 = vpop.f32.mrb[0].mxu0
  %v97 = vpop.f32.mrb[0].mxu0
  %98 = vdwg.mxu0
  %vm99 = vcmask 261120
  %100 = vst.msk [vmem:[%s3] sm:$0xff] %vm99, %v94
  // Predicated region
  $region14: #{solo_v1_forward.18} parent=0 // pred_check
    _
  $region15: #{solo_v1_forward.18} parent=0 // pred_check_branch
    %102 = sbr.rel (0) target = $region17
  $region16: #{solo_v1_forward.18} parent=0 // pred_region
    _
  $region17: #{solo_v1_forward.18} parent=0 // pred_fallthru
    _
  // Predicated region
  $region18: #{solo_v1_forward.18} parent=0 // pred_check
    _
  $region19: #{solo_v1_forward.18} parent=0 // pred_check_branch
    %104 = sbr.rel (0) target = $region21
  $region20: #{solo_v1_forward.18} parent=0 // pred_region
    _
  $region21: #{solo_v1_forward.18} parent=0 // pred_fallthru
    _

// kernel: solo_v1_forward.15
$region0: #{solo_v1_forward.15}
  #allocation0 [shape = 'u32[]', space=smem, size = 0x4, offset = 0x4, fixed_abs, tag = 'smem constant byte address 0x4 - core index']
  #allocation1 [shape = 'u32[144,128]{1,0:T(1,128)}', space=vmem, size = 0x12000, scoped, tag = 'internal scratch']
  %s0 = inlined_call_operand.vmem [shape: bf16[8,288], index: 0, kind: input, shape index: {}]
  %s1 = inlined_call_operand.vmem [shape: bf16[288,64], index: 1, kind: input, shape index: {}]
  %s2 = inlined_call_operand.vmem [shape: f32[1,64], index: 2, kind: input, shape index: {}]
  %s3 = inlined_call_operand.vmem [shape: f32[8,64], index: 3, kind: output, shape index: {}]
  %s4 = sld [smem:[#allocation0]]
  $region22: #{solo_v1_forward.15} parent=0
    _
  %s6 = ssub.s32 1, %s4
  %s7 = scalar_select 0, %s6, %s4
  // Predicated region
  $region2: #{solo_v1_forward.15} parent=0 // pred_check
    _
  $region3: #{solo_v1_forward.15} parent=0 // pred_check_branch
    %9 = sbr.rel (0) target = $region5
  $region4: #{solo_v1_forward.15} parent=0 // pred_region
    _
  $region5: #{solo_v1_forward.15} parent=0 // pred_fallthru
    _
  // Predicated region
  $region6: #{solo_v1_forward.15} parent=0 // pred_check
    _
  $region7: #{solo_v1_forward.15} parent=0 // pred_check_branch
    %11 = sbr.rel (0) target = $region9
  $region8: #{solo_v1_forward.15} parent=0 // pred_region
    _
  $region9: #{solo_v1_forward.15} parent=0 // pred_fallthru
    _
  // Predicated region
  $region10: #{solo_v1_forward.15} parent=0 // pred_check
    _
  $region11: #{solo_v1_forward.15} parent=0 // pred_check_branch
    %13 = sbr.rel (0) target = $region13
  $region12: #{solo_v1_forward.15} parent=0 // pred_region
    _
  $region13: #{solo_v1_forward.15} parent=0 // pred_fallthru
    _
  %v15 = vld [vmem:[%s0] sm:$0xff]
  %v16 = vld [vmem:[%s0 + $0x8] sm:$0xf]
  %v17 = vld [vmem:[%s1] sm:$0xf]
  %v18 = vld [vmem:[%s1 + $0x4] sm:$0xf]
  %v19 = vld [vmem:[%s1 + $0x8] sm:$0xf]
  %v20 = vld [vmem:[%s1 + $0xc] sm:$0xf]
  %v21 = vld [vmem:[%s1 + $0x10] sm:$0xf]
  %v22 = vld [vmem:[%s1 + $0x14] sm:$0xf]
  %v23 = vld [vmem:[%s1 + $0x18] sm:$0xf]
  %v24 = vld [vmem:[%s1 + $0x1c] sm:$0xf]
  %v25 = vld [vmem:[%s1 + $0x20] sm:$0xf]
  %v26 = vld [vmem:[%s1 + $0x24] sm:$0xf]
  %v27 = vld [vmem:[%s1 + $0x28] sm:$0xf]
  %v28 = vld [vmem:[%s1 + $0x2c] sm:$0xf]
  %v29 = vld [vmem:[%s1 + $0x30] sm:$0xf]
  %v30 = vld [vmem:[%s1 + $0x34] sm:$0xf]
  %v31 = vld [vmem:[%s1 + $0x38] sm:$0xf]
  %v32 = vld [vmem:[%s1 + $0x3c] sm:$0xf]
  %v33 = vld [vmem:[%s1 + $0x40] sm:$0xf]
  %v34 = vld [vmem:[%s1 + $0x44] sm:$0xf]
  %v35 = vld [vmem:[%s1 + $0x48] sm:$0xf]
  %v36 = vld [vmem:[%s1 + $0x4c] sm:$0xf]
  %v37 = vld [vmem:[%s1 + $0x50] sm:$0xf]
  %v38 = vld [vmem:[%s1 + $0x54] sm:$0xf]
  %v39 = vld [vmem:[%s1 + $0x58] sm:$0xf]
  %v40 = vld [vmem:[%s1 + $0x5c] sm:$0xf]
  %v41 = vld [vmem:[%s1 + $0x60] sm:$0xf]
  %v42 = vld [vmem:[%s1 + $0x64] sm:$0xf]
  %v43 = vld [vmem:[%s1 + $0x68] sm:$0xf]
  %v44 = vld [vmem:[%s1 + $0x6c] sm:$0xf]
  %v45 = vld [vmem:[%s1 + $0x70] sm:$0xf]
  %v46 = vld [vmem:[%s1 + $0x74] sm:$0xf]
  %v47 = vld [vmem:[%s1 + $0x78] sm:$0xf]
  %v48 = vld [vmem:[%s1 + $0x7c] sm:$0xf]
  %v49 = vld [vmem:[%s1 + $0x80] sm:$0xf]
  %v50 = vld [vmem:[%s1 + $0x84] sm:$0xf]
  %v51 = vld [vmem:[%s1 + $0x88] sm:$0xf]
  %v52 = vld [vmem:[%s1 + $0x8c] sm:$0xf]
  %v53 = vld [vmem:[%s2] sm:$0x1]
  %v55 = vlaneseq
  %v56 = vshrl.u32 %v55, 7
  %v57 = vsub.s32 0, %v56
  %v58 = vrot.slane %v53, %v57
  %v62 = vunpack.c.l.b16 %v15
  %v63 = vunpack.c.h.b16 %v15
  %v64 = vunpack.c.l.b16 %v16
  %v65 = vpack.c.b16 %v62, %v62
  %v66 = vpack.c.b16 %v63, %v63
  %v67 = vpack.c.b16 %v64, %v64
  %v106 = vunpack.c.l.b16 %v17
  %v107 = vunpack.c.l.b16 %v18
  %v108 = vunpack.c.l.b16 %v19
  %v109 = vunpack.c.l.b16 %v20
  %v110 = vunpack.c.l.b16 %v21
  %v111 = vunpack.c.l.b16 %v22
  %v112 = vunpack.c.l.b16 %v23
  %v113 = vunpack.c.l.b16 %v24
  %v114 = vunpack.c.l.b16 %v25
  %v115 = vunpack.c.l.b16 %v26
  %v116 = vunpack.c.l.b16 %v27
  %v117 = vunpack.c.l.b16 %v28
  %v118 = vunpack.c.l.b16 %v29
  %v119 = vunpack.c.l.b16 %v30
  %v120 = vunpack.c.l.b16 %v31
  %v121 = vunpack.c.l.b16 %v32
  %v122 = vunpack.c.l.b16 %v33
  %v123 = vunpack.c.l.b16 %v34
  %v124 = vunpack.c.l.b16 %v35
  %v125 = vunpack.c.l.b16 %v36
  %v126 = vunpack.c.l.b16 %v37
  %v127 = vunpack.c.l.b16 %v38
  %v128 = vunpack.c.l.b16 %v39
  %v129 = vunpack.c.l.b16 %v40
  %v130 = vunpack.c.l.b16 %v41
  %v131 = vunpack.c.l.b16 %v42
  %v132 = vunpack.c.l.b16 %v43
  %v133 = vunpack.c.l.b16 %v44
  %v134 = vunpack.c.l.b16 %v45
  %v135 = vunpack.c.l.b16 %v46
  %v136 = vunpack.c.l.b16 %v47
  %v137 = vunpack.c.l.b16 %v48
  %v138 = vunpack.c.l.b16 %v49
  %v139 = vunpack.c.l.b16 %v50
  %v140 = vunpack.c.l.b16 %v51
  %v141 = vunpack.c.l.b16 %v52
  %v142 = vpack.c.b16 %v107, %v106
  %v143 = vpack.c.b16 %v109, %v108
  %v144 = vpack.c.b16 %v111, %v110
  %v145 = vpack.c.b16 %v113, %v112
  %v146 = vpack.c.b16 %v115, %v114
  %v147 = vpack.c.b16 %v117, %v116
  %v148 = vpack.c.b16 %v119, %v118
  %v149 = vpack.c.b16 %v121, %v120
  %v150 = vpack.c.b16 %v123, %v122
  %v151 = vpack.c.b16 %v125, %v124
  %v152 = vpack.c.b16 %v127, %v126
  %v153 = vpack.c.b16 %v129, %v128
  %v154 = vpack.c.b16 %v131, %v130
  %v155 = vpack.c.b16 %v133, %v132
  %v156 = vpack.c.b16 %v135, %v134
  %v157 = vpack.c.b16 %v137, %v136
  %v158 = vpack.c.b16 %v139, %v138
  %v159 = vpack.c.b16 %v141, %v140
  %vm178 = vcmask 261120
  %v180 = vsel %vm178, %v67, 0
  %182 = vmatprep.subr.bf16.mxu0 0
  %183 = vmatpush1.bf16.msra.mxu0 %v142
  %184 = vmatprep.subr.bf16.mxu0 0
  %185 = vmatpush1.bf16.msra.mxu0 %v143
  %186 = vmatprep.subr.bf16.mxu0 0
  %187 = vmatpush1.bf16.msra.mxu0 %v144
  %188 = vmatprep.subr.bf16.mxu0 0
  %189 = vmatpush1.bf16.msra.mxu0 %v145
  %190 = vmatprep.subr.bf16.mxu0 0
  %191 = vmatpush1.bf16.msra.mxu0 %v146
  %192 = vmatprep.subr.bf16.mxu0 0
  %193 = vmatpush1.bf16.msra.mxu0 %v147
  %194 = vmatprep.subr.bf16.mxu0 0
  %195 = vmatpush1.bf16.msra.mxu0 %v148
  %196 = vmatprep.subr.bf16.mxu0 0
  %197 = vmatpush1.bf16.msra.mxu0 %v149
  %198 = vmatprep.subr.bf16.mxu0 0
  %199 = vmatpush1.bf16.msra.mxu0 %v150
  %200 = vmatprep.subr.bf16.mxu0 0
  %201 = vmatpush1.bf16.msra.mxu0 %v151
  %202 = vmatprep.subr.bf16.mxu0 0
  %203 = vmatpush1.bf16.msra.mxu0 %v152
  %204 = vmatprep.subr.bf16.mxu0 0
  %205 = vmatpush1.bf16.msra.mxu0 %v153
  %206 = vmatprep.subr.bf16.mxu0 0
  %207 = vmatpush1.bf16.msra.mxu0 %v154
  %208 = vmatprep.subr.bf16.mxu0 0
  %209 = vmatpush1.bf16.msra.mxu0 %v155
  %210 = vmatprep.subr.bf16.mxu0 0
  %211 = vmatpush1.bf16.msra.mxu0 %v156
  %212 = vmatprep.subr.bf16.mxu0 0
  %213 = vmatpush1.bf16.msra.mxu0 %v157
  %214 = vmatprep.mubr.bf16.mxu0 %v66
  %215 = vmatmul.mubr.bf16.gmra.mrb[0].mxu0 %v65
  %v216 = vpop.f32.mrb[0].mxu0
  %v217 = vadd.f32 %v58, %v216
  %v218 = vpop.f32.mrb[0].mxu0
  %v219 = vpop.f32.mrb[0].mxu0
  %v220 = vpop.f32.mrb[0].mxu0
  %221 = vdwg.mxu0
  %222 = vmatprep.subr.bf16.mxu0 0
  %223 = vmatpush1.bf16.msra.mxu0 %v158
  %224 = vmatprep.subr.bf16.mxu0 0
  %225 = vmatpush1.bf16.msra.mxu0 %v159
  %226 = vmatprep.subr.bf16.mxu0 0
  %227 = vmatpush1.bf16.msra.mxu0 0
  %228 = vmatprep.subr.bf16.mxu0 0
  %229 = vmatpush1.bf16.msra.mxu0 0
  %230 = vmatprep.subr.bf16.mxu0 0
  %231 = vmatpush1.bf16.msra.mxu0 0
  %232 = vmatprep.subr.bf16.mxu0 0
  %233 = vmatpush1.bf16.msra.mxu0 0
  %234 = vmatprep.subr.bf16.mxu0 0
  %235 = vmatpush1.bf16.msra.mxu0 0
  %236 = vmatprep.subr.bf16.mxu0 0
  %237 = vmatpush1.bf16.msra.mxu0 0
  %238 = vmatprep.subr.bf16.mxu0 0
  %239 = vmatpush1.bf16.msra.mxu0 0
  %240 = vmatprep.subr.bf16.mxu0 0
  %241 = vmatpush1.bf16.msra.mxu0 0
  %242 = vmatprep.subr.bf16.mxu0 0
  %243 = vmatpush1.bf16.msra.mxu0 0
  %244 = vmatprep.subr.bf16.mxu0 0
  %245 = vmatpush1.bf16.msra.mxu0 0
  %246 = vmatprep.subr.bf16.mxu0 0
  %247 = vmatpush1.bf16.msra.mxu0 0
  %248 = vmatprep.subr.bf16.mxu0 0
  %249 = vmatpush1.bf16.msra.mxu0 0
  %250 = vmatprep.subr.bf16.mxu0 0
  %251 = vmatpush1.bf16.msra.mxu0 0
  %252 = vmatprep.subr.bf16.mxu0 0
  %253 = vmatpush1.bf16.msra.mxu0 0
  %254 = vmatprep.mubr.bf16.mxu0 0
  %255 = vmatmul.mubr.bf16.gmra.mrb[0].mxu0 %v180
  %v256 = vpop.f32.mrb[0].mxu0
  %v257 = vadd.f32 %v217, %v256
  %v258 = vpop.f32.mrb[0].mxu0
  %v259 = vpop.f32.mrb[0].mxu0
  %v260 = vpop.f32.mrb[0].mxu0
  %261 = vdwg.mxu0
  %v262 = vmax.f32 %v257, 0.0
  %vm263 = vcmask 523264
  %264 = vst.msk [vmem:[%s3] sm:$0xff] %vm263, %v262
  // Predicated region
  $region14: #{solo_v1_forward.15} parent=0 // pred_check
    _
  $region15: #{solo_v1_forward.15} parent=0 // pred_check_branch
    %266 = sbr.rel (0) target = $region17
  $region16: #{solo_v1_forward.15} parent=0 // pred_region
    _
  $region17: #{solo_v1_forward.15} parent=0 // pred_fallthru
    _
  // Predicated region
  $region18: #{solo_v1_forward.15} parent=0 // pred_check
    _
  $region19: #{solo_v1_forward.15} parent=0 // pred_check_branch
    %268 = sbr.rel (0) target = $region21
  $region20: #{solo_v1_forward.15} parent=0 // pred_region
    _
  $region21: #{solo_v1_forward.15} parent=0 // pred_fallthru
    _

// kernel: solo_v1_forward.17
$region0: #{solo_v1_forward.17}
  #allocation0 [shape = 'u32[]', space=smem, size = 0x4, offset = 0x4, fixed_abs, tag = 'smem constant byte address 0x4 - core index']
  #allocation1 [shape = 'u32[144,128]{1,0:T(1,128)}', space=vmem, size = 0x12000, scoped, tag = 'internal scratch']
  %s0 = inlined_call_operand.vmem [shape: bf16[32,32], index: 0, kind: input, shape index: {}]
  %s1 = inlined_call_operand.vmem [shape: bf16[32,32], index: 1, kind: input, shape index: {}]
  %s2 = inlined_call_operand.vmem [shape: f32[1,32], index: 2, kind: input, shape index: {}]
  %s3 = inlined_call_operand.vmem [shape: f32[32,32], index: 3, kind: output, shape index: {}]
  %s4 = sld [smem:[#allocation0]]
  $region22: #{solo_v1_forward.17} parent=0
    _
  %s6 = ssub.s32 1, %s4
  %s7 = scalar_select 0, %s6, %s4
  // Predicated region
  $region2: #{solo_v1_forward.17} parent=0 // pred_check
    _
  $region3: #{solo_v1_forward.17} parent=0 // pred_check_branch
    %9 = sbr.rel (0) target = $region5
  $region4: #{solo_v1_forward.17} parent=0 // pred_region
    _
  $region5: #{solo_v1_forward.17} parent=0 // pred_fallthru
    _
  // Predicated region
  $region6: #{solo_v1_forward.17} parent=0 // pred_check
    _
  $region7: #{solo_v1_forward.17} parent=0 // pred_check_branch
    %11 = sbr.rel (0) target = $region9
  $region8: #{solo_v1_forward.17} parent=0 // pred_region
    _
  $region9: #{solo_v1_forward.17} parent=0 // pred_fallthru
    _
  // Predicated region
  $region10: #{solo_v1_forward.17} parent=0 // pred_check
    _
  $region11: #{solo_v1_forward.17} parent=0 // pred_check_branch
    %13 = sbr.rel (0) target = $region13
  $region12: #{solo_v1_forward.17} parent=0 // pred_region
    _
  $region13: #{solo_v1_forward.17} parent=0 // pred_fallthru
    _
  %v15 = vld [vmem:[%s0] sm:$0xf]
  %v16 = vld [vmem:[%s0 + $0x4] sm:$0xf]
  %v17 = vld [vmem:[%s0 + $0x8] sm:$0xf]
  %v18 = vld [vmem:[%s0 + $0xc] sm:$0xf]
  %v19 = vld [vmem:[%s1] sm:$0xf]
  %v20 = vld [vmem:[%s1 + $0x4] sm:$0xf]
  %v21 = vld [vmem:[%s1 + $0x8] sm:$0xf]
  %v22 = vld [vmem:[%s1 + $0xc] sm:$0xf]
  %v23 = vld [vmem:[%s2] sm:$0x1]
  %v25 = vlaneseq
  %v26 = vshrl.u32 %v25, 7
  %v27 = vsub.s32 0, %v26
  %v28 = vrot.slane %v23, %v27
  %v34 = vunpack.c.l.b16 %v15
  %v35 = vunpack.c.l.b16 %v16
  %v36 = vunpack.c.l.b16 %v17
  %v37 = vunpack.c.l.b16 %v18
  %v38 = vpack.c.b16 %v35, %v34
  %v39 = vpack.c.b16 %v37, %v36
  %v44 = vunpack.c.l.b16 %v19
  %v45 = vunpack.c.l.b16 %v20
  %v46 = vunpack.c.l.b16 %v21
  %v47 = vunpack.c.l.b16 %v22
  %v48 = vpack.c.b16 %v45, %v44
  %v49 = vpack.c.b16 %v47, %v46
  %vm52 = vcmask 261120
  %v54 = vsel %vm52, %v38, 0
  %v57 = vsel %vm52, %v39, 0
  %59 = vmatprep.subr.bf16.mxu0 0
  %60 = vmatpush1.bf16.msra.mxu0 %v48
  %61 = vmatprep.subr.bf16.mxu0 0
  %62 = vmatpush1.bf16.msra.mxu0 %v49
  %63 = vmatprep.subr.bf16.mxu0 0
  %64 = vmatpush1.bf16.msra.mxu0 0
  %65 = vmatprep.subr.bf16.mxu0 0
  %66 = vmatpush1.bf16.msra.mxu0 0
  %67 = vmatprep.subr.bf16.mxu0 0
  %68 = vmatpush1.bf16.msra.mxu0 0
  %69 = vmatprep.subr.bf16.mxu0 0
  %70 = vmatpush1.bf16.msra.mxu0 0
  %71 = vmatprep.subr.bf16.mxu0 0
  %72 = vmatpush1.bf16.msra.mxu0 0
  %73 = vmatprep.subr.bf16.mxu0 0
  %74 = vmatpush1.bf16.msra.mxu0 0
  %75 = vmatprep.subr.bf16.mxu0 0
  %76 = vmatpush1.bf16.msra.mxu0 0
  %77 = vmatprep.subr.bf16.mxu0 0
  %78 = vmatpush1.bf16.msra.mxu0 0
  %79 = vmatprep.subr.bf16.mxu0 0
  %80 = vmatpush1.bf16.msra.mxu0 0
  %81 = vmatprep.subr.bf16.mxu0 0
  %82 = vmatpush1.bf16.msra.mxu0 0
  %83 = vmatprep.subr.bf16.mxu0 0
  %84 = vmatpush1.bf16.msra.mxu0 0
  %85 = vmatprep.subr.bf16.mxu0 0
  %86 = vmatpush1.bf16.msra.mxu0 0
  %87 = vmatprep.subr.bf16.mxu0 0
  %88 = vmatpush1.bf16.msra.mxu0 0
  %89 = vmatprep.subr.bf16.mxu0 0
  %90 = vmatpush1.bf16.msra.mxu0 0
  %91 = vmatprep.mubr.bf16.mxu0 0
  %92 = vmatmul.mubr.bf16.gmra.mrb[0].mxu0 %v54
  %v93 = vpop.f32.mrb[0].mxu0
  %v94 = vadd.f32 %v28, %v93
  %v95 = vpop.f32.mrb[0].mxu0
  %v96 = vpop.f32.mrb[0].mxu0
  %v97 = vadd.f32 %v28, %v96
  %v98 = vpop.f32.mrb[0].mxu0
  %99 = vmatprep.mubr.bf16.mxu0 0
  %100 = vmatmul.mubr.bf16.gmra.mrb[0].mxu0 %v57
  %v101 = vpop.f32.mrb[0].mxu0
  %v102 = vadd.f32 %v28, %v101
  %v103 = vpop.f32.mrb[0].mxu0
  %v104 = vpop.f32.mrb[0].mxu0
  %v105 = vadd.f32 %v28, %v104
  %v106 = vpop.f32.mrb[0].mxu0
  %107 = vdwg.mxu0
  %108 = vst.msk [vmem:[%s3] sm:$0xff] %vm52, %v94
  %109 = vst.msk [vmem:[%s3 + $0x8] sm:$0xff] %vm52, %v97
  %110 = vst.msk [vmem:[%s3 + $0x10] sm:$0xff] %vm52, %v102
  %111 = vst.msk [vmem:[%s3 + $0x18] sm:$0xff] %vm52, %v105
  // Predicated region
  $region14: #{solo_v1_forward.17} parent=0 // pred_check
    _
  $region15: #{solo_v1_forward.17} parent=0 // pred_check_branch
    %113 = sbr.rel (0) target = $region17
  $region16: #{solo_v1_forward.17} parent=0 // pred_region
    _
  $region17: #{solo_v1_forward.17} parent=0 // pred_fallthru
    _
  // Predicated region
  $region18: #{solo_v1_forward.17} parent=0 // pred_check
    _
  $region19: #{solo_v1_forward.17} parent=0 // pred_check_branch
    %115 = sbr.rel (0) target = $region21
  $region20: #{solo_v1_forward.17} parent=0 // pred_region
    _
  $region21: #{solo_v1_forward.17} parent=0 // pred_fallthru
    _

// kernel: solo_v1_forward.16
$region0: #{solo_v1_forward.16}
  #allocation0 [shape = 'u32[]', space=smem, size = 0x4, offset = 0x4, fixed_abs, tag = 'smem constant byte address 0x4 - core index']
  #allocation1 [shape = 'u32[144,128]{1,0:T(1,128)}', space=vmem, size = 0x12000, scoped, tag = 'internal scratch']
  %s0 = inlined_call_operand.vmem [shape: bf16[128,16], index: 0, kind: input, shape index: {}]
  %s1 = inlined_call_operand.vmem [shape: bf16[16,32], index: 1, kind: input, shape index: {}]
  %s2 = inlined_call_operand.vmem [shape: f32[1,32], index: 2, kind: input, shape index: {}]
  %s3 = inlined_call_operand.vmem [shape: f32[128,32], index: 3, kind: output, shape index: {}]
  %s4 = sld [smem:[#allocation0]]
  $region22: #{solo_v1_forward.16} parent=0
    _
  %s6 = ssub.s32 1, %s4
  %s7 = scalar_select 0, %s6, %s4
  // Predicated region
  $region2: #{solo_v1_forward.16} parent=0 // pred_check
    _
  $region3: #{solo_v1_forward.16} parent=0 // pred_check_branch
    %9 = sbr.rel (0) target = $region5
  $region4: #{solo_v1_forward.16} parent=0 // pred_region
    _
  $region5: #{solo_v1_forward.16} parent=0 // pred_fallthru
    _
  // Predicated region
  $region6: #{solo_v1_forward.16} parent=0 // pred_check
    _
  $region7: #{solo_v1_forward.16} parent=0 // pred_check_branch
    %11 = sbr.rel (0) target = $region9
  $region8: #{solo_v1_forward.16} parent=0 // pred_region
    _
  $region9: #{solo_v1_forward.16} parent=0 // pred_fallthru
    _
  // Predicated region
  $region10: #{solo_v1_forward.16} parent=0 // pred_check
    _
  $region11: #{solo_v1_forward.16} parent=0 // pred_check_branch
    %13 = sbr.rel (0) target = $region13
  $region12: #{solo_v1_forward.16} parent=0 // pred_region
    _
  $region13: #{solo_v1_forward.16} parent=0 // pred_fallthru
    _
  %v15 = vld [vmem:[%s0] sm:$0xf]
  %v16 = vld [vmem:[%s0 + $0x4] sm:$0xf]
  %v17 = vld [vmem:[%s0 + $0x8] sm:$0xf]
  %v18 = vld [vmem:[%s0 + $0xc] sm:$0xf]
  %v19 = vld [vmem:[%s0 + $0x10] sm:$0xf]
  %v20 = vld [vmem:[%s0 + $0x14] sm:$0xf]
  %v21 = vld [vmem:[%s0 + $0x18] sm:$0xf]
  %v22 = vld [vmem:[%s0 + $0x1c] sm:$0xf]
  %v23 = vld [vmem:[%s0 + $0x20] sm:$0xf]
  %v24 = vld [vmem:[%s0 + $0x24] sm:$0xf]
  %v25 = vld [vmem:[%s0 + $0x28] sm:$0xf]
  %v26 = vld [vmem:[%s0 + $0x2c] sm:$0xf]
  %v27 = vld [vmem:[%s0 + $0x30] sm:$0xf]
  %v28 = vld [vmem:[%s0 + $0x34] sm:$0xf]
  %v29 = vld [vmem:[%s0 + $0x38] sm:$0xf]
  %v30 = vld [vmem:[%s0 + $0x3c] sm:$0xf]
  %v31 = vld [vmem:[%s1] sm:$0xf]
  %v32 = vld [vmem:[%s1 + $0x4] sm:$0xf]
  %v33 = vld [vmem:[%s2] sm:$0x1]
  %v35 = vlaneseq
  %v36 = vshrl.u32 %v35, 7
  %v37 = vsub.s32 0, %v36
  %v38 = vrot.slane %v33, %v37
  %v56 = vunpack.c.l.b16 %v15
  %v57 = vunpack.c.l.b16 %v16
  %v58 = vunpack.c.l.b16 %v17
  %v59 = vunpack.c.l.b16 %v18
  %v60 = vunpack.c.l.b16 %v19
  %v61 = vunpack.c.l.b16 %v20
  %v62 = vunpack.c.l.b16 %v21
  %v63 = vunpack.c.l.b16 %v22
  %v64 = vunpack.c.l.b16 %v23
  %v65 = vunpack.c.l.b16 %v24
  %v66 = vunpack.c.l.b16 %v25
  %v67 = vunpack.c.l.b16 %v26
  %v68 = vunpack.c.l.b16 %v27
  %v69 = vunpack.c.l.b16 %v28
  %v70 = vunpack.c.l.b16 %v29
  %v71 = vunpack.c.l.b16 %v30
  %v72 = vpack.c.b16 %v57, %v56
  %v73 = vpack.c.b16 %v59, %v58
  %v74 = vpack.c.b16 %v61, %v60
  %v75 = vpack.c.b16 %v63, %v62
  %v76 = vpack.c.b16 %v65, %v64
  %v77 = vpack.c.b16 %v67, %v66
  %v78 = vpack.c.b16 %v69, %v68
  %v79 = vpack.c.b16 %v71, %v70
  %v82 = vunpack.c.l.b16 %v31
  %v83 = vunpack.c.l.b16 %v32
  %v84 = vpack.c.b16 %v83, %v82
  %vm86 = vcmask 130048
  %v88 = vsel %vm86, %v72, 0
  %v91 = vsel %vm86, %v73, 0
  %v94 = vsel %vm86, %v74, 0
  %v97 = vsel %vm86, %v75, 0
  %v100 = vsel %vm86, %v76, 0
  %v103 = vsel %vm86, %v77, 0
  %v106 = vsel %vm86, %v78, 0
  %v109 = vsel %vm86, %v79, 0
  %111 = vmatprep.subr.bf16.mxu0 0
  %112 = vmatpush1.bf16.msra.mxu0 %v84
  %113 = vmatprep.subr.bf16.mxu0 0
  %114 = vmatpush1.bf16.msra.mxu0 0
  %115 = vmatprep.subr.bf16.mxu0 0
  %116 = vmatpush1.bf16.msra.mxu0 0
  %117 = vmatprep.subr.bf16.mxu0 0
  %118 = vmatpush1.bf16.msra.mxu0 0
  %119 = vmatprep.subr.bf16.mxu0 0
  %120 = vmatpush1.bf16.msra.mxu0 0
  %121 = vmatprep.subr.bf16.mxu0 0
  %122 = vmatpush1.bf16.msra.mxu0 0
  %123 = vmatprep.subr.bf16.mxu0 0
  %124 = vmatpush1.bf16.msra.mxu0 0
  %125 = vmatprep.subr.bf16.mxu0 0
  %126 = vmatpush1.bf16.msra.mxu0 0
  %127 = vmatprep.subr.bf16.mxu0 0
  %128 = vmatpush1.bf16.msra.mxu0 0
  %129 = vmatprep.subr.bf16.mxu0 0
  %130 = vmatpush1.bf16.msra.mxu0 0
  %131 = vmatprep.subr.bf16.mxu0 0
  %132 = vmatpush1.bf16.msra.mxu0 0
  %133 = vmatprep.subr.bf16.mxu0 0
  %134 = vmatpush1.bf16.msra.mxu0 0
  %135 = vmatprep.subr.bf16.mxu0 0
  %136 = vmatpush1.bf16.msra.mxu0 0
  %137 = vmatprep.subr.bf16.mxu0 0
  %138 = vmatpush1.bf16.msra.mxu0 0
  %139 = vmatprep.subr.bf16.mxu0 0
  %140 = vmatpush1.bf16.msra.mxu0 0
  %141 = vmatprep.subr.bf16.mxu0 0
  %142 = vmatpush1.bf16.msra.mxu0 0
  %143 = vmatprep.mubr.bf16.mxu0 0
  %144 = vmatmul.mubr.bf16.gmra.mrb[0].mxu0 %v88
  %v145 = vpop.f32.mrb[0].mxu0
  %v146 = vadd.f32 %v38, %v145
  %v147 = vpop.f32.mrb[0].mxu0
  %v148 = vpop.f32.mrb[0].mxu0
  %v149 = vadd.f32 %v38, %v148
  %v150 = vpop.f32.mrb[0].mxu0
  %151 = vmatprep.mubr.bf16.mxu0 0
  %152 = vmatmul.mubr.bf16.gmra.mrb[0].mxu0 %v91
  %v153 = vpop.f32.mrb[0].mxu0
  %v154 = vadd.f32 %v38, %v153
  %v155 = vpop.f32.mrb[0].mxu0
  %v156 = vpop.f32.mrb[0].mxu0
  %v157 = vadd.f32 %v38, %v156
  %v158 = vpop.f32.mrb[0].mxu0
  %159 = vmatprep.mubr.bf16.mxu0 0
  %160 = vmatmul.mubr.bf16.gmra.mrb[0].mxu0 %v94
  %v161 = vpop.f32.mrb[0].mxu0
  %v162 = vadd.f32 %v38, %v161
  %v163 = vpop.f32.mrb[0].mxu0
  %v164 = vpop.f32.mrb[0].mxu0
  %v165 = vadd.f32 %v38, %v164
  %v166 = vpop.f32.mrb[0].mxu0
  %167 = vmatprep.mubr.bf16.mxu0 0
  %168 = vmatmul.mubr.bf16.gmra.mrb[0].mxu0 %v97
  %v169 = vpop.f32.mrb[0].mxu0
  %v170 = vadd.f32 %v38, %v169
  %v171 = vpop.f32.mrb[0].mxu0
  %v172 = vpop.f32.mrb[0].mxu0
  %v173 = vadd.f32 %v38, %v172
  %v174 = vpop.f32.mrb[0].mxu0
  %175 = vmatprep.mubr.bf16.mxu0 0
  %176 = vmatmul.mubr.bf16.gmra.mrb[0].mxu0 %v100
  %v177 = vpop.f32.mrb[0].mxu0
  %v178 = vadd.f32 %v38, %v177
  %v179 = vpop.f32.mrb[0].mxu0
  %v180 = vpop.f32.mrb[0].mxu0
  %v181 = vadd.f32 %v38, %v180
  %v182 = vpop.f32.mrb[0].mxu0
  %183 = vmatprep.mubr.bf16.mxu0 0
  %184 = vmatmul.mubr.bf16.gmra.mrb[0].mxu0 %v103
  %v185 = vpop.f32.mrb[0].mxu0
  %v186 = vadd.f32 %v38, %v185
  %v187 = vpop.f32.mrb[0].mxu0
  %v188 = vpop.f32.mrb[0].mxu0
  %v189 = vadd.f32 %v38, %v188
  %v190 = vpop.f32.mrb[0].mxu0
  %191 = vmatprep.mubr.bf16.mxu0 0
  %192 = vmatmul.mubr.bf16.gmra.mrb[0].mxu0 %v106
  %v193 = vpop.f32.mrb[0].mxu0
  %v194 = vadd.f32 %v38, %v193
  %v195 = vpop.f32.mrb[0].mxu0
  %v196 = vpop.f32.mrb[0].mxu0
  %v197 = vadd.f32 %v38, %v196
  %v198 = vpop.f32.mrb[0].mxu0
  %199 = vmatprep.mubr.bf16.mxu0 0
  %200 = vmatmul.mubr.bf16.gmra.mrb[0].mxu0 %v109
  %v201 = vpop.f32.mrb[0].mxu0
  %v202 = vadd.f32 %v38, %v201
  %v203 = vpop.f32.mrb[0].mxu0
  %v204 = vpop.f32.mrb[0].mxu0
  %v205 = vadd.f32 %v38, %v204
  %v206 = vpop.f32.mrb[0].mxu0
  %207 = vdwg.mxu0
  %vm208 = vcmask 261120
  %209 = vst.msk [vmem:[%s3] sm:$0xff] %vm208, %v146
  %210 = vst.msk [vmem:[%s3 + $0x8] sm:$0xff] %vm208, %v149
  %211 = vst.msk [vmem:[%s3 + $0x10] sm:$0xff] %vm208, %v154
  %212 = vst.msk [vmem:[%s3 + $0x18] sm:$0xff] %vm208, %v157
  %213 = vst.msk [vmem:[%s3 + $0x20] sm:$0xff] %vm208, %v162
  %214 = vst.msk [vmem:[%s3 + $0x28] sm:$0xff] %vm208, %v165
  %215 = vst.msk [vmem:[%s3 + $0x30] sm:$0xff] %vm208, %v170
  %216 = vst.msk [vmem:[%s3 + $0x38] sm:$0xff] %vm208, %v173
  %217 = vst.msk [vmem:[%s3 + $0x40] sm:$0xff] %vm208, %v178
  %218 = vst.msk [vmem:[%s3 + $0x48] sm:$0xff] %vm208, %v181
  %219 = vst.msk [vmem:[%s3 + $0x50] sm:$0xff] %vm208, %v186
  %220 = vst.msk [vmem:[%s3 + $0x58] sm:$0xff] %vm208, %v189
  %221 = vst.msk [vmem:[%s3 + $0x60] sm:$0xff] %vm208, %v194
  %222 = vst.msk [vmem:[%s3 + $0x68] sm:$0xff] %vm208, %v197
  %223 = vst.msk [vmem:[%s3 + $0x70] sm:$0xff] %vm208, %v202
  %224 = vst.msk [vmem:[%s3 + $0x78] sm:$0xff] %vm208, %v205
  // Predicated region
  $region14: #{solo_v1_forward.16} parent=0 // pred_check
    _
  $region15: #{solo_v1_forward.16} parent=0 // pred_check_branch
    %226 = sbr.rel (0) target = $region17
  $region16: #{solo_v1_forward.16} parent=0 // pred_region
    _
  $region17: #{solo_v1_forward.16} parent=0 // pred_fallthru
    _
  // Predicated region
  $region18: #{solo_v1_forward.16} parent=0 // pred_check
    _
  $region19: #{solo_v1_forward.16} parent=0 // pred_check_branch
    %228 = sbr.rel (0) target = $region21
  $region20: #{solo_v1_forward.16} parent=0 // pred_region
    _
  $region21: #{solo_v1_forward.16} parent=0 // pred_fallthru
    _

// kernel: solo_v1_forward.19
$region0: #{solo_v1_forward.19}
  #allocation0 [shape = 'u32[]', space=smem, size = 0x4, offset = 0x4, fixed_abs, tag = 'smem constant byte address 0x4 - core index']
  #allocation1 [shape = 'u32[144,128]{1,0:T(1,128)}', space=vmem, size = 0x12000, scoped, tag = 'internal scratch']
  %s0 = inlined_call_operand.vmem [shape: bf16[168,288], index: 0, kind: input, shape index: {}]
  %s1 = inlined_call_operand.vmem [shape: bf16[288,96], index: 1, kind: input, shape index: {}]
  %s2 = inlined_call_operand.vmem [shape: f32[1,96], index: 2, kind: input, shape index: {}]
  %s3 = inlined_call_operand.vmem [shape: f32[168,96], index: 3, kind: output, shape index: {}]
  %s4 = sld [smem:[#allocation0]]
  $region22: #{solo_v1_forward.19} parent=0
    _
  %s6 = ssub.s32 1, %s4
  %s7 = scalar_select 0, %s6, %s4
  // Predicated region
  $region2: #{solo_v1_forward.19} parent=0 // pred_check
    _
  $region3: #{solo_v1_forward.19} parent=0 // pred_check_branch
    %9 = sbr.rel (0) target = $region5
  $region4: #{solo_v1_forward.19} parent=0 // pred_region
    _
  $region5: #{solo_v1_forward.19} parent=0 // pred_fallthru
    _
  // Predicated region
  $region6: #{solo_v1_forward.19} parent=0 // pred_check
    _
  $region7: #{solo_v1_forward.19} parent=0 // pred_check_branch
    %11 = sbr.rel (0) target = $region9
  $region8: #{solo_v1_forward.19} parent=0 // pred_region
    _
  $region9: #{solo_v1_forward.19} parent=0 // pred_fallthru
    _
  // Predicated region
  $region10: #{solo_v1_forward.19} parent=0 // pred_check
    _
  $region11: #{solo_v1_forward.19} parent=0 // pred_check_branch
    %13 = sbr.rel (0) target = $region13
  $region12: #{solo_v1_forward.19} parent=0 // pred_region
    _
  $region13: #{solo_v1_forward.19} parent=0 // pred_fallthru
    _
  %v15 = vld [vmem:[%s0] sm:$0xff]
  %v16 = vld [vmem:[%s0 + $0x8] sm:$0xf]
  %v17 = vld [vmem:[%s0 + $0xc] sm:$0xff]
  %v18 = vld [vmem:[%s0 + $0x14] sm:$0xf]
  %v19 = vld [vmem:[%s0 + $0x18] sm:$0xff]
  %v20 = vld [vmem:[%s0 + $0x20] sm:$0xf]
  %v21 = vld [vmem:[%s0 + $0x24] sm:$0xff]
  %v22 = vld [vmem:[%s0 + $0x2c] sm:$0xf]
  %v23 = vld [vmem:[%s0 + $0x30] sm:$0xff]
  %v24 = vld [vmem:[%s0 + $0x38] sm:$0xf]
  %v25 = vld [vmem:[%s0 + $0x3c] sm:$0xff]
  %v26 = vld [vmem:[%s0 + $0x44] sm:$0xf]
  %v27 = vld [vmem:[%s0 + $0x48] sm:$0xff]
  %v28 = vld [vmem:[%s0 + $0x50] sm:$0xf]
  %v29 = vld [vmem:[%s0 + $0x54] sm:$0xff]
  %v30 = vld [vmem:[%s0 + $0x5c] sm:$0xf]
  %v31 = vld [vmem:[%s0 + $0x60] sm:$0xff]
  %v32 = vld [vmem:[%s0 + $0x68] sm:$0xf]
  %v33 = vld [vmem:[%s0 + $0x6c] sm:$0xff]
  %v34 = vld [vmem:[%s0 + $0x74] sm:$0xf]
  %v35 = vld [vmem:[%s0 + $0x78] sm:$0xff]
  %v36 = vld [vmem:[%s0 + $0x80] sm:$0xf]
  %v37 = vld [vmem:[%s0 + $0x84] sm:$0xff]
  %v38 = vld [vmem:[%s0 + $0x8c] sm:$0xf]
  %v39 = vld [vmem:[%s0 + $0x90] sm:$0xff]
  %v40 = vld [vmem:[%s0 + $0x98] sm:$0xf]
  %v41 = vld [vmem:[%s0 + $0x9c] sm:$0xff]
  %v42 = vld [vmem:[%s0 + $0xa4] sm:$0xf]
  %v43 = vld [vmem:[%s0 + $0xa8] sm:$0xff]
  %v44 = vld [vmem:[%s0 + $0xb0] sm:$0xf]
  %v45 = vld [vmem:[%s0 + $0xb4] sm:$0xff]
  %v46 = vld [vmem:[%s0 + $0xbc] sm:$0xf]
  %v47 = vld [vmem:[%s0 + $0xc0] sm:$0xff]
  %v48 = vld [vmem:[%s0 + $0xc8] sm:$0xf]
  %v49 = vld [vmem:[%s0 + $0xcc] sm:$0xff]
  %v50 = vld [vmem:[%s0 + $0xd4] sm:$0xf]
  %v51 = vld [vmem:[%s0 + $0xd8] sm:$0xff]
  %v52 = vld [vmem:[%s0 + $0xe0] sm:$0xf]
  %v53 = vld [vmem:[%s0 + $0xe4] sm:$0xff]
  %v54 = vld [vmem:[%s0 + $0xec] sm:$0xf]
  %v55 = vld [vmem:[%s0 + $0xf0] sm:$0xff]
  %v56 = vld [vmem:[%s0 + $0xf8] sm:$0xf]
  %v57 = vld [vmem:[%s1] sm:$0xf]
  %v58 = vld [vmem:[%s1 + $0x4] sm:$0xf]
  %v59 = vld [vmem:[%s1 + $0x8] sm:$0xf]
  %v60 = vld [vmem:[%s1 + $0xc] sm:$0xf]
  %v61 = vld [vmem:[%s1 + $0x10] sm:$0xf]
  %v62 = vld [vmem:[%s1 + $0x14] sm:$0xf]
  %v63 = vld [vmem:[%s1 + $0x18] sm:$0xf]
  %v64 = vld [vmem:[%s1 + $0x1c] sm:$0xf]
  %v65 = vld [vmem:[%s1 + $0x20] sm:$0xf]
  %v66 = vld [vmem:[%s1 + $0x24] sm:$0xf]
  %v67 = vld [vmem:[%s1 + $0x28] sm:$0xf]
  %v68 = vld [vmem:[%s1 + $0x2c] sm:$0xf]
  %v69 = vld [vmem:[%s1 + $0x30] sm:$0xf]
  %v70 = vld [vmem:[%s1 + $0x34] sm:$0xf]
  %v71 = vld [vmem:[%s1 + $0x38] sm:$0xf]
  %v72 = vld [vmem:[%s1 + $0x3c] sm:$0xf]
  %v73 = vld [vmem:[%s1 + $0x40] sm:$0xf]
  %v74 = vld [vmem:[%s1 + $0x44] sm:$0xf]
  %v75 = vld [vmem:[%s1 + $0x48] sm:$0xf]
  %v76 = vld [vmem:[%s1 + $0x4c] sm:$0xf]
  %v77 = vld [vmem:[%s1 + $0x50] sm:$0xf]
  %v78 = vld [vmem:[%s1 + $0x54] sm:$0xf]
  %v79 = vld [vmem:[%s1 + $0x58] sm:$0xf]
  %v80 = vld [vmem:[%s1 + $0x5c] sm:$0xf]
  %v81 = vld [vmem:[%s1 + $0x60] sm:$0xf]
  %v82 = vld [vmem:[%s1 + $0x64] sm:$0xf]
  %v83 = vld [vmem:[%s1 + $0x68] sm:$0xf]
  %v84 = vld [vmem:[%s1 + $0x6c] sm:$0xf]
  %v85 = vld [vmem:[%s1 + $0x70] sm:$0xf]
  %v86 = vld [vmem:[%s1 + $0x74] sm:$0xf]
  %v87 = vld [vmem:[%s1 + $0x78] sm:$0xf]
  %v88 = vld [vmem:[%s1 + $0x7c] sm:$0xf]
  %v89 = vld [vmem:[%s1 + $0x80] sm:$0xf]
  %v90 = vld [vmem:[%s1 + $0x84] sm:$0xf]
  %v91 = vld [vmem:[%s1 + $0x88] sm:$0xf]
  %v92 = vld [vmem:[%s1 + $0x8c] sm:$0xf]
  %v93 = vld [vmem:[%s2] sm:$0x1]
  %v95 = vlaneseq
  %v96 = vshrl.u32 %v95, 7
  %v97 = vsub.s32 0, %v96
  %v98 = vrot.slane %v93, %v97
  %v142 = vunpack.c.l.b16 %v15
  %v143 = vunpack.c.h.b16 %v15
  %v144 = vunpack.c.l.b16 %v16
  %v145 = vunpack.c.l.b16 %v17
  %v146 = vunpack.c.h.b16 %v17
  %v147 = vunpack.c.l.b16 %v18
  %v148 = vunpack.c.l.b16 %v19
  %v149 = vunpack.c.h.b16 %v19
  %v150 = vunpack.c.l.b16 %v20
  %v151 = vunpack.c.l.b16 %v21
  %v152 = vunpack.c.h.b16 %v21
  %v153 = vunpack.c.l.b16 %v22
  %v154 = vunpack.c.l.b16 %v23
  %v155 = vunpack.c.h.b16 %v23
  %v156 = vunpack.c.l.b16 %v24
  %v157 = vunpack.c.l.b16 %v25
  %v158 = vunpack.c.h.b16 %v25
  %v159 = vunpack.c.l.b16 %v26
  %v160 = vunpack.c.l.b16 %v27
  %v161 = vunpack.c.h.b16 %v27
  %v162 = vunpack.c.l.b16 %v28
  %v163 = vunpack.c.l.b16 %v29
  %v164 = vunpack.c.h.b16 %v29
  %v165 = vunpack.c.l.b16 %v30
  %v166 = vunpack.c.l.b16 %v31
  %v167 = vunpack.c.h.b16 %v31
  %v168 = vunpack.c.l.b16 %v32
  %v169 = vunpack.c.l.b16 %v33
  %v170 = vunpack.c.h.b16 %v33
  %v171 = vunpack.c.l.b16 %v34
  %v172 = vunpack.c.l.b16 %v35
  %v173 = vunpack.c.h.b16 %v35
  %v174 = vunpack.c.l.b16 %v36
  %v175 = vunpack.c.l.b16 %v37
  %v176 = vunpack.c.h.b16 %v37
  %v177 = vunpack.c.l.b16 %v38
  %v178 = vunpack.c.l.b16 %v39
  %v179 = vunpack.c.h.b16 %v39
  %v180 = vunpack.c.l.b16 %v40
  %v181 = vunpack.c.l.b16 %v41
  %v182 = vunpack.c.h.b16 %v41
  %v183 = vunpack.c.l.b16 %v42
  %v184 = vunpack.c.l.b16 %v43
  %v185 = vunpack.c.h.b16 %v43
  %v186 = vunpack.c.l.b16 %v44
  %v187 = vunpack.c.l.b16 %v45
  %v188 = vunpack.c.h.b16 %v45
  %v189 = vunpack.c.l.b16 %v46
  %v190 = vunpack.c.l.b16 %v47
  %v191 = vunpack.c.h.b16 %v47
  %v192 = vunpack.c.l.b16 %v48
  %v193 = vunpack.c.l.b16 %v49
  %v194 = vunpack.c.h.b16 %v49
  %v195 = vunpack.c.l.b16 %v50
  %v196 = vunpack.c.l.b16 %v51
  %v197 = vunpack.c.h.b16 %v51
  %v198 = vunpack.c.l.b16 %v52
  %v199 = vunpack.c.l.b16 %v53
  %v200 = vunpack.c.h.b16 %v53
  %v201 = vunpack.c.l.b16 %v54
  %v202 = vunpack.c.l.b16 %v55
  %v203 = vunpack.c.h.b16 %v55
  %v204 = vunpack.c.l.b16 %v56
  %v205 = vpack.c.b16 %v145, %v142
  %v206 = vpack.c.b16 %v146, %v143
  %v207 = vpack.c.b16 %v147, %v144
  %v208 = vpack.c.b16 %v151, %v148
  %v209 = vpack.c.b16 %v152, %v149
  %v210 = vpack.c.b16 %v153, %v150
  %v211 = vpack.c.b16 %v157, %v154
  %v212 = vpack.c.b16 %v158, %v155
  %v213 = vpack.c.b16 %v159, %v156
  %v214 = vpack.c.b16 %v163, %v160
  %v215 = vpack.c.b16 %v164, %v161
  %v216 = vpack.c.b16 %v165, %v162
  %v217 = vpack.c.b16 %v169, %v166
  %v218 = vpack.c.b16 %v170, %v167
  %v219 = vpack.c.b16 %v171, %v168
  %v220 = vpack.c.b16 %v175, %v172
  %v221 = vpack.c.b16 %v176, %v173
  %v222 = vpack.c.b16 %v177, %v174
  %v223 = vpack.c.b16 %v181, %v178
  %v224 = vpack.c.b16 %v182, %v179
  %v225 = vpack.c.b16 %v183, %v180
  %v226 = vpack.c.b16 %v187, %v184
  %v227 = vpack.c.b16 %v188, %v185
  %v228 = vpack.c.b16 %v189, %v186
  %v229 = vpack.c.b16 %v193, %v190
  %v230 = vpack.c.b16 %v194, %v191
  %v231 = vpack.c.b16 %v195, %v192
  %v232 = vpack.c.b16 %v199, %v196
  %v233 = vpack.c.b16 %v200, %v197
  %v234 = vpack.c.b16 %v201, %v198
  %v235 = vpack.c.b16 %v202, %v202
  %v236 = vpack.c.b16 %v203, %v203
  %v237 = vpack.c.b16 %v204, %v204
  %v296 = vunpack.c.l.b16 %v57
  %v297 = vunpack.c.l.b16 %v58
  %v298 = vunpack.c.l.b16 %v59
  %v299 = vunpack.c.l.b16 %v60
  %v300 = vunpack.c.l.b16 %v61
  %v301 = vunpack.c.l.b16 %v62
  %v302 = vunpack.c.l.b16 %v63
  %v303 = vunpack.c.l.b16 %v64
  %v304 = vunpack.c.l.b16 %v65
  %v305 = vunpack.c.l.b16 %v66
  %v306 = vunpack.c.l.b16 %v67
  %v307 = vunpack.c.l.b16 %v68
  %v308 = vunpack.c.l.b16 %v69
  %v309 = vunpack.c.l.b16 %v70
  %v310 = vunpack.c.l.b16 %v71
  %v311 = vunpack.c.l.b16 %v72
  %v312 = vunpack.c.l.b16 %v73
  %v313 = vunpack.c.l.b16 %v74
  %v314 = vunpack.c.l.b16 %v75
  %v315 = vunpack.c.l.b16 %v76
  %v316 = vunpack.c.l.b16 %v77
  %v317 = vunpack.c.l.b16 %v78
  %v318 = vunpack.c.l.b16 %v79
  %v319 = vunpack.c.l.b16 %v80
  %v320 = vunpack.c.l.b16 %v81
  %v321 = vunpack.c.l.b16 %v82
  %v322 = vunpack.c.l.b16 %v83
  %v323 = vunpack.c.l.b16 %v84
  %v324 = vunpack.c.l.b16 %v85
  %v325 = vunpack.c.l.b16 %v86
  %v326 = vunpack.c.l.b16 %v87
  %v327 = vunpack.c.l.b16 %v88
  %v328 = vunpack.c.l.b16 %v89
  %v329 = vunpack.c.l.b16 %v90
  %v330 = vunpack.c.l.b16 %v91
  %v331 = vunpack.c.l.b16 %v92
  %v332 = vpack.c.b16 %v297, %v296
  %v333 = vpack.c.b16 %v299, %v298
  %v334 = vpack.c.b16 %v301, %v300
  %v335 = vpack.c.b16 %v303, %v302
  %v336 = vpack.c.b16 %v305, %v304
  %v337 = vpack.c.b16 %v307, %v306
  %v338 = vpack.c.b16 %v309, %v308
  %v339 = vpack.c.b16 %v311, %v310
  %v340 = vpack.c.b16 %v313, %v312
  %v341 = vpack.c.b16 %v315, %v314
  %v342 = vpack.c.b16 %v317, %v316
  %v343 = vpack.c.b16 %v319, %v318
  %v344 = vpack.c.b16 %v321, %v320
  %v345 = vpack.c.b16 %v323, %v322
  %v346 = vpack.c.b16 %v325, %v324
  %v347 = vpack.c.b16 %v327, %v326
  %v348 = vpack.c.b16 %v329, %v328
  %v349 = vpack.c.b16 %v331, %v330
  %vm368 = vcmask 261120
  %v370 = vsel %vm368, %v207, 0
  %v373 = vsel %vm368, %v210, 0
  %v376 = vsel %vm368, %v213, 0
  %v379 = vsel %vm368, %v216, 0
  %v382 = vsel %vm368, %v219, 0
  %v385 = vsel %vm368, %v222, 0
  %v388 = vsel %vm368, %v225, 0
  %v391 = vsel %vm368, %v228, 0
  %v394 = vsel %vm368, %v231, 0
  %v397 = vsel %vm368, %v234, 0
  %v400 = vsel %vm368, %v237, 0
  %402 = vmatprep.subr.bf16.mxu0 0
  %403 = vmatpush1.bf16.msra.mxu0 %v332
  %404 = vmatprep.subr.bf16.mxu0 0
  %405 = vmatpush1.bf16.msra.mxu0 %v333
  %406 = vmatprep.subr.bf16.mxu0 0
  %407 = vmatpush1.bf16.msra.mxu0 %v334
  %408 = vmatprep.subr.bf16.mxu0 0
  %409 = vmatpush1.bf16.msra.mxu0 %v335
  %410 = vmatprep.subr.bf16.mxu0 0
  %411 = vmatpush1.bf16.msra.mxu0 %v336
  %412 = vmatprep.subr.bf16.mxu0 0
  %413 = vmatpush1.bf16.msra.mxu0 %v337
  %414 = vmatprep.subr.bf16.mxu0 0
  %415 = vmatpush1.bf16.msra.mxu0 %v338
  %416 = vmatprep.subr.bf16.mxu0 0
  %417 = vmatpush1.bf16.msra.mxu0 %v339
  %418 = vmatprep.subr.bf16.mxu0 0
  %419 = vmatpush1.bf16.msra.mxu0 %v340
  %420 = vmatprep.subr.bf16.mxu0 0
  %421 = vmatpush1.bf16.msra.mxu0 %v341
  %422 = vmatprep.subr.bf16.mxu0 0
  %423 = vmatpush1.bf16.msra.mxu0 %v342
  %424 = vmatprep.subr.bf16.mxu0 0
  %425 = vmatpush1.bf16.msra.mxu0 %v343
  %426 = vmatprep.subr.bf16.mxu0 0
  %427 = vmatpush1.bf16.msra.mxu0 %v344
  %428 = vmatprep.subr.bf16.mxu0 0
  %429 = vmatpush1.bf16.msra.mxu0 %v345
  %430 = vmatprep.subr.bf16.mxu0 0
  %431 = vmatpush1.bf16.msra.mxu0 %v346
  %432 = vmatprep.subr.bf16.mxu0 0
  %433 = vmatpush1.bf16.msra.mxu0 %v347
  %434 = vmatprep.mubr.bf16.mxu0 %v206
  %435 = vmatmul.mubr.bf16.gmra.mrb[0].mxu0 %v205
  %v436 = vpop.f32.mrb[0].mxu0
  %v437 = vadd.f32 %v98, %v436
  %v438 = vpop.f32.mrb[0].mxu0
  %v439 = vpop.f32.mrb[0].mxu0
  %v440 = vadd.f32 %v98, %v439
  %v441 = vpop.f32.mrb[0].mxu0
  %442 = vmatprep.mubr.bf16.mxu0 %v209
  %443 = vmatmul.mubr.bf16.gmra.mrb[0].mxu0 %v208
  %v444 = vpop.f32.mrb[0].mxu0
  %v445 = vadd.f32 %v98, %v444
  %v446 = vpop.f32.mrb[0].mxu0
  %v447 = vpop.f32.mrb[0].mxu0
  %v448 = vadd.f32 %v98, %v447
  %v449 = vpop.f32.mrb[0].mxu0
  %450 = vmatprep.mubr.bf16.mxu0 %v212
  %451 = vmatmul.mubr.bf16.gmra.mrb[0].mxu0 %v211
  %v452 = vpop.f32.mrb[0].mxu0
  %v453 = vadd.f32 %v98, %v452
  %v454 = vpop.f32.mrb[0].mxu0
  %v455 = vpop.f32.mrb[0].mxu0
  %v456 = vadd.f32 %v98, %v455
  %v457 = vpop.f32.mrb[0].mxu0
  %458 = vmatprep.mubr.bf16.mxu0 %v215
  %459 = vmatmul.mubr.bf16.gmra.mrb[0].mxu0 %v214
  %v460 = vpop.f32.mrb[0].mxu0
  %v461 = vadd.f32 %v98, %v460
  %v462 = vpop.f32.mrb[0].mxu0
  %v463 = vpop.f32.mrb[0].mxu0
  %v464 = vadd.f32 %v98, %v463
  %v465 = vpop.f32.mrb[0].mxu0
  %466 = vmatprep.mubr.bf16.mxu0 %v218
  %467 = vmatmul.mubr.bf16.gmra.mrb[0].mxu0 %v217
  %v468 = vpop.f32.mrb[0].mxu0
  %v469 = vadd.f32 %v98, %v468
  %v470 = vpop.f32.mrb[0].mxu0
  %v471 = vpop.f32.mrb[0].mxu0
  %v472 = vadd.f32 %v98, %v471
  %v473 = vpop.f32.mrb[0].mxu0
  %474 = vmatprep.mubr.bf16.mxu0 %v221
  %475 = vmatmul.mubr.bf16.gmra.mrb[0].mxu0 %v220
  %v476 = vpop.f32.mrb[0].mxu0
  %v477 = vadd.f32 %v98, %v476
  %v478 = vpop.f32.mrb[0].mxu0
  %v479 = vpop.f32.mrb[0].mxu0
  %v480 = vadd.f32 %v98, %v479
  %v481 = vpop.f32.mrb[0].mxu0
  %482 = vmatprep.mubr.bf16.mxu0 %v224
  %483 = vmatmul.mubr.bf16.gmra.mrb[0].mxu0 %v223
  %v484 = vpop.f32.mrb[0].mxu0
  %v485 = vadd.f32 %v98, %v484
  %v486 = vpop.f32.mrb[0].mxu0
  %v487 = vpop.f32.mrb[0].mxu0
  %v488 = vadd.f32 %v98, %v487
  %v489 = vpop.f32.mrb[0].mxu0
  %490 = vmatprep.mubr.bf16.mxu0 %v227
  %491 = vmatmul.mubr.bf16.gmra.mrb[0].mxu0 %v226
  %v492 = vpop.f32.mrb[0].mxu0
  %v493 = vadd.f32 %v98, %v492
  %v494 = vpop.f32.mrb[0].mxu0
  %v495 = vpop.f32.mrb[0].mxu0
  %v496 = vadd.f32 %v98, %v495
  %v497 = vpop.f32.mrb[0].mxu0
  %498 = vmatprep.mubr.bf16.mxu0 %v230
  %499 = vmatmul.mubr.bf16.gmra.mrb[0].mxu0 %v229
  %v500 = vpop.f32.mrb[0].mxu0
  %v501 = vadd.f32 %v98, %v500
  %v502 = vpop.f32.mrb[0].mxu0
  %v503 = vpop.f32.mrb[0].mxu0
  %v504 = vadd.f32 %v98, %v503
  %v505 = vpop.f32.mrb[0].mxu0
  %506 = vmatprep.mubr.bf16.mxu0 %v233
  %507 = vmatmul.mubr.bf16.gmra.mrb[0].mxu0 %v232
  %v508 = vpop.f32.mrb[0].mxu0
  %v509 = vadd.f32 %v98, %v508
  %v510 = vpop.f32.mrb[0].mxu0
  %v511 = vpop.f32.mrb[0].mxu0
  %v512 = vadd.f32 %v98, %v511
  %v513 = vpop.f32.mrb[0].mxu0
  %514 = vmatprep.mubr.bf16.mxu0 %v236
  %515 = vmatmul.mubr.bf16.gmra.mrb[0].mxu0 %v235
  %v516 = vpop.f32.mrb[0].mxu0
  %v517 = vadd.f32 %v98, %v516
  %v518 = vpop.f32.mrb[0].mxu0
  %v519 = vpop.f32.mrb[0].mxu0
  %v520 = vpop.f32.mrb[0].mxu0
  %521 = vdwg.mxu0
  %522 = vmatprep.subr.bf16.mxu0 0
  %523 = vmatpush1.bf16.msra.mxu0 %v348
  %524 = vmatprep.subr.bf16.mxu0 0
  %525 = vmatpush1.bf16.msra.mxu0 %v349
  %526 = vmatprep.subr.bf16.mxu0 0
  %527 = vmatpush1.bf16.msra.mxu0 0
  %528 = vmatprep.subr.bf16.mxu0 0
  %529 = vmatpush1.bf16.msra.mxu0 0
  %530 = vmatprep.subr.bf16.mxu0 0
  %531 = vmatpush1.bf16.msra.mxu0 0
  %532 = vmatprep.subr.bf16.mxu0 0
  %533 = vmatpush1.bf16.msra.mxu0 0
  %534 = vmatprep.subr.bf16.mxu0 0
  %535 = vmatpush1.bf16.msra.mxu0 0
  %536 = vmatprep.subr.bf16.mxu0 0
  %537 = vmatpush1.bf16.msra.mxu0 0
  %538 = vmatprep.subr.bf16.mxu0 0
  %539 = vmatpush1.bf16.msra.mxu0 0
  %540 = vmatprep.subr.bf16.mxu0 0
  %541 = vmatpush1.bf16.msra.mxu0 0
  %542 = vmatprep.subr.bf16.mxu0 0
  %543 = vmatpush1.bf16.msra.mxu0 0
  %544 = vmatprep.subr.bf16.mxu0 0
  %545 = vmatpush1.bf16.msra.mxu0 0
  %546 = vmatprep.subr.bf16.mxu0 0
  %547 = vmatpush1.bf16.msra.mxu0 0
  %548 = vmatprep.subr.bf16.mxu0 0
  %549 = vmatpush1.bf16.msra.mxu0 0
  %550 = vmatprep.subr.bf16.mxu0 0
  %551 = vmatpush1.bf16.msra.mxu0 0
  %552 = vmatprep.subr.bf16.mxu0 0
  %553 = vmatpush1.bf16.msra.mxu0 0
  %554 = vmatprep.mubr.bf16.mxu0 0
  %555 = vmatmul.mubr.bf16.gmra.mrb[0].mxu0 %v370
  %v556 = vpop.f32.mrb[0].mxu0
  %v557 = vadd.f32 %v437, %v556
  %v558 = vpop.f32.mrb[0].mxu0
  %v559 = vpop.f32.mrb[0].mxu0
  %v560 = vadd.f32 %v440, %v559
  %v561 = vpop.f32.mrb[0].mxu0
  %562 = vmatprep.mubr.bf16.mxu0 0
  %563 = vmatmul.mubr.bf16.gmra.mrb[0].mxu0 %v373
  %v564 = vpop.f32.mrb[0].mxu0
  %v565 = vadd.f32 %v445, %v564
  %v566 = vpop.f32.mrb[0].mxu0
  %v567 = vpop.f32.mrb[0].mxu0
  %v568 = vadd.f32 %v448, %v567
  %v569 = vpop.f32.mrb[0].mxu0
  %570 = vmatprep.mubr.bf16.mxu0 0
  %571 = vmatmul.mubr.bf16.gmra.mrb[0].mxu0 %v376
  %v572 = vpop.f32.mrb[0].mxu0
  %v573 = vadd.f32 %v453, %v572
  %v574 = vpop.f32.mrb[0].mxu0
  %v575 = vpop.f32.mrb[0].mxu0
  %v576 = vadd.f32 %v456, %v575
  %v577 = vpop.f32.mrb[0].mxu0
  %578 = vmatprep.mubr.bf16.mxu0 0
  %579 = vmatmul.mubr.bf16.gmra.mrb[0].mxu0 %v379
  %v580 = vpop.f32.mrb[0].mxu0
  %v581 = vadd.f32 %v461, %v580
  %v582 = vpop.f32.mrb[0].mxu0
  %v583 = vpop.f32.mrb[0].mxu0
  %v584 = vadd.f32 %v464, %v583
  %v585 = vpop.f32.mrb[0].mxu0
  %586 = vmatprep.mubr.bf16.mxu0 0
  %587 = vmatmul.mubr.bf16.gmra.mrb[0].mxu0 %v382
  %v588 = vpop.f32.mrb[0].mxu0
  %v589 = vadd.f32 %v469, %v588
  %v590 = vpop.f32.mrb[0].mxu0
  %v591 = vpop.f32.mrb[0].mxu0
  %v592 = vadd.f32 %v472, %v591
  %v593 = vpop.f32.mrb[0].mxu0
  %594 = vmatprep.mubr.bf16.mxu0 0
  %595 = vmatmul.mubr.bf16.gmra.mrb[0].mxu0 %v385
  %v596 = vpop.f32.mrb[0].mxu0
  %v597 = vadd.f32 %v477, %v596
  %v598 = vpop.f32.mrb[0].mxu0
  %v599 = vpop.f32.mrb[0].mxu0
  %v600 = vadd.f32 %v480, %v599
  %v601 = vpop.f32.mrb[0].mxu0
  %602 = vmatprep.mubr.bf16.mxu0 0
  %603 = vmatmul.mubr.bf16.gmra.mrb[0].mxu0 %v388
  %v604 = vpop.f32.mrb[0].mxu0
  %v605 = vadd.f32 %v485, %v604
  %v606 = vpop.f32.mrb[0].mxu0
  %v607 = vpop.f32.mrb[0].mxu0
  %v608 = vadd.f32 %v488, %v607
  %v609 = vpop.f32.mrb[0].mxu0
  %610 = vmatprep.mubr.bf16.mxu0 0
  %611 = vmatmul.mubr.bf16.gmra.mrb[0].mxu0 %v391
  %v612 = vpop.f32.mrb[0].mxu0
  %v613 = vadd.f32 %v493, %v612
  %v614 = vpop.f32.mrb[0].mxu0
  %v615 = vpop.f32.mrb[0].mxu0
  %v616 = vadd.f32 %v496, %v615
  %v617 = vpop.f32.mrb[0].mxu0
  %618 = vmatprep.mubr.bf16.mxu0 0
  %619 = vmatmul.mubr.bf16.gmra.mrb[0].mxu0 %v394
  %v620 = vpop.f32.mrb[0].mxu0
  %v621 = vadd.f32 %v501, %v620
  %v622 = vpop.f32.mrb[0].mxu0
  %v623 = vpop.f32.mrb[0].mxu0
  %v624 = vadd.f32 %v504, %v623
  %v625 = vpop.f32.mrb[0].mxu0
  %626 = vmatprep.mubr.bf16.mxu0 0
  %627 = vmatmul.mubr.bf16.gmra.mrb[0].mxu0 %v397
  %v628 = vpop.f32.mrb[0].mxu0
  %v629 = vadd.f32 %v509, %v628
  %v630 = vpop.f32.mrb[0].mxu0
  %v631 = vpop.f32.mrb[0].mxu0
  %v632 = vadd.f32 %v512, %v631
  %v633 = vpop.f32.mrb[0].mxu0
  %634 = vmatprep.mubr.bf16.mxu0 0
  %635 = vmatmul.mubr.bf16.gmra.mrb[0].mxu0 %v400
  %v636 = vpop.f32.mrb[0].mxu0
  %v637 = vadd.f32 %v517, %v636
  %v638 = vpop.f32.mrb[0].mxu0
  %v639 = vpop.f32.mrb[0].mxu0
  %v640 = vpop.f32.mrb[0].mxu0
  %641 = vdwg.mxu0
  %vm642 = vcmask 785408
  %643 = vst.msk [vmem:[%s3] sm:$0xff] %vm642, %v557
  %644 = vst.msk [vmem:[%s3 + $0x8] sm:$0xff] %vm642, %v560
  %645 = vst.msk [vmem:[%s3 + $0x10] sm:$0xff] %vm642, %v565
  %646 = vst.msk [vmem:[%s3 + $0x18] sm:$0xff] %vm642, %v568
  %647 = vst.msk [vmem:[%s3 + $0x20] sm:$0xff] %vm642, %v573
  %648 = vst.msk [vmem:[%s3 + $0x28] sm:$0xff] %vm642, %v576
  %649 = vst.msk [vmem:[%s3 + $0x30] sm:$0xff] %vm642, %v581
  %650 = vst.msk [vmem:[%s3 + $0x38] sm:$0xff] %vm642, %v584
  %651 = vst.msk [vmem:[%s3 + $0x40] sm:$0xff] %vm642, %v589
  %652 = vst.msk [vmem:[%s3 + $0x48] sm:$0xff] %vm642, %v592
  %653 = vst.msk [vmem:[%s3 + $0x50] sm:$0xff] %vm642, %v597
  %654 = vst.msk [vmem:[%s3 + $0x58] sm:$0xff] %vm642, %v600
  %655 = vst.msk [vmem:[%s3 + $0x60] sm:$0xff] %vm642, %v605
  %656 = vst.msk [vmem:[%s3 + $0x68] sm:$0xff] %vm642, %v608
  %657 = vst.msk [vmem:[%s3 + $0x70] sm:$0xff] %vm642, %v613
  %658 = vst.msk [vmem:[%s3 + $0x78] sm:$0xff] %vm642, %v616
  %659 = vst.msk [vmem:[%s3 + $0x80] sm:$0xff] %vm642, %v621
  %660 = vst.msk [vmem:[%s3 + $0x88] sm:$0xff] %vm642, %v624
  %661 = vst.msk [vmem:[%s3 + $0x90] sm:$0xff] %vm642, %v629
  %662 = vst.msk [vmem:[%s3 + $0x98] sm:$0xff] %vm642, %v632
  %663 = vst.msk [vmem:[%s3 + $0xa0] sm:$0xff] %vm642, %v637
  // Predicated region
  $region14: #{solo_v1_forward.19} parent=0 // pred_check
    _
  $region15: #{solo_v1_forward.19} parent=0 // pred_check_branch
    %665 = sbr.rel (0) target = $region17
  $region16: #{solo_v1_forward.19} parent=0 // pred_region
    _
  $region17: #{solo_v1_forward.19} parent=0 // pred_fallthru
    _
  // Predicated region
  $region18: #{solo_v1_forward.19} parent=0 // pred_check
    _
  $region19: #{solo_v1_forward.19} parent=0 // pred_check_branch
    %667 = sbr.rel (0) target = $region21
  $region20: #{solo_v1_forward.19} parent=0 // pred_region
    _
  $region21: #{solo_v1_forward.19} parent=0 // pred_fallthru
    _

// kernel: solo_v1_forward.22
$region0: #{solo_v1_forward.22}
  #allocation0 [shape = 'u32[]', space=smem, size = 0x4, offset = 0x4, fixed_abs, tag = 'smem constant byte address 0x4 - core index']
  #allocation1 [shape = 'u32[144,128]{1,0:T(1,128)}', space=vmem, size = 0x12000, scoped, tag = 'internal scratch']
  %s0 = inlined_call_operand.vmem [shape: bf16[168,288], index: 0, kind: input, shape index: {}]
  %s1 = inlined_call_operand.vmem [shape: bf16[288,32], index: 1, kind: input, shape index: {}]
  %s2 = inlined_call_operand.vmem [shape: f32[1,32], index: 2, kind: input, shape index: {}]
  %s3 = inlined_call_operand.vmem [shape: f32[168,32], index: 3, kind: output, shape index: {}]
  %s4 = sld [smem:[#allocation0]]
  $region22: #{solo_v1_forward.22} parent=0
    _
  %s6 = ssub.s32 1, %s4
  %s7 = scalar_select 0, %s6, %s4
  // Predicated region
  $region2: #{solo_v1_forward.22} parent=0 // pred_check
    _
  $region3: #{solo_v1_forward.22} parent=0 // pred_check_branch
    %9 = sbr.rel (0) target = $region5
  $region4: #{solo_v1_forward.22} parent=0 // pred_region
    _
  $region5: #{solo_v1_forward.22} parent=0 // pred_fallthru
    _
  // Predicated region
  $region6: #{solo_v1_forward.22} parent=0 // pred_check
    _
  $region7: #{solo_v1_forward.22} parent=0 // pred_check_branch
    %11 = sbr.rel (0) target = $region9
  $region8: #{solo_v1_forward.22} parent=0 // pred_region
    _
  $region9: #{solo_v1_forward.22} parent=0 // pred_fallthru
    _
  // Predicated region
  $region10: #{solo_v1_forward.22} parent=0 // pred_check
    _
  $region11: #{solo_v1_forward.22} parent=0 // pred_check_branch
    %13 = sbr.rel (0) target = $region13
  $region12: #{solo_v1_forward.22} parent=0 // pred_region
    _
  $region13: #{solo_v1_forward.22} parent=0 // pred_fallthru
    _
  %v15 = vld [vmem:[%s0] sm:$0xff]
  %v16 = vld [vmem:[%s0 + $0x8] sm:$0xf]
  %v17 = vld [vmem:[%s0 + $0xc] sm:$0xff]
  %v18 = vld [vmem:[%s0 + $0x14] sm:$0xf]
  %v19 = vld [vmem:[%s0 + $0x18] sm:$0xff]
  %v20 = vld [vmem:[%s0 + $0x20] sm:$0xf]
  %v21 = vld [vmem:[%s0 + $0x24] sm:$0xff]
  %v22 = vld [vmem:[%s0 + $0x2c] sm:$0xf]
  %v23 = vld [vmem:[%s0 + $0x30] sm:$0xff]
  %v24 = vld [vmem:[%s0 + $0x38] sm:$0xf]
  %v25 = vld [vmem:[%s0 + $0x3c] sm:$0xff]
  %v26 = vld [vmem:[%s0 + $0x44] sm:$0xf]
  %v27 = vld [vmem:[%s0 + $0x48] sm:$0xff]
  %v28 = vld [vmem:[%s0 + $0x50] sm:$0xf]
  %v29 = vld [vmem:[%s0 + $0x54] sm:$0xff]
  %v30 = vld [vmem:[%s0 + $0x5c] sm:$0xf]
  %v31 = vld [vmem:[%s0 + $0x60] sm:$0xff]
  %v32 = vld [vmem:[%s0 + $0x68] sm:$0xf]
  %v33 = vld [vmem:[%s0 + $0x6c] sm:$0xff]
  %v34 = vld [vmem:[%s0 + $0x74] sm:$0xf]
  %v35 = vld [vmem:[%s0 + $0x78] sm:$0xff]
  %v36 = vld [vmem:[%s0 + $0x80] sm:$0xf]
  %v37 = vld [vmem:[%s0 + $0x84] sm:$0xff]
  %v38 = vld [vmem:[%s0 + $0x8c] sm:$0xf]
  %v39 = vld [vmem:[%s0 + $0x90] sm:$0xff]
  %v40 = vld [vmem:[%s0 + $0x98] sm:$0xf]
  %v41 = vld [vmem:[%s0 + $0x9c] sm:$0xff]
  %v42 = vld [vmem:[%s0 + $0xa4] sm:$0xf]
  %v43 = vld [vmem:[%s0 + $0xa8] sm:$0xff]
  %v44 = vld [vmem:[%s0 + $0xb0] sm:$0xf]
  %v45 = vld [vmem:[%s0 + $0xb4] sm:$0xff]
  %v46 = vld [vmem:[%s0 + $0xbc] sm:$0xf]
  %v47 = vld [vmem:[%s0 + $0xc0] sm:$0xff]
  %v48 = vld [vmem:[%s0 + $0xc8] sm:$0xf]
  %v49 = vld [vmem:[%s0 + $0xcc] sm:$0xff]
  %v50 = vld [vmem:[%s0 + $0xd4] sm:$0xf]
  %v51 = vld [vmem:[%s0 + $0xd8] sm:$0xff]
  %v52 = vld [vmem:[%s0 + $0xe0] sm:$0xf]
  %v53 = vld [vmem:[%s0 + $0xe4] sm:$0xff]
  %v54 = vld [vmem:[%s0 + $0xec] sm:$0xf]
  %v55 = vld [vmem:[%s0 + $0xf0] sm:$0xff]
  %v56 = vld [vmem:[%s0 + $0xf8] sm:$0xf]
  %v57 = vld [vmem:[%s1] sm:$0xf]
  %v58 = vld [vmem:[%s1 + $0x4] sm:$0xf]
  %v59 = vld [vmem:[%s1 + $0x8] sm:$0xf]
  %v60 = vld [vmem:[%s1 + $0xc] sm:$0xf]
  %v61 = vld [vmem:[%s1 + $0x10] sm:$0xf]
  %v62 = vld [vmem:[%s1 + $0x14] sm:$0xf]
  %v63 = vld [vmem:[%s1 + $0x18] sm:$0xf]
  %v64 = vld [vmem:[%s1 + $0x1c] sm:$0xf]
  %v65 = vld [vmem:[%s1 + $0x20] sm:$0xf]
  %v66 = vld [vmem:[%s1 + $0x24] sm:$0xf]
  %v67 = vld [vmem:[%s1 + $0x28] sm:$0xf]
  %v68 = vld [vmem:[%s1 + $0x2c] sm:$0xf]
  %v69 = vld [vmem:[%s1 + $0x30] sm:$0xf]
  %v70 = vld [vmem:[%s1 + $0x34] sm:$0xf]
  %v71 = vld [vmem:[%s1 + $0x38] sm:$0xf]
  %v72 = vld [vmem:[%s1 + $0x3c] sm:$0xf]
  %v73 = vld [vmem:[%s1 + $0x40] sm:$0xf]
  %v74 = vld [vmem:[%s1 + $0x44] sm:$0xf]
  %v75 = vld [vmem:[%s1 + $0x48] sm:$0xf]
  %v76 = vld [vmem:[%s1 + $0x4c] sm:$0xf]
  %v77 = vld [vmem:[%s1 + $0x50] sm:$0xf]
  %v78 = vld [vmem:[%s1 + $0x54] sm:$0xf]
  %v79 = vld [vmem:[%s1 + $0x58] sm:$0xf]
  %v80 = vld [vmem:[%s1 + $0x5c] sm:$0xf]
  %v81 = vld [vmem:[%s1 + $0x60] sm:$0xf]
  %v82 = vld [vmem:[%s1 + $0x64] sm:$0xf]
  %v83 = vld [vmem:[%s1 + $0x68] sm:$0xf]
  %v84 = vld [vmem:[%s1 + $0x6c] sm:$0xf]
  %v85 = vld [vmem:[%s1 + $0x70] sm:$0xf]
  %v86 = vld [vmem:[%s1 + $0x74] sm:$0xf]
  %v87 = vld [vmem:[%s1 + $0x78] sm:$0xf]
  %v88 = vld [vmem:[%s1 + $0x7c] sm:$0xf]
  %v89 = vld [vmem:[%s1 + $0x80] sm:$0xf]
  %v90 = vld [vmem:[%s1 + $0x84] sm:$0xf]
  %v91 = vld [vmem:[%s1 + $0x88] sm:$0xf]
  %v92 = vld [vmem:[%s1 + $0x8c] sm:$0xf]
  %v93 = vld [vmem:[%s2] sm:$0x1]
  %v95 = vlaneseq
  %v96 = vshrl.u32 %v95, 7
  %v97 = vsub.s32 0, %v96
  %v98 = vrot.slane %v93, %v97
  %v142 = vunpack.c.l.b16 %v15
  %v143 = vunpack.c.h.b16 %v15
  %v144 = vunpack.c.l.b16 %v16
  %v145 = vunpack.c.l.b16 %v17
  %v146 = vunpack.c.h.b16 %v17
  %v147 = vunpack.c.l.b16 %v18
  %v148 = vunpack.c.l.b16 %v19
  %v149 = vunpack.c.h.b16 %v19
  %v150 = vunpack.c.l.b16 %v20
  %v151 = vunpack.c.l.b16 %v21
  %v152 = vunpack.c.h.b16 %v21
  %v153 = vunpack.c.l.b16 %v22
  %v154 = vunpack.c.l.b16 %v23
  %v155 = vunpack.c.h.b16 %v23
  %v156 = vunpack.c.l.b16 %v24
  %v157 = vunpack.c.l.b16 %v25
  %v158 = vunpack.c.h.b16 %v25
  %v159 = vunpack.c.l.b16 %v26
  %v160 = vunpack.c.l.b16 %v27
  %v161 = vunpack.c.h.b16 %v27
  %v162 = vunpack.c.l.b16 %v28
  %v163 = vunpack.c.l.b16 %v29
  %v164 = vunpack.c.h.b16 %v29
  %v165 = vunpack.c.l.b16 %v30
  %v166 = vunpack.c.l.b16 %v31
  %v167 = vunpack.c.h.b16 %v31
  %v168 = vunpack.c.l.b16 %v32
  %v169 = vunpack.c.l.b16 %v33
  %v170 = vunpack.c.h.b16 %v33
  %v171 = vunpack.c.l.b16 %v34
  %v172 = vunpack.c.l.b16 %v35
  %v173 = vunpack.c.h.b16 %v35
  %v174 = vunpack.c.l.b16 %v36
  %v175 = vunpack.c.l.b16 %v37
  %v176 = vunpack.c.h.b16 %v37
  %v177 = vunpack.c.l.b16 %v38
  %v178 = vunpack.c.l.b16 %v39
  %v179 = vunpack.c.h.b16 %v39
  %v180 = vunpack.c.l.b16 %v40
  %v181 = vunpack.c.l.b16 %v41
  %v182 = vunpack.c.h.b16 %v41
  %v183 = vunpack.c.l.b16 %v42
  %v184 = vunpack.c.l.b16 %v43
  %v185 = vunpack.c.h.b16 %v43
  %v186 = vunpack.c.l.b16 %v44
  %v187 = vunpack.c.l.b16 %v45
  %v188 = vunpack.c.h.b16 %v45
  %v189 = vunpack.c.l.b16 %v46
  %v190 = vunpack.c.l.b16 %v47
  %v191 = vunpack.c.h.b16 %v47
  %v192 = vunpack.c.l.b16 %v48
  %v193 = vunpack.c.l.b16 %v49
  %v194 = vunpack.c.h.b16 %v49
  %v195 = vunpack.c.l.b16 %v50
  %v196 = vunpack.c.l.b16 %v51
  %v197 = vunpack.c.h.b16 %v51
  %v198 = vunpack.c.l.b16 %v52
  %v199 = vunpack.c.l.b16 %v53
  %v200 = vunpack.c.h.b16 %v53
  %v201 = vunpack.c.l.b16 %v54
  %v202 = vunpack.c.l.b16 %v55
  %v203 = vunpack.c.h.b16 %v55
  %v204 = vunpack.c.l.b16 %v56
  %v205 = vpack.c.b16 %v145, %v142
  %v206 = vpack.c.b16 %v146, %v143
  %v207 = vpack.c.b16 %v147, %v144
  %v208 = vpack.c.b16 %v151, %v148
  %v209 = vpack.c.b16 %v152, %v149
  %v210 = vpack.c.b16 %v153, %v150
  %v211 = vpack.c.b16 %v157, %v154
  %v212 = vpack.c.b16 %v158, %v155
  %v213 = vpack.c.b16 %v159, %v156
  %v214 = vpack.c.b16 %v163, %v160
  %v215 = vpack.c.b16 %v164, %v161
  %v216 = vpack.c.b16 %v165, %v162
  %v217 = vpack.c.b16 %v169, %v166
  %v218 = vpack.c.b16 %v170, %v167
  %v219 = vpack.c.b16 %v171, %v168
  %v220 = vpack.c.b16 %v175, %v172
  %v221 = vpack.c.b16 %v176, %v173
  %v222 = vpack.c.b16 %v177, %v174
  %v223 = vpack.c.b16 %v181, %v178
  %v224 = vpack.c.b16 %v182, %v179
  %v225 = vpack.c.b16 %v183, %v180
  %v226 = vpack.c.b16 %v187, %v184
  %v227 = vpack.c.b16 %v188, %v185
  %v228 = vpack.c.b16 %v189, %v186
  %v229 = vpack.c.b16 %v193, %v190
  %v230 = vpack.c.b16 %v194, %v191
  %v231 = vpack.c.b16 %v195, %v192
  %v232 = vpack.c.b16 %v199, %v196
  %v233 = vpack.c.b16 %v200, %v197
  %v234 = vpack.c.b16 %v201, %v198
  %v235 = vpack.c.b16 %v202, %v202
  %v236 = vpack.c.b16 %v203, %v203
  %v237 = vpack.c.b16 %v204, %v204
  %v296 = vunpack.c.l.b16 %v57
  %v297 = vunpack.c.l.b16 %v58
  %v298 = vunpack.c.l.b16 %v59
  %v299 = vunpack.c.l.b16 %v60
  %v300 = vunpack.c.l.b16 %v61
  %v301 = vunpack.c.l.b16 %v62
  %v302 = vunpack.c.l.b16 %v63
  %v303 = vunpack.c.l.b16 %v64
  %v304 = vunpack.c.l.b16 %v65
  %v305 = vunpack.c.l.b16 %v66
  %v306 = vunpack.c.l.b16 %v67
  %v307 = vunpack.c.l.b16 %v68
  %v308 = vunpack.c.l.b16 %v69
  %v309 = vunpack.c.l.b16 %v70
  %v310 = vunpack.c.l.b16 %v71
  %v311 = vunpack.c.l.b16 %v72
  %v312 = vunpack.c.l.b16 %v73
  %v313 = vunpack.c.l.b16 %v74
  %v314 = vunpack.c.l.b16 %v75
  %v315 = vunpack.c.l.b16 %v76
  %v316 = vunpack.c.l.b16 %v77
  %v317 = vunpack.c.l.b16 %v78
  %v318 = vunpack.c.l.b16 %v79
  %v319 = vunpack.c.l.b16 %v80
  %v320 = vunpack.c.l.b16 %v81
  %v321 = vunpack.c.l.b16 %v82
  %v322 = vunpack.c.l.b16 %v83
  %v323 = vunpack.c.l.b16 %v84
  %v324 = vunpack.c.l.b16 %v85
  %v325 = vunpack.c.l.b16 %v86
  %v326 = vunpack.c.l.b16 %v87
  %v327 = vunpack.c.l.b16 %v88
  %v328 = vunpack.c.l.b16 %v89
  %v329 = vunpack.c.l.b16 %v90
  %v330 = vunpack.c.l.b16 %v91
  %v331 = vunpack.c.l.b16 %v92
  %v332 = vpack.c.b16 %v297, %v296
  %v333 = vpack.c.b16 %v299, %v298
  %v334 = vpack.c.b16 %v301, %v300
  %v335 = vpack.c.b16 %v303, %v302
  %v336 = vpack.c.b16 %v305, %v304
  %v337 = vpack.c.b16 %v307, %v306
  %v338 = vpack.c.b16 %v309, %v308
  %v339 = vpack.c.b16 %v311, %v310
  %v340 = vpack.c.b16 %v313, %v312
  %v341 = vpack.c.b16 %v315, %v314
  %v342 = vpack.c.b16 %v317, %v316
  %v343 = vpack.c.b16 %v319, %v318
  %v344 = vpack.c.b16 %v321, %v320
  %v345 = vpack.c.b16 %v323, %v322
  %v346 = vpack.c.b16 %v325, %v324
  %v347 = vpack.c.b16 %v327, %v326
  %v348 = vpack.c.b16 %v329, %v328
  %v349 = vpack.c.b16 %v331, %v330
  %vm368 = vcmask 261120
  %v370 = vsel %vm368, %v207, 0
  %v373 = vsel %vm368, %v210, 0
  %v376 = vsel %vm368, %v213, 0
  %v379 = vsel %vm368, %v216, 0
  %v382 = vsel %vm368, %v219, 0
  %v385 = vsel %vm368, %v222, 0
  %v388 = vsel %vm368, %v225, 0
  %v391 = vsel %vm368, %v228, 0
  %v394 = vsel %vm368, %v231, 0
  %v397 = vsel %vm368, %v234, 0
  %v400 = vsel %vm368, %v237, 0
  %402 = vmatprep.subr.bf16.mxu0 0
  %403 = vmatpush1.bf16.msra.mxu0 %v332
  %404 = vmatprep.subr.bf16.mxu0 0
  %405 = vmatpush1.bf16.msra.mxu0 %v333
  %406 = vmatprep.subr.bf16.mxu0 0
  %407 = vmatpush1.bf16.msra.mxu0 %v334
  %408 = vmatprep.subr.bf16.mxu0 0
  %409 = vmatpush1.bf16.msra.mxu0 %v335
  %410 = vmatprep.subr.bf16.mxu0 0
  %411 = vmatpush1.bf16.msra.mxu0 %v336
  %412 = vmatprep.subr.bf16.mxu0 0
  %413 = vmatpush1.bf16.msra.mxu0 %v337
  %414 = vmatprep.subr.bf16.mxu0 0
  %415 = vmatpush1.bf16.msra.mxu0 %v338
  %416 = vmatprep.subr.bf16.mxu0 0
  %417 = vmatpush1.bf16.msra.mxu0 %v339
  %418 = vmatprep.subr.bf16.mxu0 0
  %419 = vmatpush1.bf16.msra.mxu0 %v340
  %420 = vmatprep.subr.bf16.mxu0 0
  %421 = vmatpush1.bf16.msra.mxu0 %v341
  %422 = vmatprep.subr.bf16.mxu0 0
  %423 = vmatpush1.bf16.msra.mxu0 %v342
  %424 = vmatprep.subr.bf16.mxu0 0
  %425 = vmatpush1.bf16.msra.mxu0 %v343
  %426 = vmatprep.subr.bf16.mxu0 0
  %427 = vmatpush1.bf16.msra.mxu0 %v344
  %428 = vmatprep.subr.bf16.mxu0 0
  %429 = vmatpush1.bf16.msra.mxu0 %v345
  %430 = vmatprep.subr.bf16.mxu0 0
  %431 = vmatpush1.bf16.msra.mxu0 %v346
  %432 = vmatprep.subr.bf16.mxu0 0
  %433 = vmatpush1.bf16.msra.mxu0 %v347
  %434 = vmatprep.mubr.bf16.mxu0 %v206
  %435 = vmatmul.mubr.bf16.gmra.mrb[0].mxu0 %v205
  %v436 = vpop.f32.mrb[0].mxu0
  %v437 = vadd.f32 %v98, %v436
  %v438 = vpop.f32.mrb[0].mxu0
  %v439 = vpop.f32.mrb[0].mxu0
  %v440 = vadd.f32 %v98, %v439
  %v441 = vpop.f32.mrb[0].mxu0
  %442 = vmatprep.mubr.bf16.mxu0 %v209
  %443 = vmatmul.mubr.bf16.gmra.mrb[0].mxu0 %v208
  %v444 = vpop.f32.mrb[0].mxu0
  %v445 = vadd.f32 %v98, %v444
  %v446 = vpop.f32.mrb[0].mxu0
  %v447 = vpop.f32.mrb[0].mxu0
  %v448 = vadd.f32 %v98, %v447
  %v449 = vpop.f32.mrb[0].mxu0
  %450 = vmatprep.mubr.bf16.mxu0 %v212
  %451 = vmatmul.mubr.bf16.gmra.mrb[0].mxu0 %v211
  %v452 = vpop.f32.mrb[0].mxu0
  %v453 = vadd.f32 %v98, %v452
  %v454 = vpop.f32.mrb[0].mxu0
  %v455 = vpop.f32.mrb[0].mxu0
  %v456 = vadd.f32 %v98, %v455
  %v457 = vpop.f32.mrb[0].mxu0
  %458 = vmatprep.mubr.bf16.mxu0 %v215
  %459 = vmatmul.mubr.bf16.gmra.mrb[0].mxu0 %v214
  %v460 = vpop.f32.mrb[0].mxu0
  %v461 = vadd.f32 %v98, %v460
  %v462 = vpop.f32.mrb[0].mxu0
  %v463 = vpop.f32.mrb[0].mxu0
  %v464 = vadd.f32 %v98, %v463
  %v465 = vpop.f32.mrb[0].mxu0
  %466 = vmatprep.mubr.bf16.mxu0 %v218
  %467 = vmatmul.mubr.bf16.gmra.mrb[0].mxu0 %v217
  %v468 = vpop.f32.mrb[0].mxu0
  %v469 = vadd.f32 %v98, %v468
  %v470 = vpop.f32.mrb[0].mxu0
  %v471 = vpop.f32.mrb[0].mxu0
  %v472 = vadd.f32 %v98, %v471
  %v473 = vpop.f32.mrb[0].mxu0
  %474 = vmatprep.mubr.bf16.mxu0 %v221
  %475 = vmatmul.mubr.bf16.gmra.mrb[0].mxu0 %v220
  %v476 = vpop.f32.mrb[0].mxu0
  %v477 = vadd.f32 %v98, %v476
  %v478 = vpop.f32.mrb[0].mxu0
  %v479 = vpop.f32.mrb[0].mxu0
  %v480 = vadd.f32 %v98, %v479
  %v481 = vpop.f32.mrb[0].mxu0
  %482 = vmatprep.mubr.bf16.mxu0 %v224
  %483 = vmatmul.mubr.bf16.gmra.mrb[0].mxu0 %v223
  %v484 = vpop.f32.mrb[0].mxu0
  %v485 = vadd.f32 %v98, %v484
  %v486 = vpop.f32.mrb[0].mxu0
  %v487 = vpop.f32.mrb[0].mxu0
  %v488 = vadd.f32 %v98, %v487
  %v489 = vpop.f32.mrb[0].mxu0
  %490 = vmatprep.mubr.bf16.mxu0 %v227
  %491 = vmatmul.mubr.bf16.gmra.mrb[0].mxu0 %v226
  %v492 = vpop.f32.mrb[0].mxu0
  %v493 = vadd.f32 %v98, %v492
  %v494 = vpop.f32.mrb[0].mxu0
  %v495 = vpop.f32.mrb[0].mxu0
  %v496 = vadd.f32 %v98, %v495
  %v497 = vpop.f32.mrb[0].mxu0
  %498 = vmatprep.mubr.bf16.mxu0 %v230
  %499 = vmatmul.mubr.bf16.gmra.mrb[0].mxu0 %v229
  %v500 = vpop.f32.mrb[0].mxu0
  %v501 = vadd.f32 %v98, %v500
  %v502 = vpop.f32.mrb[0].mxu0
  %v503 = vpop.f32.mrb[0].mxu0
  %v504 = vadd.f32 %v98, %v503
  %v505 = vpop.f32.mrb[0].mxu0
  %506 = vmatprep.mubr.bf16.mxu0 %v233
  %507 = vmatmul.mubr.bf16.gmra.mrb[0].mxu0 %v232
  %v508 = vpop.f32.mrb[0].mxu0
  %v509 = vadd.f32 %v98, %v508
  %v510 = vpop.f32.mrb[0].mxu0
  %v511 = vpop.f32.mrb[0].mxu0
  %v512 = vadd.f32 %v98, %v511
  %v513 = vpop.f32.mrb[0].mxu0
  %514 = vmatprep.mubr.bf16.mxu0 %v236
  %515 = vmatmul.mubr.bf16.gmra.mrb[0].mxu0 %v235
  %v516 = vpop.f32.mrb[0].mxu0
  %v517 = vadd.f32 %v98, %v516
  %v518 = vpop.f32.mrb[0].mxu0
  %v519 = vpop.f32.mrb[0].mxu0
  %v520 = vpop.f32.mrb[0].mxu0
  %521 = vdwg.mxu0
  %522 = vmatprep.subr.bf16.mxu0 0
  %523 = vmatpush1.bf16.msra.mxu0 %v348
  %524 = vmatprep.subr.bf16.mxu0 0
  %525 = vmatpush1.bf16.msra.mxu0 %v349
  %526 = vmatprep.subr.bf16.mxu0 0
  %527 = vmatpush1.bf16.msra.mxu0 0
  %528 = vmatprep.subr.bf16.mxu0 0
  %529 = vmatpush1.bf16.msra.mxu0 0
  %530 = vmatprep.subr.bf16.mxu0 0
  %531 = vmatpush1.bf16.msra.mxu0 0
  %532 = vmatprep.subr.bf16.mxu0 0
  %533 = vmatpush1.bf16.msra.mxu0 0
  %534 = vmatprep.subr.bf16.mxu0 0
  %535 = vmatpush1.bf16.msra.mxu0 0
  %536 = vmatprep.subr.bf16.mxu0 0
  %537 = vmatpush1.bf16.msra.mxu0 0
  %538 = vmatprep.subr.bf16.mxu0 0
  %539 = vmatpush1.bf16.msra.mxu0 0
  %540 = vmatprep.subr.bf16.mxu0 0
  %541 = vmatpush1.bf16.msra.mxu0 0
  %542 = vmatprep.subr.bf16.mxu0 0
  %543 = vmatpush1.bf16.msra.mxu0 0
  %544 = vmatprep.subr.bf16.mxu0 0
  %545 = vmatpush1.bf16.msra.mxu0 0
  %546 = vmatprep.subr.bf16.mxu0 0
  %547 = vmatpush1.bf16.msra.mxu0 0
  %548 = vmatprep.subr.bf16.mxu0 0
  %549 = vmatpush1.bf16.msra.mxu0 0
  %550 = vmatprep.subr.bf16.mxu0 0
  %551 = vmatpush1.bf16.msra.mxu0 0
  %552 = vmatprep.subr.bf16.mxu0 0
  %553 = vmatpush1.bf16.msra.mxu0 0
  %554 = vmatprep.mubr.bf16.mxu0 0
  %555 = vmatmul.mubr.bf16.gmra.mrb[0].mxu0 %v370
  %v556 = vpop.f32.mrb[0].mxu0
  %v557 = vadd.f32 %v437, %v556
  %v558 = vpop.f32.mrb[0].mxu0
  %v559 = vpop.f32.mrb[0].mxu0
  %v560 = vadd.f32 %v440, %v559
  %v561 = vpop.f32.mrb[0].mxu0
  %562 = vmatprep.mubr.bf16.mxu0 0
  %563 = vmatmul.mubr.bf16.gmra.mrb[0].mxu0 %v373
  %v564 = vpop.f32.mrb[0].mxu0
  %v565 = vadd.f32 %v445, %v564
  %v566 = vpop.f32.mrb[0].mxu0
  %v567 = vpop.f32.mrb[0].mxu0
  %v568 = vadd.f32 %v448, %v567
  %v569 = vpop.f32.mrb[0].mxu0
  %570 = vmatprep.mubr.bf16.mxu0 0
  %571 = vmatmul.mubr.bf16.gmra.mrb[0].mxu0 %v376
  %v572 = vpop.f32.mrb[0].mxu0
  %v573 = vadd.f32 %v453, %v572
  %v574 = vpop.f32.mrb[0].mxu0
  %v575 = vpop.f32.mrb[0].mxu0
  %v576 = vadd.f32 %v456, %v575
  %v577 = vpop.f32.mrb[0].mxu0
  %578 = vmatprep.mubr.bf16.mxu0 0
  %579 = vmatmul.mubr.bf16.gmra.mrb[0].mxu0 %v379
  %v580 = vpop.f32.mrb[0].mxu0
  %v581 = vadd.f32 %v461, %v580
  %v582 = vpop.f32.mrb[0].mxu0
  %v583 = vpop.f32.mrb[0].mxu0
  %v584 = vadd.f32 %v464, %v583
  %v585 = vpop.f32.mrb[0].mxu0
  %586 = vmatprep.mubr.bf16.mxu0 0
  %587 = vmatmul.mubr.bf16.gmra.mrb[0].mxu0 %v382
  %v588 = vpop.f32.mrb[0].mxu0
  %v589 = vadd.f32 %v469, %v588
  %v590 = vpop.f32.mrb[0].mxu0
  %v591 = vpop.f32.mrb[0].mxu0
  %v592 = vadd.f32 %v472, %v591
  %v593 = vpop.f32.mrb[0].mxu0
  %594 = vmatprep.mubr.bf16.mxu0 0
  %595 = vmatmul.mubr.bf16.gmra.mrb[0].mxu0 %v385
  %v596 = vpop.f32.mrb[0].mxu0
  %v597 = vadd.f32 %v477, %v596
  %v598 = vpop.f32.mrb[0].mxu0
  %v599 = vpop.f32.mrb[0].mxu0
  %v600 = vadd.f32 %v480, %v599
  %v601 = vpop.f32.mrb[0].mxu0
  %602 = vmatprep.mubr.bf16.mxu0 0
  %603 = vmatmul.mubr.bf16.gmra.mrb[0].mxu0 %v388
  %v604 = vpop.f32.mrb[0].mxu0
  %v605 = vadd.f32 %v485, %v604
  %v606 = vpop.f32.mrb[0].mxu0
  %v607 = vpop.f32.mrb[0].mxu0
  %v608 = vadd.f32 %v488, %v607
  %v609 = vpop.f32.mrb[0].mxu0
  %610 = vmatprep.mubr.bf16.mxu0 0
  %611 = vmatmul.mubr.bf16.gmra.mrb[0].mxu0 %v391
  %v612 = vpop.f32.mrb[0].mxu0
  %v613 = vadd.f32 %v493, %v612
  %v614 = vpop.f32.mrb[0].mxu0
  %v615 = vpop.f32.mrb[0].mxu0
  %v616 = vadd.f32 %v496, %v615
  %v617 = vpop.f32.mrb[0].mxu0
  %618 = vmatprep.mubr.bf16.mxu0 0
  %619 = vmatmul.mubr.bf16.gmra.mrb[0].mxu0 %v394
  %v620 = vpop.f32.mrb[0].mxu0
  %v621 = vadd.f32 %v501, %v620
  %v622 = vpop.f32.mrb[0].mxu0
  %v623 = vpop.f32.mrb[0].mxu0
  %v624 = vadd.f32 %v504, %v623
  %v625 = vpop.f32.mrb[0].mxu0
  %626 = vmatprep.mubr.bf16.mxu0 0
  %627 = vmatmul.mubr.bf16.gmra.mrb[0].mxu0 %v397
  %v628 = vpop.f32.mrb[0].mxu0
  %v629 = vadd.f32 %v509, %v628
  %v630 = vpop.f32.mrb[0].mxu0
  %v631 = vpop.f32.mrb[0].mxu0
  %v632 = vadd.f32 %v512, %v631
  %v633 = vpop.f32.mrb[0].mxu0
  %634 = vmatprep.mubr.bf16.mxu0 0
  %635 = vmatmul.mubr.bf16.gmra.mrb[0].mxu0 %v400
  %v636 = vpop.f32.mrb[0].mxu0
  %v637 = vadd.f32 %v517, %v636
  %v638 = vpop.f32.mrb[0].mxu0
  %v639 = vpop.f32.mrb[0].mxu0
  %v640 = vpop.f32.mrb[0].mxu0
  %641 = vdwg.mxu0
  %v642 = vmax.f32 %v557, 0.0
  %v643 = vmax.f32 %v560, 0.0
  %v644 = vmax.f32 %v565, 0.0
  %v645 = vmax.f32 %v568, 0.0
  %v646 = vmax.f32 %v573, 0.0
  %v647 = vmax.f32 %v576, 0.0
  %v648 = vmax.f32 %v581, 0.0
  %v649 = vmax.f32 %v584, 0.0
  %v650 = vmax.f32 %v589, 0.0
  %v651 = vmax.f32 %v592, 0.0
  %v652 = vmax.f32 %v597, 0.0
  %v653 = vmax.f32 %v600, 0.0
  %v654 = vmax.f32 %v605, 0.0
  %v655 = vmax.f32 %v608, 0.0
  %v656 = vmax.f32 %v613, 0.0
  %v657 = vmax.f32 %v616, 0.0
  %v658 = vmax.f32 %v621, 0.0
  %v659 = vmax.f32 %v624, 0.0
  %v660 = vmax.f32 %v629, 0.0
  %v661 = vmax.f32 %v632, 0.0
  %v662 = vmax.f32 %v637, 0.0
  %663 = vst.msk [vmem:[%s3] sm:$0xff] %vm368, %v642
  %664 = vst.msk [vmem:[%s3 + $0x8] sm:$0xff] %vm368, %v643
  %665 = vst.msk [vmem:[%s3 + $0x10] sm:$0xff] %vm368, %v644
  %666 = vst.msk [vmem:[%s3 + $0x18] sm:$0xff] %vm368, %v645
  %667 = vst.msk [vmem:[%s3 + $0x20] sm:$0xff] %vm368, %v646
  %668 = vst.msk [vmem:[%s3 + $0x28] sm:$0xff] %vm368, %v647
  %669 = vst.msk [vmem:[%s3 + $0x30] sm:$0xff] %vm368, %v648
  %670 = vst.msk [vmem:[%s3 + $0x38] sm:$0xff] %vm368, %v649
  %671 = vst.msk [vmem:[%s3 + $0x40] sm:$0xff] %vm368, %v650
  %672 = vst.msk [vmem:[%s3 + $0x48] sm:$0xff] %vm368, %v651
  %673 = vst.msk [vmem:[%s3 + $0x50] sm:$0xff] %vm368, %v652
  %674 = vst.msk [vmem:[%s3 + $0x58] sm:$0xff] %vm368, %v653
  %675 = vst.msk [vmem:[%s3 + $0x60] sm:$0xff] %vm368, %v654
  %676 = vst.msk [vmem:[%s3 + $0x68] sm:$0xff] %vm368, %v655
  %677 = vst.msk [vmem:[%s3 + $0x70] sm:$0xff] %vm368, %v656
  %678 = vst.msk [vmem:[%s3 + $0x78] sm:$0xff] %vm368, %v657
  %679 = vst.msk [vmem:[%s3 + $0x80] sm:$0xff] %vm368, %v658
  %680 = vst.msk [vmem:[%s3 + $0x88] sm:$0xff] %vm368, %v659
  %681 = vst.msk [vmem:[%s3 + $0x90] sm:$0xff] %vm368, %v660
  %682 = vst.msk [vmem:[%s3 + $0x98] sm:$0xff] %vm368, %v661
  %683 = vst.msk [vmem:[%s3 + $0xa0] sm:$0xff] %vm368, %v662
  // Predicated region
  $region14: #{solo_v1_forward.22} parent=0 // pred_check
    _
  $region15: #{solo_v1_forward.22} parent=0 // pred_check_branch
    %685 = sbr.rel (0) target = $region17
  $region16: #{solo_v1_forward.22} parent=0 // pred_region
    _
  $region17: #{solo_v1_forward.22} parent=0 // pred_fallthru
    _
  // Predicated region
  $region18: #{solo_v1_forward.22} parent=0 // pred_check
    _
  $region19: #{solo_v1_forward.22} parent=0 // pred_check_branch
    %687 = sbr.rel (0) target = $region21
  $region20: #{solo_v1_forward.22} parent=0 // pred_region
    _
  $region21: #{solo_v1_forward.22} parent=0 // pred_fallthru
    _

// kernel: solo_v1_forward.23
$region0: #{solo_v1_forward.23}
  #allocation0 [shape = 'u32[]', space=smem, size = 0x4, offset = 0x4, fixed_abs, tag = 'smem constant byte address 0x4 - core index']
  #allocation1 [shape = 'u32[144,128]{1,0:T(1,128)}', space=vmem, size = 0x12000, scoped, tag = 'internal scratch']
  %s0 = inlined_call_operand.vmem [shape: bf16[168,288], index: 0, kind: input, shape index: {}]
  %s1 = inlined_call_operand.vmem [shape: bf16[288,4], index: 1, kind: input, shape index: {}]
  %s2 = inlined_call_operand.vmem [shape: f32[1,4], index: 2, kind: input, shape index: {}]
  %s3 = inlined_call_operand.vmem [shape: f32[168,4], index: 3, kind: output, shape index: {}]
  %s4 = sld [smem:[#allocation0]]
  $region22: #{solo_v1_forward.23} parent=0
    _
  %s6 = ssub.s32 1, %s4
  %s7 = scalar_select 0, %s6, %s4
  // Predicated region
  $region2: #{solo_v1_forward.23} parent=0 // pred_check
    _
  $region3: #{solo_v1_forward.23} parent=0 // pred_check_branch
    %9 = sbr.rel (0) target = $region5
  $region4: #{solo_v1_forward.23} parent=0 // pred_region
    _
  $region5: #{solo_v1_forward.23} parent=0 // pred_fallthru
    _
  // Predicated region
  $region6: #{solo_v1_forward.23} parent=0 // pred_check
    _
  $region7: #{solo_v1_forward.23} parent=0 // pred_check_branch
    %11 = sbr.rel (0) target = $region9
  $region8: #{solo_v1_forward.23} parent=0 // pred_region
    _
  $region9: #{solo_v1_forward.23} parent=0 // pred_fallthru
    _
  // Predicated region
  $region10: #{solo_v1_forward.23} parent=0 // pred_check
    _
  $region11: #{solo_v1_forward.23} parent=0 // pred_check_branch
    %13 = sbr.rel (0) target = $region13
  $region12: #{solo_v1_forward.23} parent=0 // pred_region
    _
  $region13: #{solo_v1_forward.23} parent=0 // pred_fallthru
    _
  %v15 = vld [vmem:[%s0] sm:$0xff]
  %v16 = vld [vmem:[%s0 + $0x8] sm:$0xf]
  %v17 = vld [vmem:[%s0 + $0xc] sm:$0xff]
  %v18 = vld [vmem:[%s0 + $0x14] sm:$0xf]
  %v19 = vld [vmem:[%s0 + $0x18] sm:$0xff]
  %v20 = vld [vmem:[%s0 + $0x20] sm:$0xf]
  %v21 = vld [vmem:[%s0 + $0x24] sm:$0xff]
  %v22 = vld [vmem:[%s0 + $0x2c] sm:$0xf]
  %v23 = vld [vmem:[%s0 + $0x30] sm:$0xff]
  %v24 = vld [vmem:[%s0 + $0x38] sm:$0xf]
  %v25 = vld [vmem:[%s0 + $0x3c] sm:$0xff]
  %v26 = vld [vmem:[%s0 + $0x44] sm:$0xf]
  %v27 = vld [vmem:[%s0 + $0x48] sm:$0xff]
  %v28 = vld [vmem:[%s0 + $0x50] sm:$0xf]
  %v29 = vld [vmem:[%s0 + $0x54] sm:$0xff]
  %v30 = vld [vmem:[%s0 + $0x5c] sm:$0xf]
  %v31 = vld [vmem:[%s0 + $0x60] sm:$0xff]
  %v32 = vld [vmem:[%s0 + $0x68] sm:$0xf]
  %v33 = vld [vmem:[%s0 + $0x6c] sm:$0xff]
  %v34 = vld [vmem:[%s0 + $0x74] sm:$0xf]
  %v35 = vld [vmem:[%s0 + $0x78] sm:$0xff]
  %v36 = vld [vmem:[%s0 + $0x80] sm:$0xf]
  %v37 = vld [vmem:[%s0 + $0x84] sm:$0xff]
  %v38 = vld [vmem:[%s0 + $0x8c] sm:$0xf]
  %v39 = vld [vmem:[%s0 + $0x90] sm:$0xff]
  %v40 = vld [vmem:[%s0 + $0x98] sm:$0xf]
  %v41 = vld [vmem:[%s0 + $0x9c] sm:$0xff]
  %v42 = vld [vmem:[%s0 + $0xa4] sm:$0xf]
  %v43 = vld [vmem:[%s0 + $0xa8] sm:$0xff]
  %v44 = vld [vmem:[%s0 + $0xb0] sm:$0xf]
  %v45 = vld [vmem:[%s0 + $0xb4] sm:$0xff]
  %v46 = vld [vmem:[%s0 + $0xbc] sm:$0xf]
  %v47 = vld [vmem:[%s0 + $0xc0] sm:$0xff]
  %v48 = vld [vmem:[%s0 + $0xc8] sm:$0xf]
  %v49 = vld [vmem:[%s0 + $0xcc] sm:$0xff]
  %v50 = vld [vmem:[%s0 + $0xd4] sm:$0xf]
  %v51 = vld [vmem:[%s0 + $0xd8] sm:$0xff]
  %v52 = vld [vmem:[%s0 + $0xe0] sm:$0xf]
  %v53 = vld [vmem:[%s0 + $0xe4] sm:$0xff]
  %v54 = vld [vmem:[%s0 + $0xec] sm:$0xf]
  %v55 = vld [vmem:[%s0 + $0xf0] sm:$0xff]
  %v56 = vld [vmem:[%s0 + $0xf8] sm:$0xf]
  %v57 = vld [vmem:[%s1] sm:$0xf]
  %v58 = vld [vmem:[%s1 + $0x4] sm:$0xf]
  %v59 = vld [vmem:[%s1 + $0x8] sm:$0xf]
  %v60 = vld [vmem:[%s1 + $0xc] sm:$0xf]
  %v61 = vld [vmem:[%s1 + $0x10] sm:$0xf]
  %v62 = vld [vmem:[%s1 + $0x14] sm:$0xf]
  %v63 = vld [vmem:[%s1 + $0x18] sm:$0xf]
  %v64 = vld [vmem:[%s1 + $0x1c] sm:$0xf]
  %v65 = vld [vmem:[%s1 + $0x20] sm:$0xf]
  %v66 = vld [vmem:[%s1 + $0x24] sm:$0xf]
  %v67 = vld [vmem:[%s1 + $0x28] sm:$0xf]
  %v68 = vld [vmem:[%s1 + $0x2c] sm:$0xf]
  %v69 = vld [vmem:[%s1 + $0x30] sm:$0xf]
  %v70 = vld [vmem:[%s1 + $0x34] sm:$0xf]
  %v71 = vld [vmem:[%s1 + $0x38] sm:$0xf]
  %v72 = vld [vmem:[%s1 + $0x3c] sm:$0xf]
  %v73 = vld [vmem:[%s1 + $0x40] sm:$0xf]
  %v74 = vld [vmem:[%s1 + $0x44] sm:$0xf]
  %v75 = vld [vmem:[%s1 + $0x48] sm:$0xf]
  %v76 = vld [vmem:[%s1 + $0x4c] sm:$0xf]
  %v77 = vld [vmem:[%s1 + $0x50] sm:$0xf]
  %v78 = vld [vmem:[%s1 + $0x54] sm:$0xf]
  %v79 = vld [vmem:[%s1 + $0x58] sm:$0xf]
  %v80 = vld [vmem:[%s1 + $0x5c] sm:$0xf]
  %v81 = vld [vmem:[%s1 + $0x60] sm:$0xf]
  %v82 = vld [vmem:[%s1 + $0x64] sm:$0xf]
  %v83 = vld [vmem:[%s1 + $0x68] sm:$0xf]
  %v84 = vld [vmem:[%s1 + $0x6c] sm:$0xf]
  %v85 = vld [vmem:[%s1 + $0x70] sm:$0xf]
  %v86 = vld [vmem:[%s1 + $0x74] sm:$0xf]
  %v87 = vld [vmem:[%s1 + $0x78] sm:$0xf]
  %v88 = vld [vmem:[%s1 + $0x7c] sm:$0xf]
  %v89 = vld [vmem:[%s1 + $0x80] sm:$0xf]
  %v90 = vld [vmem:[%s1 + $0x84] sm:$0xf]
  %v91 = vld [vmem:[%s1 + $0x88] sm:$0xf]
  %v92 = vld [vmem:[%s1 + $0x8c] sm:$0xf]
  %v93 = vld [vmem:[%s2] sm:$0x1]
  %v95 = vlaneseq
  %v96 = vshrl.u32 %v95, 7
  %v97 = vsub.s32 0, %v96
  %v98 = vrot.slane %v93, %v97
  %v142 = vunpack.c.l.b16 %v15
  %v143 = vunpack.c.h.b16 %v15
  %v144 = vunpack.c.l.b16 %v16
  %v145 = vunpack.c.l.b16 %v17
  %v146 = vunpack.c.h.b16 %v17
  %v147 = vunpack.c.l.b16 %v18
  %v148 = vunpack.c.l.b16 %v19
  %v149 = vunpack.c.h.b16 %v19
  %v150 = vunpack.c.l.b16 %v20
  %v151 = vunpack.c.l.b16 %v21
  %v152 = vunpack.c.h.b16 %v21
  %v153 = vunpack.c.l.b16 %v22
  %v154 = vunpack.c.l.b16 %v23
  %v155 = vunpack.c.h.b16 %v23
  %v156 = vunpack.c.l.b16 %v24
  %v157 = vunpack.c.l.b16 %v25
  %v158 = vunpack.c.h.b16 %v25
  %v159 = vunpack.c.l.b16 %v26
  %v160 = vunpack.c.l.b16 %v27
  %v161 = vunpack.c.h.b16 %v27
  %v162 = vunpack.c.l.b16 %v28
  %v163 = vunpack.c.l.b16 %v29
  %v164 = vunpack.c.h.b16 %v29
  %v165 = vunpack.c.l.b16 %v30
  %v166 = vunpack.c.l.b16 %v31
  %v167 = vunpack.c.h.b16 %v31
  %v168 = vunpack.c.l.b16 %v32
  %v169 = vunpack.c.l.b16 %v33
  %v170 = vunpack.c.h.b16 %v33
  %v171 = vunpack.c.l.b16 %v34
  %v172 = vunpack.c.l.b16 %v35
  %v173 = vunpack.c.h.b16 %v35
  %v174 = vunpack.c.l.b16 %v36
  %v175 = vunpack.c.l.b16 %v37
  %v176 = vunpack.c.h.b16 %v37
  %v177 = vunpack.c.l.b16 %v38
  %v178 = vunpack.c.l.b16 %v39
  %v179 = vunpack.c.h.b16 %v39
  %v180 = vunpack.c.l.b16 %v40
  %v181 = vunpack.c.l.b16 %v41
  %v182 = vunpack.c.h.b16 %v41
  %v183 = vunpack.c.l.b16 %v42
  %v184 = vunpack.c.l.b16 %v43
  %v185 = vunpack.c.h.b16 %v43
  %v186 = vunpack.c.l.b16 %v44
  %v187 = vunpack.c.l.b16 %v45
  %v188 = vunpack.c.h.b16 %v45
  %v189 = vunpack.c.l.b16 %v46
  %v190 = vunpack.c.l.b16 %v47
  %v191 = vunpack.c.h.b16 %v47
  %v192 = vunpack.c.l.b16 %v48
  %v193 = vunpack.c.l.b16 %v49
  %v194 = vunpack.c.h.b16 %v49
  %v195 = vunpack.c.l.b16 %v50
  %v196 = vunpack.c.l.b16 %v51
  %v197 = vunpack.c.h.b16 %v51
  %v198 = vunpack.c.l.b16 %v52
  %v199 = vunpack.c.l.b16 %v53
  %v200 = vunpack.c.h.b16 %v53
  %v201 = vunpack.c.l.b16 %v54
  %v202 = vunpack.c.l.b16 %v55
  %v203 = vunpack.c.h.b16 %v55
  %v204 = vunpack.c.l.b16 %v56
  %v205 = vpack.c.b16 %v145, %v142
  %v206 = vpack.c.b16 %v146, %v143
  %v207 = vpack.c.b16 %v147, %v144
  %v208 = vpack.c.b16 %v151, %v148
  %v209 = vpack.c.b16 %v152, %v149
  %v210 = vpack.c.b16 %v153, %v150
  %v211 = vpack.c.b16 %v157, %v154
  %v212 = vpack.c.b16 %v158, %v155
  %v213 = vpack.c.b16 %v159, %v156
  %v214 = vpack.c.b16 %v163, %v160
  %v215 = vpack.c.b16 %v164, %v161
  %v216 = vpack.c.b16 %v165, %v162
  %v217 = vpack.c.b16 %v169, %v166
  %v218 = vpack.c.b16 %v170, %v167
  %v219 = vpack.c.b16 %v171, %v168
  %v220 = vpack.c.b16 %v175, %v172
  %v221 = vpack.c.b16 %v176, %v173
  %v222 = vpack.c.b16 %v177, %v174
  %v223 = vpack.c.b16 %v181, %v178
  %v224 = vpack.c.b16 %v182, %v179
  %v225 = vpack.c.b16 %v183, %v180
  %v226 = vpack.c.b16 %v187, %v184
  %v227 = vpack.c.b16 %v188, %v185
  %v228 = vpack.c.b16 %v189, %v186
  %v229 = vpack.c.b16 %v193, %v190
  %v230 = vpack.c.b16 %v194, %v191
  %v231 = vpack.c.b16 %v195, %v192
  %v232 = vpack.c.b16 %v199, %v196
  %v233 = vpack.c.b16 %v200, %v197
  %v234 = vpack.c.b16 %v201, %v198
  %v235 = vpack.c.b16 %v202, %v202
  %v236 = vpack.c.b16 %v203, %v203
  %v237 = vpack.c.b16 %v204, %v204
  %v296 = vunpack.c.l.b16 %v57
  %v297 = vunpack.c.l.b16 %v58
  %v298 = vunpack.c.l.b16 %v59
  %v299 = vunpack.c.l.b16 %v60
  %v300 = vunpack.c.l.b16 %v61
  %v301 = vunpack.c.l.b16 %v62
  %v302 = vunpack.c.l.b16 %v63
  %v303 = vunpack.c.l.b16 %v64
  %v304 = vunpack.c.l.b16 %v65
  %v305 = vunpack.c.l.b16 %v66
  %v306 = vunpack.c.l.b16 %v67
  %v307 = vunpack.c.l.b16 %v68
  %v308 = vunpack.c.l.b16 %v69
  %v309 = vunpack.c.l.b16 %v70
  %v310 = vunpack.c.l.b16 %v71
  %v311 = vunpack.c.l.b16 %v72
  %v312 = vunpack.c.l.b16 %v73
  %v313 = vunpack.c.l.b16 %v74
  %v314 = vunpack.c.l.b16 %v75
  %v315 = vunpack.c.l.b16 %v76
  %v316 = vunpack.c.l.b16 %v77
  %v317 = vunpack.c.l.b16 %v78
  %v318 = vunpack.c.l.b16 %v79
  %v319 = vunpack.c.l.b16 %v80
  %v320 = vunpack.c.l.b16 %v81
  %v321 = vunpack.c.l.b16 %v82
  %v322 = vunpack.c.l.b16 %v83
  %v323 = vunpack.c.l.b16 %v84
  %v324 = vunpack.c.l.b16 %v85
  %v325 = vunpack.c.l.b16 %v86
  %v326 = vunpack.c.l.b16 %v87
  %v327 = vunpack.c.l.b16 %v88
  %v328 = vunpack.c.l.b16 %v89
  %v329 = vunpack.c.l.b16 %v90
  %v330 = vunpack.c.l.b16 %v91
  %v331 = vunpack.c.l.b16 %v92
  %v332 = vpack.c.b16 %v297, %v296
  %v333 = vpack.c.b16 %v299, %v298
  %v334 = vpack.c.b16 %v301, %v300
  %v335 = vpack.c.b16 %v303, %v302
  %v336 = vpack.c.b16 %v305, %v304
  %v337 = vpack.c.b16 %v307, %v306
  %v338 = vpack.c.b16 %v309, %v308
  %v339 = vpack.c.b16 %v311, %v310
  %v340 = vpack.c.b16 %v313, %v312
  %v341 = vpack.c.b16 %v315, %v314
  %v342 = vpack.c.b16 %v317, %v316
  %v343 = vpack.c.b16 %v319, %v318
  %v344 = vpack.c.b16 %v321, %v320
  %v345 = vpack.c.b16 %v323, %v322
  %v346 = vpack.c.b16 %v325, %v324
  %v347 = vpack.c.b16 %v327, %v326
  %v348 = vpack.c.b16 %v329, %v328
  %v349 = vpack.c.b16 %v331, %v330
  %vm368 = vcmask 261120
  %v370 = vsel %vm368, %v207, 0
  %v373 = vsel %vm368, %v210, 0
  %v376 = vsel %vm368, %v213, 0
  %v379 = vsel %vm368, %v216, 0
  %v382 = vsel %vm368, %v219, 0
  %v385 = vsel %vm368, %v222, 0
  %v388 = vsel %vm368, %v225, 0
  %v391 = vsel %vm368, %v228, 0
  %v394 = vsel %vm368, %v231, 0
  %v397 = vsel %vm368, %v234, 0
  %v400 = vsel %vm368, %v237, 0
  %402 = vmatprep.subr.bf16.mxu0 0
  %403 = vmatpush1.bf16.msra.mxu0 %v332
  %404 = vmatprep.subr.bf16.mxu0 0
  %405 = vmatpush1.bf16.msra.mxu0 %v333
  %406 = vmatprep.subr.bf16.mxu0 0
  %407 = vmatpush1.bf16.msra.mxu0 %v334
  %408 = vmatprep.subr.bf16.mxu0 0
  %409 = vmatpush1.bf16.msra.mxu0 %v335
  %410 = vmatprep.subr.bf16.mxu0 0
  %411 = vmatpush1.bf16.msra.mxu0 %v336
  %412 = vmatprep.subr.bf16.mxu0 0
  %413 = vmatpush1.bf16.msra.mxu0 %v337
  %414 = vmatprep.subr.bf16.mxu0 0
  %415 = vmatpush1.bf16.msra.mxu0 %v338
  %416 = vmatprep.subr.bf16.mxu0 0
  %417 = vmatpush1.bf16.msra.mxu0 %v339
  %418 = vmatprep.subr.bf16.mxu0 0
  %419 = vmatpush1.bf16.msra.mxu0 %v340
  %420 = vmatprep.subr.bf16.mxu0 0
  %421 = vmatpush1.bf16.msra.mxu0 %v341
  %422 = vmatprep.subr.bf16.mxu0 0
  %423 = vmatpush1.bf16.msra.mxu0 %v342
  %424 = vmatprep.subr.bf16.mxu0 0
  %425 = vmatpush1.bf16.msra.mxu0 %v343
  %426 = vmatprep.subr.bf16.mxu0 0
  %427 = vmatpush1.bf16.msra.mxu0 %v344
  %428 = vmatprep.subr.bf16.mxu0 0
  %429 = vmatpush1.bf16.msra.mxu0 %v345
  %430 = vmatprep.subr.bf16.mxu0 0
  %431 = vmatpush1.bf16.msra.mxu0 %v346
  %432 = vmatprep.subr.bf16.mxu0 0
  %433 = vmatpush1.bf16.msra.mxu0 %v347
  %434 = vmatprep.mubr.bf16.mxu0 %v206
  %435 = vmatmul.mubr.bf16.gmra.mrb[0].mxu0 %v205
  %v436 = vpop.f32.mrb[0].mxu0
  %v437 = vadd.f32 %v98, %v436
  %v438 = vpop.f32.mrb[0].mxu0
  %v439 = vpop.f32.mrb[0].mxu0
  %v440 = vadd.f32 %v98, %v439
  %v441 = vpop.f32.mrb[0].mxu0
  %442 = vmatprep.mubr.bf16.mxu0 %v209
  %443 = vmatmul.mubr.bf16.gmra.mrb[0].mxu0 %v208
  %v444 = vpop.f32.mrb[0].mxu0
  %v445 = vadd.f32 %v98, %v444
  %v446 = vpop.f32.mrb[0].mxu0
  %v447 = vpop.f32.mrb[0].mxu0
  %v448 = vadd.f32 %v98, %v447
  %v449 = vpop.f32.mrb[0].mxu0
  %450 = vmatprep.mubr.bf16.mxu0 %v212
  %451 = vmatmul.mubr.bf16.gmra.mrb[0].mxu0 %v211
  %v452 = vpop.f32.mrb[0].mxu0
  %v453 = vadd.f32 %v98, %v452
  %v454 = vpop.f32.mrb[0].mxu0
  %v455 = vpop.f32.mrb[0].mxu0
  %v456 = vadd.f32 %v98, %v455
  %v457 = vpop.f32.mrb[0].mxu0
  %458 = vmatprep.mubr.bf16.mxu0 %v215
  %459 = vmatmul.mubr.bf16.gmra.mrb[0].mxu0 %v214
  %v460 = vpop.f32.mrb[0].mxu0
  %v461 = vadd.f32 %v98, %v460
  %v462 = vpop.f32.mrb[0].mxu0
  %v463 = vpop.f32.mrb[0].mxu0
  %v464 = vadd.f32 %v98, %v463
  %v465 = vpop.f32.mrb[0].mxu0
  %466 = vmatprep.mubr.bf16.mxu0 %v218
  %467 = vmatmul.mubr.bf16.gmra.mrb[0].mxu0 %v217
  %v468 = vpop.f32.mrb[0].mxu0
  %v469 = vadd.f32 %v98, %v468
  %v470 = vpop.f32.mrb[0].mxu0
  %v471 = vpop.f32.mrb[0].mxu0
  %v472 = vadd.f32 %v98, %v471
  %v473 = vpop.f32.mrb[0].mxu0
  %474 = vmatprep.mubr.bf16.mxu0 %v221
  %475 = vmatmul.mubr.bf16.gmra.mrb[0].mxu0 %v220
  %v476 = vpop.f32.mrb[0].mxu0
  %v477 = vadd.f32 %v98, %v476
  %v478 = vpop.f32.mrb[0].mxu0
  %v479 = vpop.f32.mrb[0].mxu0
  %v480 = vadd.f32 %v98, %v479
  %v481 = vpop.f32.mrb[0].mxu0
  %482 = vmatprep.mubr.bf16.mxu0 %v224
  %483 = vmatmul.mubr.bf16.gmra.mrb[0].mxu0 %v223
  %v484 = vpop.f32.mrb[0].mxu0
  %v485 = vadd.f32 %v98, %v484
  %v486 = vpop.f32.mrb[0].mxu0
  %v487 = vpop.f32.mrb[0].mxu0
  %v488 = vadd.f32 %v98, %v487
  %v489 = vpop.f32.mrb[0].mxu0
  %490 = vmatprep.mubr.bf16.mxu0 %v227
  %491 = vmatmul.mubr.bf16.gmra.mrb[0].mxu0 %v226
  %v492 = vpop.f32.mrb[0].mxu0
  %v493 = vadd.f32 %v98, %v492
  %v494 = vpop.f32.mrb[0].mxu0
  %v495 = vpop.f32.mrb[0].mxu0
  %v496 = vadd.f32 %v98, %v495
  %v497 = vpop.f32.mrb[0].mxu0
  %498 = vmatprep.mubr.bf16.mxu0 %v230
  %499 = vmatmul.mubr.bf16.gmra.mrb[0].mxu0 %v229
  %v500 = vpop.f32.mrb[0].mxu0
  %v501 = vadd.f32 %v98, %v500
  %v502 = vpop.f32.mrb[0].mxu0
  %v503 = vpop.f32.mrb[0].mxu0
  %v504 = vadd.f32 %v98, %v503
  %v505 = vpop.f32.mrb[0].mxu0
  %506 = vmatprep.mubr.bf16.mxu0 %v233
  %507 = vmatmul.mubr.bf16.gmra.mrb[0].mxu0 %v232
  %v508 = vpop.f32.mrb[0].mxu0
  %v509 = vadd.f32 %v98, %v508
  %v510 = vpop.f32.mrb[0].mxu0
  %v511 = vpop.f32.mrb[0].mxu0
  %v512 = vadd.f32 %v98, %v511
  %v513 = vpop.f32.mrb[0].mxu0
  %514 = vmatprep.mubr.bf16.mxu0 %v236
  %515 = vmatmul.mubr.bf16.gmra.mrb[0].mxu0 %v235
  %v516 = vpop.f32.mrb[0].mxu0
  %v517 = vadd.f32 %v98, %v516
  %v518 = vpop.f32.mrb[0].mxu0
  %v519 = vpop.f32.mrb[0].mxu0
  %v520 = vpop.f32.mrb[0].mxu0
  %521 = vdwg.mxu0
  %522 = vmatprep.subr.bf16.mxu0 0
  %523 = vmatpush1.bf16.msra.mxu0 %v348
  %524 = vmatprep.subr.bf16.mxu0 0
  %525 = vmatpush1.bf16.msra.mxu0 %v349
  %526 = vmatprep.subr.bf16.mxu0 0
  %527 = vmatpush1.bf16.msra.mxu0 0
  %528 = vmatprep.subr.bf16.mxu0 0
  %529 = vmatpush1.bf16.msra.mxu0 0
  %530 = vmatprep.subr.bf16.mxu0 0
  %531 = vmatpush1.bf16.msra.mxu0 0
  %532 = vmatprep.subr.bf16.mxu0 0
  %533 = vmatpush1.bf16.msra.mxu0 0
  %534 = vmatprep.subr.bf16.mxu0 0
  %535 = vmatpush1.bf16.msra.mxu0 0
  %536 = vmatprep.subr.bf16.mxu0 0
  %537 = vmatpush1.bf16.msra.mxu0 0
  %538 = vmatprep.subr.bf16.mxu0 0
  %539 = vmatpush1.bf16.msra.mxu0 0
  %540 = vmatprep.subr.bf16.mxu0 0
  %541 = vmatpush1.bf16.msra.mxu0 0
  %542 = vmatprep.subr.bf16.mxu0 0
  %543 = vmatpush1.bf16.msra.mxu0 0
  %544 = vmatprep.subr.bf16.mxu0 0
  %545 = vmatpush1.bf16.msra.mxu0 0
  %546 = vmatprep.subr.bf16.mxu0 0
  %547 = vmatpush1.bf16.msra.mxu0 0
  %548 = vmatprep.subr.bf16.mxu0 0
  %549 = vmatpush1.bf16.msra.mxu0 0
  %550 = vmatprep.subr.bf16.mxu0 0
  %551 = vmatpush1.bf16.msra.mxu0 0
  %552 = vmatprep.subr.bf16.mxu0 0
  %553 = vmatpush1.bf16.msra.mxu0 0
  %554 = vmatprep.mubr.bf16.mxu0 0
  %555 = vmatmul.mubr.bf16.gmra.mrb[0].mxu0 %v370
  %v556 = vpop.f32.mrb[0].mxu0
  %v557 = vadd.f32 %v437, %v556
  %v558 = vpop.f32.mrb[0].mxu0
  %v559 = vpop.f32.mrb[0].mxu0
  %v560 = vadd.f32 %v440, %v559
  %v561 = vpop.f32.mrb[0].mxu0
  %562 = vmatprep.mubr.bf16.mxu0 0
  %563 = vmatmul.mubr.bf16.gmra.mrb[0].mxu0 %v373
  %v564 = vpop.f32.mrb[0].mxu0
  %v565 = vadd.f32 %v445, %v564
  %v566 = vpop.f32.mrb[0].mxu0
  %v567 = vpop.f32.mrb[0].mxu0
  %v568 = vadd.f32 %v448, %v567
  %v569 = vpop.f32.mrb[0].mxu0
  %570 = vmatprep.mubr.bf16.mxu0 0
  %571 = vmatmul.mubr.bf16.gmra.mrb[0].mxu0 %v376
  %v572 = vpop.f32.mrb[0].mxu0
  %v573 = vadd.f32 %v453, %v572
  %v574 = vpop.f32.mrb[0].mxu0
  %v575 = vpop.f32.mrb[0].mxu0
  %v576 = vadd.f32 %v456, %v575
  %v577 = vpop.f32.mrb[0].mxu0
  %578 = vmatprep.mubr.bf16.mxu0 0
  %579 = vmatmul.mubr.bf16.gmra.mrb[0].mxu0 %v379
  %v580 = vpop.f32.mrb[0].mxu0
  %v581 = vadd.f32 %v461, %v580
  %v582 = vpop.f32.mrb[0].mxu0
  %v583 = vpop.f32.mrb[0].mxu0
  %v584 = vadd.f32 %v464, %v583
  %v585 = vpop.f32.mrb[0].mxu0
  %586 = vmatprep.mubr.bf16.mxu0 0
  %587 = vmatmul.mubr.bf16.gmra.mrb[0].mxu0 %v382
  %v588 = vpop.f32.mrb[0].mxu0
  %v589 = vadd.f32 %v469, %v588
  %v590 = vpop.f32.mrb[0].mxu0
  %v591 = vpop.f32.mrb[0].mxu0
  %v592 = vadd.f32 %v472, %v591
  %v593 = vpop.f32.mrb[0].mxu0
  %594 = vmatprep.mubr.bf16.mxu0 0
  %595 = vmatmul.mubr.bf16.gmra.mrb[0].mxu0 %v385
  %v596 = vpop.f32.mrb[0].mxu0
  %v597 = vadd.f32 %v477, %v596
  %v598 = vpop.f32.mrb[0].mxu0
  %v599 = vpop.f32.mrb[0].mxu0
  %v600 = vadd.f32 %v480, %v599
  %v601 = vpop.f32.mrb[0].mxu0
  %602 = vmatprep.mubr.bf16.mxu0 0
  %603 = vmatmul.mubr.bf16.gmra.mrb[0].mxu0 %v388
  %v604 = vpop.f32.mrb[0].mxu0
  %v605 = vadd.f32 %v485, %v604
  %v606 = vpop.f32.mrb[0].mxu0
  %v607 = vpop.f32.mrb[0].mxu0
  %v608 = vadd.f32 %v488, %v607
  %v609 = vpop.f32.mrb[0].mxu0
  %610 = vmatprep.mubr.bf16.mxu0 0
  %611 = vmatmul.mubr.bf16.gmra.mrb[0].mxu0 %v391
  %v612 = vpop.f32.mrb[0].mxu0
  %v613 = vadd.f32 %v493, %v612
  %v614 = vpop.f32.mrb[0].mxu0
  %v615 = vpop.f32.mrb[0].mxu0
  %v616 = vadd.f32 %v496, %v615
  %v617 = vpop.f32.mrb[0].mxu0
  %618 = vmatprep.mubr.bf16.mxu0 0
  %619 = vmatmul.mubr.bf16.gmra.mrb[0].mxu0 %v394
  %v620 = vpop.f32.mrb[0].mxu0
  %v621 = vadd.f32 %v501, %v620
  %v622 = vpop.f32.mrb[0].mxu0
  %v623 = vpop.f32.mrb[0].mxu0
  %v624 = vadd.f32 %v504, %v623
  %v625 = vpop.f32.mrb[0].mxu0
  %626 = vmatprep.mubr.bf16.mxu0 0
  %627 = vmatmul.mubr.bf16.gmra.mrb[0].mxu0 %v397
  %v628 = vpop.f32.mrb[0].mxu0
  %v629 = vadd.f32 %v509, %v628
  %v630 = vpop.f32.mrb[0].mxu0
  %v631 = vpop.f32.mrb[0].mxu0
  %v632 = vadd.f32 %v512, %v631
  %v633 = vpop.f32.mrb[0].mxu0
  %634 = vmatprep.mubr.bf16.mxu0 0
  %635 = vmatmul.mubr.bf16.gmra.mrb[0].mxu0 %v400
  %v636 = vpop.f32.mrb[0].mxu0
  %v637 = vadd.f32 %v517, %v636
  %v638 = vpop.f32.mrb[0].mxu0
  %v639 = vpop.f32.mrb[0].mxu0
  %v640 = vpop.f32.mrb[0].mxu0
  %641 = vdwg.mxu0
  %vm642 = vcmask 31744
  %643 = vst.msk [vmem:[%s3] sm:$0xff] %vm642, %v557
  %644 = vst.msk [vmem:[%s3 + $0x8] sm:$0xff] %vm642, %v560
  %645 = vst.msk [vmem:[%s3 + $0x10] sm:$0xff] %vm642, %v565
  %646 = vst.msk [vmem:[%s3 + $0x18] sm:$0xff] %vm642, %v568
  %647 = vst.msk [vmem:[%s3 + $0x20] sm:$0xff] %vm642, %v573
  %648 = vst.msk [vmem:[%s3 + $0x28] sm:$0xff] %vm642, %v576
  %649 = vst.msk [vmem:[%s3 + $0x30] sm:$0xff] %vm642, %v581
  %650 = vst.msk [vmem:[%s3 + $0x38] sm:$0xff] %vm642, %v584
  %651 = vst.msk [vmem:[%s3 + $0x40] sm:$0xff] %vm642, %v589
  %652 = vst.msk [vmem:[%s3 + $0x48] sm:$0xff] %vm642, %v592
  %653 = vst.msk [vmem:[%s3 + $0x50] sm:$0xff] %vm642, %v597
  %654 = vst.msk [vmem:[%s3 + $0x58] sm:$0xff] %vm642, %v600
  %655 = vst.msk [vmem:[%s3 + $0x60] sm:$0xff] %vm642, %v605
  %656 = vst.msk [vmem:[%s3 + $0x68] sm:$0xff] %vm642, %v608
  %657 = vst.msk [vmem:[%s3 + $0x70] sm:$0xff] %vm642, %v613
  %658 = vst.msk [vmem:[%s3 + $0x78] sm:$0xff] %vm642, %v616
  %659 = vst.msk [vmem:[%s3 + $0x80] sm:$0xff] %vm642, %v621
  %660 = vst.msk [vmem:[%s3 + $0x88] sm:$0xff] %vm642, %v624
  %661 = vst.msk [vmem:[%s3 + $0x90] sm:$0xff] %vm642, %v629
  %662 = vst.msk [vmem:[%s3 + $0x98] sm:$0xff] %vm642, %v632
  %663 = vst.msk [vmem:[%s3 + $0xa0] sm:$0xff] %vm642, %v637
  // Predicated region
  $region14: #{solo_v1_forward.23} parent=0 // pred_check
    _
  $region15: #{solo_v1_forward.23} parent=0 // pred_check_branch
    %665 = sbr.rel (0) target = $region17
  $region16: #{solo_v1_forward.23} parent=0 // pred_region
    _
  $region17: #{solo_v1_forward.23} parent=0 // pred_fallthru
    _
  // Predicated region
  $region18: #{solo_v1_forward.23} parent=0 // pred_check
    _
  $region19: #{solo_v1_forward.23} parent=0 // pred_check_branch
    %667 = sbr.rel (0) target = $region21
  $region20: #{solo_v1_forward.23} parent=0 // pred_region
    _
  $region21: #{solo_v1_forward.23} parent=0 // pred_fallthru
    _

// kernel: solo_v1_forward.20
$region0: #{solo_v1_forward.20}
  #allocation0 [shape = 'u32[]', space=smem, size = 0x4, offset = 0x4, fixed_abs, tag = 'smem constant byte address 0x4 - core index']
  #allocation1 [shape = 'u32[144,128]{1,0:T(1,128)}', space=vmem, size = 0x12000, scoped, tag = 'internal scratch']
  %s0 = inlined_call_operand.vmem [shape: bf16[168,306], index: 0, kind: input, shape index: {}]
  %s1 = inlined_call_operand.vmem [shape: bf16[306,32], index: 1, kind: input, shape index: {}]
  %s2 = inlined_call_operand.vmem [shape: f32[1,32], index: 2, kind: input, shape index: {}]
  %s3 = inlined_call_operand.vmem [shape: f32[168,32], index: 3, kind: output, shape index: {}]
  %s4 = sld [smem:[#allocation0]]
  $region22: #{solo_v1_forward.20} parent=0
    _
  %s6 = ssub.s32 1, %s4
  %s7 = scalar_select 0, %s6, %s4
  // Predicated region
  $region2: #{solo_v1_forward.20} parent=0 // pred_check
    _
  $region3: #{solo_v1_forward.20} parent=0 // pred_check_branch
    %9 = sbr.rel (0) target = $region5
  $region4: #{solo_v1_forward.20} parent=0 // pred_region
    _
  $region5: #{solo_v1_forward.20} parent=0 // pred_fallthru
    _
  // Predicated region
  $region6: #{solo_v1_forward.20} parent=0 // pred_check
    _
  $region7: #{solo_v1_forward.20} parent=0 // pred_check_branch
    %11 = sbr.rel (0) target = $region9
  $region8: #{solo_v1_forward.20} parent=0 // pred_region
    _
  $region9: #{solo_v1_forward.20} parent=0 // pred_fallthru
    _
  // Predicated region
  $region10: #{solo_v1_forward.20} parent=0 // pred_check
    _
  $region11: #{solo_v1_forward.20} parent=0 // pred_check_branch
    %13 = sbr.rel (0) target = $region13
  $region12: #{solo_v1_forward.20} parent=0 // pred_region
    _
  $region13: #{solo_v1_forward.20} parent=0 // pred_fallthru
    _
  %v15 = vld [vmem:[%s0] sm:$0xff]
  %v16 = vld [vmem:[%s0 + $0x8] sm:$0xf]
  %v17 = vld [vmem:[%s0 + $0xc] sm:$0xff]
  %v18 = vld [vmem:[%s0 + $0x14] sm:$0xf]
  %v19 = vld [vmem:[%s0 + $0x18] sm:$0xff]
  %v20 = vld [vmem:[%s0 + $0x20] sm:$0xf]
  %v21 = vld [vmem:[%s0 + $0x24] sm:$0xff]
  %v22 = vld [vmem:[%s0 + $0x2c] sm:$0xf]
  %v23 = vld [vmem:[%s0 + $0x30] sm:$0xff]
  %v24 = vld [vmem:[%s0 + $0x38] sm:$0xf]
  %v25 = vld [vmem:[%s0 + $0x3c] sm:$0xff]
  %v26 = vld [vmem:[%s0 + $0x44] sm:$0xf]
  %v27 = vld [vmem:[%s0 + $0x48] sm:$0xff]
  %v28 = vld [vmem:[%s0 + $0x50] sm:$0xf]
  %v29 = vld [vmem:[%s0 + $0x54] sm:$0xff]
  %v30 = vld [vmem:[%s0 + $0x5c] sm:$0xf]
  %v31 = vld [vmem:[%s0 + $0x60] sm:$0xff]
  %v32 = vld [vmem:[%s0 + $0x68] sm:$0xf]
  %v33 = vld [vmem:[%s0 + $0x6c] sm:$0xff]
  %v34 = vld [vmem:[%s0 + $0x74] sm:$0xf]
  %v35 = vld [vmem:[%s0 + $0x78] sm:$0xff]
  %v36 = vld [vmem:[%s0 + $0x80] sm:$0xf]
  %v37 = vld [vmem:[%s0 + $0x84] sm:$0xff]
  %v38 = vld [vmem:[%s0 + $0x8c] sm:$0xf]
  %v39 = vld [vmem:[%s0 + $0x90] sm:$0xff]
  %v40 = vld [vmem:[%s0 + $0x98] sm:$0xf]
  %v41 = vld [vmem:[%s0 + $0x9c] sm:$0xff]
  %v42 = vld [vmem:[%s0 + $0xa4] sm:$0xf]
  %v43 = vld [vmem:[%s0 + $0xa8] sm:$0xff]
  %v44 = vld [vmem:[%s0 + $0xb0] sm:$0xf]
  %v45 = vld [vmem:[%s0 + $0xb4] sm:$0xff]
  %v46 = vld [vmem:[%s0 + $0xbc] sm:$0xf]
  %v47 = vld [vmem:[%s0 + $0xc0] sm:$0xff]
  %v48 = vld [vmem:[%s0 + $0xc8] sm:$0xf]
  %v49 = vld [vmem:[%s0 + $0xcc] sm:$0xff]
  %v50 = vld [vmem:[%s0 + $0xd4] sm:$0xf]
  %v51 = vld [vmem:[%s0 + $0xd8] sm:$0xff]
  %v52 = vld [vmem:[%s0 + $0xe0] sm:$0xf]
  %v53 = vld [vmem:[%s0 + $0xe4] sm:$0xff]
  %v54 = vld [vmem:[%s0 + $0xec] sm:$0xf]
  %v55 = vld [vmem:[%s0 + $0xf0] sm:$0xff]
  %v56 = vld [vmem:[%s0 + $0xf8] sm:$0xf]
  %v57 = vld [vmem:[%s1] sm:$0xf]
  %v58 = vld [vmem:[%s1 + $0x4] sm:$0xf]
  %v59 = vld [vmem:[%s1 + $0x8] sm:$0xf]
  %v60 = vld [vmem:[%s1 + $0xc] sm:$0xf]
  %v61 = vld [vmem:[%s1 + $0x10] sm:$0xf]
  %v62 = vld [vmem:[%s1 + $0x14] sm:$0xf]
  %v63 = vld [vmem:[%s1 + $0x18] sm:$0xf]
  %v64 = vld [vmem:[%s1 + $0x1c] sm:$0xf]
  %v65 = vld [vmem:[%s1 + $0x20] sm:$0xf]
  %v66 = vld [vmem:[%s1 + $0x24] sm:$0xf]
  %v67 = vld [vmem:[%s1 + $0x28] sm:$0xf]
  %v68 = vld [vmem:[%s1 + $0x2c] sm:$0xf]
  %v69 = vld [vmem:[%s1 + $0x30] sm:$0xf]
  %v70 = vld [vmem:[%s1 + $0x34] sm:$0xf]
  %v71 = vld [vmem:[%s1 + $0x38] sm:$0xf]
  %v72 = vld [vmem:[%s1 + $0x3c] sm:$0xf]
  %v73 = vld [vmem:[%s1 + $0x40] sm:$0xf]
  %v74 = vld [vmem:[%s1 + $0x44] sm:$0xf]
  %v75 = vld [vmem:[%s1 + $0x48] sm:$0xf]
  %v76 = vld [vmem:[%s1 + $0x4c] sm:$0xf]
  %v77 = vld [vmem:[%s1 + $0x50] sm:$0xf]
  %v78 = vld [vmem:[%s1 + $0x54] sm:$0xf]
  %v79 = vld [vmem:[%s1 + $0x58] sm:$0xf]
  %v80 = vld [vmem:[%s1 + $0x5c] sm:$0xf]
  %v81 = vld [vmem:[%s1 + $0x60] sm:$0xf]
  %v82 = vld [vmem:[%s1 + $0x64] sm:$0xf]
  %v83 = vld [vmem:[%s1 + $0x68] sm:$0xf]
  %v84 = vld [vmem:[%s1 + $0x6c] sm:$0xf]
  %v85 = vld [vmem:[%s1 + $0x70] sm:$0xf]
  %v86 = vld [vmem:[%s1 + $0x74] sm:$0xf]
  %v87 = vld [vmem:[%s1 + $0x78] sm:$0xf]
  %v88 = vld [vmem:[%s1 + $0x7c] sm:$0xf]
  %v89 = vld [vmem:[%s1 + $0x80] sm:$0xf]
  %v90 = vld [vmem:[%s1 + $0x84] sm:$0xf]
  %v91 = vld [vmem:[%s1 + $0x88] sm:$0xf]
  %v92 = vld [vmem:[%s1 + $0x8c] sm:$0xf]
  %v93 = vld [vmem:[%s1 + $0x90] sm:$0xf]
  %v94 = vld [vmem:[%s1 + $0x94] sm:$0xf]
  %v95 = vld [vmem:[%s1 + $0x98] sm:$0x1]
  %v96 = vld [vmem:[%s2] sm:$0x1]
  %v98 = vlaneseq
  %v99 = vshrl.u32 %v98, 7
  %v100 = vsub.s32 0, %v99
  %v101 = vrot.slane %v96, %v100
  %v145 = vunpack.c.l.b16 %v15
  %v146 = vunpack.c.h.b16 %v15
  %v147 = vunpack.c.l.b16 %v16
  %v148 = vunpack.c.l.b16 %v17
  %v149 = vunpack.c.h.b16 %v17
  %v150 = vunpack.c.l.b16 %v18
  %v151 = vunpack.c.l.b16 %v19
  %v152 = vunpack.c.h.b16 %v19
  %v153 = vunpack.c.l.b16 %v20
  %v154 = vunpack.c.l.b16 %v21
  %v155 = vunpack.c.h.b16 %v21
  %v156 = vunpack.c.l.b16 %v22
  %v157 = vunpack.c.l.b16 %v23
  %v158 = vunpack.c.h.b16 %v23
  %v159 = vunpack.c.l.b16 %v24
  %v160 = vunpack.c.l.b16 %v25
  %v161 = vunpack.c.h.b16 %v25
  %v162 = vunpack.c.l.b16 %v26
  %v163 = vunpack.c.l.b16 %v27
  %v164 = vunpack.c.h.b16 %v27
  %v165 = vunpack.c.l.b16 %v28
  %v166 = vunpack.c.l.b16 %v29
  %v167 = vunpack.c.h.b16 %v29
  %v168 = vunpack.c.l.b16 %v30
  %v169 = vunpack.c.l.b16 %v31
  %v170 = vunpack.c.h.b16 %v31
  %v171 = vunpack.c.l.b16 %v32
  %v172 = vunpack.c.l.b16 %v33
  %v173 = vunpack.c.h.b16 %v33
  %v174 = vunpack.c.l.b16 %v34
  %v175 = vunpack.c.l.b16 %v35
  %v176 = vunpack.c.h.b16 %v35
  %v177 = vunpack.c.l.b16 %v36
  %v178 = vunpack.c.l.b16 %v37
  %v179 = vunpack.c.h.b16 %v37
  %v180 = vunpack.c.l.b16 %v38
  %v181 = vunpack.c.l.b16 %v39
  %v182 = vunpack.c.h.b16 %v39
  %v183 = vunpack.c.l.b16 %v40
  %v184 = vunpack.c.l.b16 %v41
  %v185 = vunpack.c.h.b16 %v41
  %v186 = vunpack.c.l.b16 %v42
  %v187 = vunpack.c.l.b16 %v43
  %v188 = vunpack.c.h.b16 %v43
  %v189 = vunpack.c.l.b16 %v44
  %v190 = vunpack.c.l.b16 %v45
  %v191 = vunpack.c.h.b16 %v45
  %v192 = vunpack.c.l.b16 %v46
  %v193 = vunpack.c.l.b16 %v47
  %v194 = vunpack.c.h.b16 %v47
  %v195 = vunpack.c.l.b16 %v48
  %v196 = vunpack.c.l.b16 %v49
  %v197 = vunpack.c.h.b16 %v49
  %v198 = vunpack.c.l.b16 %v50
  %v199 = vunpack.c.l.b16 %v51
  %v200 = vunpack.c.h.b16 %v51
  %v201 = vunpack.c.l.b16 %v52
  %v202 = vunpack.c.l.b16 %v53
  %v203 = vunpack.c.h.b16 %v53
  %v204 = vunpack.c.l.b16 %v54
  %v205 = vunpack.c.l.b16 %v55
  %v206 = vunpack.c.h.b16 %v55
  %v207 = vunpack.c.l.b16 %v56
  %v208 = vpack.c.b16 %v148, %v145
  %v209 = vpack.c.b16 %v149, %v146
  %v210 = vpack.c.b16 %v150, %v147
  %v211 = vpack.c.b16 %v154, %v151
  %v212 = vpack.c.b16 %v155, %v152
  %v213 = vpack.c.b16 %v156, %v153
  %v214 = vpack.c.b16 %v160, %v157
  %v215 = vpack.c.b16 %v161, %v158
  %v216 = vpack.c.b16 %v162, %v159
  %v217 = vpack.c.b16 %v166, %v163
  %v218 = vpack.c.b16 %v167, %v164
  %v219 = vpack.c.b16 %v168, %v165
  %v220 = vpack.c.b16 %v172, %v169
  %v221 = vpack.c.b16 %v173, %v170
  %v222 = vpack.c.b16 %v174, %v171
  %v223 = vpack.c.b16 %v178, %v175
  %v224 = vpack.c.b16 %v179, %v176
  %v225 = vpack.c.b16 %v180, %v177
  %v226 = vpack.c.b16 %v184, %v181
  %v227 = vpack.c.b16 %v185, %v182
  %v228 = vpack.c.b16 %v186, %v183
  %v229 = vpack.c.b16 %v190, %v187
  %v230 = vpack.c.b16 %v191, %v188
  %v231 = vpack.c.b16 %v192, %v189
  %v232 = vpack.c.b16 %v196, %v193
  %v233 = vpack.c.b16 %v197, %v194
  %v234 = vpack.c.b16 %v198, %v195
  %v235 = vpack.c.b16 %v202, %v199
  %v236 = vpack.c.b16 %v203, %v200
  %v237 = vpack.c.b16 %v204, %v201
  %v238 = vpack.c.b16 %v205, %v205
  %v239 = vpack.c.b16 %v206, %v206
  %v240 = vpack.c.b16 %v207, %v207
  %v302 = vunpack.c.l.b16 %v57
  %v303 = vunpack.c.l.b16 %v58
  %v304 = vunpack.c.l.b16 %v59
  %v305 = vunpack.c.l.b16 %v60
  %v306 = vunpack.c.l.b16 %v61
  %v307 = vunpack.c.l.b16 %v62
  %v308 = vunpack.c.l.b16 %v63
  %v309 = vunpack.c.l.b16 %v64
  %v310 = vunpack.c.l.b16 %v65
  %v311 = vunpack.c.l.b16 %v66
  %v312 = vunpack.c.l.b16 %v67
  %v313 = vunpack.c.l.b16 %v68
  %v314 = vunpack.c.l.b16 %v69
  %v315 = vunpack.c.l.b16 %v70
  %v316 = vunpack.c.l.b16 %v71
  %v317 = vunpack.c.l.b16 %v72
  %v318 = vunpack.c.l.b16 %v73
  %v319 = vunpack.c.l.b16 %v74
  %v320 = vunpack.c.l.b16 %v75
  %v321 = vunpack.c.l.b16 %v76
  %v322 = vunpack.c.l.b16 %v77
  %v323 = vunpack.c.l.b16 %v78
  %v324 = vunpack.c.l.b16 %v79
  %v325 = vunpack.c.l.b16 %v80
  %v326 = vunpack.c.l.b16 %v81
  %v327 = vunpack.c.l.b16 %v82
  %v328 = vunpack.c.l.b16 %v83
  %v329 = vunpack.c.l.b16 %v84
  %v330 = vunpack.c.l.b16 %v85
  %v331 = vunpack.c.l.b16 %v86
  %v332 = vunpack.c.l.b16 %v87
  %v333 = vunpack.c.l.b16 %v88
  %v334 = vunpack.c.l.b16 %v89
  %v335 = vunpack.c.l.b16 %v90
  %v336 = vunpack.c.l.b16 %v91
  %v337 = vunpack.c.l.b16 %v92
  %v338 = vunpack.c.l.b16 %v93
  %v339 = vunpack.c.l.b16 %v94
  %v340 = vunpack.c.l.b16 %v95
  %v341 = vpack.c.b16 %v303, %v302
  %v342 = vpack.c.b16 %v305, %v304
  %v343 = vpack.c.b16 %v307, %v306
  %v344 = vpack.c.b16 %v309, %v308
  %v345 = vpack.c.b16 %v311, %v310
  %v346 = vpack.c.b16 %v313, %v312
  %v347 = vpack.c.b16 %v315, %v314
  %v348 = vpack.c.b16 %v317, %v316
  %v349 = vpack.c.b16 %v319, %v318
  %v350 = vpack.c.b16 %v321, %v320
  %v351 = vpack.c.b16 %v323, %v322
  %v352 = vpack.c.b16 %v325, %v324
  %v353 = vpack.c.b16 %v327, %v326
  %v354 = vpack.c.b16 %v329, %v328
  %v355 = vpack.c.b16 %v331, %v330
  %v356 = vpack.c.b16 %v333, %v332
  %v357 = vpack.c.b16 %v335, %v334
  %v358 = vpack.c.b16 %v337, %v336
  %v359 = vpack.c.b16 %v339, %v338
  %v360 = vpack.c.b16 %v340, %v340
  %vm380 = vcmask 408576
  %v382 = vsel %vm380, %v210, 0
  %v385 = vsel %vm380, %v213, 0
  %v388 = vsel %vm380, %v216, 0
  %v391 = vsel %vm380, %v219, 0
  %v394 = vsel %vm380, %v222, 0
  %v397 = vsel %vm380, %v225, 0
  %v400 = vsel %vm380, %v228, 0
  %v403 = vsel %vm380, %v231, 0
  %v406 = vsel %vm380, %v234, 0
  %v409 = vsel %vm380, %v237, 0
  %v412 = vsel %vm380, %v240, 0
  %vm414 = vcmask 1040384
  %v416 = vsel %vm414, %v360, 0
  %418 = vmatprep.subr.bf16.mxu0 0
  %419 = vmatpush1.bf16.msra.mxu0 %v341
  %420 = vmatprep.subr.bf16.mxu0 0
  %421 = vmatpush1.bf16.msra.mxu0 %v342
  %422 = vmatprep.subr.bf16.mxu0 0
  %423 = vmatpush1.bf16.msra.mxu0 %v343
  %424 = vmatprep.subr.bf16.mxu0 0
  %425 = vmatpush1.bf16.msra.mxu0 %v344
  %426 = vmatprep.subr.bf16.mxu0 0
  %427 = vmatpush1.bf16.msra.mxu0 %v345
  %428 = vmatprep.subr.bf16.mxu0 0
  %429 = vmatpush1.bf16.msra.mxu0 %v346
  %430 = vmatprep.subr.bf16.mxu0 0
  %431 = vmatpush1.bf16.msra.mxu0 %v347
  %432 = vmatprep.subr.bf16.mxu0 0
  %433 = vmatpush1.bf16.msra.mxu0 %v348
  %434 = vmatprep.subr.bf16.mxu0 0
  %435 = vmatpush1.bf16.msra.mxu0 %v349
  %436 = vmatprep.subr.bf16.mxu0 0
  %437 = vmatpush1.bf16.msra.mxu0 %v350
  %438 = vmatprep.subr.bf16.mxu0 0
  %439 = vmatpush1.bf16.msra.mxu0 %v351
  %440 = vmatprep.subr.bf16.mxu0 0
  %441 = vmatpush1.bf16.msra.mxu0 %v352
  %442 = vmatprep.subr.bf16.mxu0 0
  %443 = vmatpush1.bf16.msra.mxu0 %v353
  %444 = vmatprep.subr.bf16.mxu0 0
  %445 = vmatpush1.bf16.msra.mxu0 %v354
  %446 = vmatprep.subr.bf16.mxu0 0
  %447 = vmatpush1.bf16.msra.mxu0 %v355
  %448 = vmatprep.subr.bf16.mxu0 0
  %449 = vmatpush1.bf16.msra.mxu0 %v356
  %450 = vmatprep.mubr.bf16.mxu0 %v209
  %451 = vmatmul.mubr.bf16.gmra.mrb[0].mxu0 %v208
  %v452 = vpop.f32.mrb[0].mxu0
  %v453 = vadd.f32 %v101, %v452
  %v454 = vpop.f32.mrb[0].mxu0
  %v455 = vpop.f32.mrb[0].mxu0
  %v456 = vadd.f32 %v101, %v455
  %v457 = vpop.f32.mrb[0].mxu0
  %458 = vmatprep.mubr.bf16.mxu0 %v212
  %459 = vmatmul.mubr.bf16.gmra.mrb[0].mxu0 %v211
  %v460 = vpop.f32.mrb[0].mxu0
  %v461 = vadd.f32 %v101, %v460
  %v462 = vpop.f32.mrb[0].mxu0
  %v463 = vpop.f32.mrb[0].mxu0
  %v464 = vadd.f32 %v101, %v463
  %v465 = vpop.f32.mrb[0].mxu0
  %466 = vmatprep.mubr.bf16.mxu0 %v215
  %467 = vmatmul.mubr.bf16.gmra.mrb[0].mxu0 %v214
  %v468 = vpop.f32.mrb[0].mxu0
  %v469 = vadd.f32 %v101, %v468
  %v470 = vpop.f32.mrb[0].mxu0
  %v471 = vpop.f32.mrb[0].mxu0
  %v472 = vadd.f32 %v101, %v471
  %v473 = vpop.f32.mrb[0].mxu0
  %474 = vmatprep.mubr.bf16.mxu0 %v218
  %475 = vmatmul.mubr.bf16.gmra.mrb[0].mxu0 %v217
  %v476 = vpop.f32.mrb[0].mxu0
  %v477 = vadd.f32 %v101, %v476
  %v478 = vpop.f32.mrb[0].mxu0
  %v479 = vpop.f32.mrb[0].mxu0
  %v480 = vadd.f32 %v101, %v479
  %v481 = vpop.f32.mrb[0].mxu0
  %482 = vmatprep.mubr.bf16.mxu0 %v221
  %483 = vmatmul.mubr.bf16.gmra.mrb[0].mxu0 %v220
  %v484 = vpop.f32.mrb[0].mxu0
  %v485 = vadd.f32 %v101, %v484
  %v486 = vpop.f32.mrb[0].mxu0
  %v487 = vpop.f32.mrb[0].mxu0
  %v488 = vadd.f32 %v101, %v487
  %v489 = vpop.f32.mrb[0].mxu0
  %490 = vmatprep.mubr.bf16.mxu0 %v224
  %491 = vmatmul.mubr.bf16.gmra.mrb[0].mxu0 %v223
  %v492 = vpop.f32.mrb[0].mxu0
  %v493 = vadd.f32 %v101, %v492
  %v494 = vpop.f32.mrb[0].mxu0
  %v495 = vpop.f32.mrb[0].mxu0
  %v496 = vadd.f32 %v101, %v495
  %v497 = vpop.f32.mrb[0].mxu0
  %498 = vmatprep.mubr.bf16.mxu0 %v227
  %499 = vmatmul.mubr.bf16.gmra.mrb[0].mxu0 %v226
  %v500 = vpop.f32.mrb[0].mxu0
  %v501 = vadd.f32 %v101, %v500
  %v502 = vpop.f32.mrb[0].mxu0
  %v503 = vpop.f32.mrb[0].mxu0
  %v504 = vadd.f32 %v101, %v503
  %v505 = vpop.f32.mrb[0].mxu0
  %506 = vmatprep.mubr.bf16.mxu0 %v230
  %507 = vmatmul.mubr.bf16.gmra.mrb[0].mxu0 %v229
  %v508 = vpop.f32.mrb[0].mxu0
  %v509 = vadd.f32 %v101, %v508
  %v510 = vpop.f32.mrb[0].mxu0
  %v511 = vpop.f32.mrb[0].mxu0
  %v512 = vadd.f32 %v101, %v511
  %v513 = vpop.f32.mrb[0].mxu0
  %514 = vmatprep.mubr.bf16.mxu0 %v233
  %515 = vmatmul.mubr.bf16.gmra.mrb[0].mxu0 %v232
  %v516 = vpop.f32.mrb[0].mxu0
  %v517 = vadd.f32 %v101, %v516
  %v518 = vpop.f32.mrb[0].mxu0
  %v519 = vpop.f32.mrb[0].mxu0
  %v520 = vadd.f32 %v101, %v519
  %v521 = vpop.f32.mrb[0].mxu0
  %522 = vmatprep.mubr.bf16.mxu0 %v236
  %523 = vmatmul.mubr.bf16.gmra.mrb[0].mxu0 %v235
  %v524 = vpop.f32.mrb[0].mxu0
  %v525 = vadd.f32 %v101, %v524
  %v526 = vpop.f32.mrb[0].mxu0
  %v527 = vpop.f32.mrb[0].mxu0
  %v528 = vadd.f32 %v101, %v527
  %v529 = vpop.f32.mrb[0].mxu0
  %530 = vmatprep.mubr.bf16.mxu0 %v239
  %531 = vmatmul.mubr.bf16.gmra.mrb[0].mxu0 %v238
  %v532 = vpop.f32.mrb[0].mxu0
  %v533 = vadd.f32 %v101, %v532
  %v534 = vpop.f32.mrb[0].mxu0
  %v535 = vpop.f32.mrb[0].mxu0
  %v536 = vpop.f32.mrb[0].mxu0
  %537 = vdwg.mxu0
  %538 = vmatprep.subr.bf16.mxu0 0
  %539 = vmatpush1.bf16.msra.mxu0 %v357
  %540 = vmatprep.subr.bf16.mxu0 0
  %541 = vmatpush1.bf16.msra.mxu0 %v358
  %542 = vmatprep.subr.bf16.mxu0 0
  %543 = vmatpush1.bf16.msra.mxu0 %v359
  %544 = vmatprep.subr.bf16.mxu0 0
  %545 = vmatpush1.bf16.msra.mxu0 %v416
  %546 = vmatprep.subr.bf16.mxu0 0
  %547 = vmatpush1.bf16.msra.mxu0 0
  %548 = vmatprep.subr.bf16.mxu0 0
  %549 = vmatpush1.bf16.msra.mxu0 0
  %550 = vmatprep.subr.bf16.mxu0 0
  %551 = vmatpush1.bf16.msra.mxu0 0
  %552 = vmatprep.subr.bf16.mxu0 0
  %553 = vmatpush1.bf16.msra.mxu0 0
  %554 = vmatprep.subr.bf16.mxu0 0
  %555 = vmatpush1.bf16.msra.mxu0 0
  %556 = vmatprep.subr.bf16.mxu0 0
  %557 = vmatpush1.bf16.msra.mxu0 0
  %558 = vmatprep.subr.bf16.mxu0 0
  %559 = vmatpush1.bf16.msra.mxu0 0
  %560 = vmatprep.subr.bf16.mxu0 0
  %561 = vmatpush1.bf16.msra.mxu0 0
  %562 = vmatprep.subr.bf16.mxu0 0
  %563 = vmatpush1.bf16.msra.mxu0 0
  %564 = vmatprep.subr.bf16.mxu0 0
  %565 = vmatpush1.bf16.msra.mxu0 0
  %566 = vmatprep.subr.bf16.mxu0 0
  %567 = vmatpush1.bf16.msra.mxu0 0
  %568 = vmatprep.subr.bf16.mxu0 0
  %569 = vmatpush1.bf16.msra.mxu0 0
  %570 = vmatprep.mubr.bf16.mxu0 0
  %571 = vmatmul.mubr.bf16.gmra.mrb[0].mxu0 %v382
  %v572 = vpop.f32.mrb[0].mxu0
  %v573 = vadd.f32 %v453, %v572
  %v574 = vpop.f32.mrb[0].mxu0
  %v575 = vpop.f32.mrb[0].mxu0
  %v576 = vadd.f32 %v456, %v575
  %v577 = vpop.f32.mrb[0].mxu0
  %578 = vmatprep.mubr.bf16.mxu0 0
  %579 = vmatmul.mubr.bf16.gmra.mrb[0].mxu0 %v385
  %v580 = vpop.f32.mrb[0].mxu0
  %v581 = vadd.f32 %v461, %v580
  %v582 = vpop.f32.mrb[0].mxu0
  %v583 = vpop.f32.mrb[0].mxu0
  %v584 = vadd.f32 %v464, %v583
  %v585 = vpop.f32.mrb[0].mxu0
  %586 = vmatprep.mubr.bf16.mxu0 0
  %587 = vmatmul.mubr.bf16.gmra.mrb[0].mxu0 %v388
  %v588 = vpop.f32.mrb[0].mxu0
  %v589 = vadd.f32 %v469, %v588
  %v590 = vpop.f32.mrb[0].mxu0
  %v591 = vpop.f32.mrb[0].mxu0
  %v592 = vadd.f32 %v472, %v591
  %v593 = vpop.f32.mrb[0].mxu0
  %594 = vmatprep.mubr.bf16.mxu0 0
  %595 = vmatmul.mubr.bf16.gmra.mrb[0].mxu0 %v391
  %v596 = vpop.f32.mrb[0].mxu0
  %v597 = vadd.f32 %v477, %v596
  %v598 = vpop.f32.mrb[0].mxu0
  %v599 = vpop.f32.mrb[0].mxu0
  %v600 = vadd.f32 %v480, %v599
  %v601 = vpop.f32.mrb[0].mxu0
  %602 = vmatprep.mubr.bf16.mxu0 0
  %603 = vmatmul.mubr.bf16.gmra.mrb[0].mxu0 %v394
  %v604 = vpop.f32.mrb[0].mxu0
  %v605 = vadd.f32 %v485, %v604
  %v606 = vpop.f32.mrb[0].mxu0
  %v607 = vpop.f32.mrb[0].mxu0
  %v608 = vadd.f32 %v488, %v607
  %v609 = vpop.f32.mrb[0].mxu0
  %610 = vmatprep.mubr.bf16.mxu0 0
  %611 = vmatmul.mubr.bf16.gmra.mrb[0].mxu0 %v397
  %v612 = vpop.f32.mrb[0].mxu0
  %v613 = vadd.f32 %v493, %v612
  %v614 = vpop.f32.mrb[0].mxu0
  %v615 = vpop.f32.mrb[0].mxu0
  %v616 = vadd.f32 %v496, %v615
  %v617 = vpop.f32.mrb[0].mxu0
  %618 = vmatprep.mubr.bf16.mxu0 0
  %619 = vmatmul.mubr.bf16.gmra.mrb[0].mxu0 %v400
  %v620 = vpop.f32.mrb[0].mxu0
  %v621 = vadd.f32 %v501, %v620
  %v622 = vpop.f32.mrb[0].mxu0
  %v623 = vpop.f32.mrb[0].mxu0
  %v624 = vadd.f32 %v504, %v623
  %v625 = vpop.f32.mrb[0].mxu0
  %626 = vmatprep.mubr.bf16.mxu0 0
  %627 = vmatmul.mubr.bf16.gmra.mrb[0].mxu0 %v403
  %v628 = vpop.f32.mrb[0].mxu0
  %v629 = vadd.f32 %v509, %v628
  %v630 = vpop.f32.mrb[0].mxu0
  %v631 = vpop.f32.mrb[0].mxu0
  %v632 = vadd.f32 %v512, %v631
  %v633 = vpop.f32.mrb[0].mxu0
  %634 = vmatprep.mubr.bf16.mxu0 0
  %635 = vmatmul.mubr.bf16.gmra.mrb[0].mxu0 %v406
  %v636 = vpop.f32.mrb[0].mxu0
  %v637 = vadd.f32 %v517, %v636
  %v638 = vpop.f32.mrb[0].mxu0
  %v639 = vpop.f32.mrb[0].mxu0
  %v640 = vadd.f32 %v520, %v639
  %v641 = vpop.f32.mrb[0].mxu0
  %642 = vmatprep.mubr.bf16.mxu0 0
  %643 = vmatmul.mubr.bf16.gmra.mrb[0].mxu0 %v409
  %v644 = vpop.f32.mrb[0].mxu0
  %v645 = vadd.f32 %v525, %v644
  %v646 = vpop.f32.mrb[0].mxu0
  %v647 = vpop.f32.mrb[0].mxu0
  %v648 = vadd.f32 %v528, %v647
  %v649 = vpop.f32.mrb[0].mxu0
  %650 = vmatprep.mubr.bf16.mxu0 0
  %651 = vmatmul.mubr.bf16.gmra.mrb[0].mxu0 %v412
  %v652 = vpop.f32.mrb[0].mxu0
  %v653 = vadd.f32 %v533, %v652
  %v654 = vpop.f32.mrb[0].mxu0
  %v655 = vpop.f32.mrb[0].mxu0
  %v656 = vpop.f32.mrb[0].mxu0
  %657 = vdwg.mxu0
  %v658 = vmax.f32 %v573, 0.0
  %v659 = vmax.f32 %v576, 0.0
  %v660 = vmax.f32 %v581, 0.0
  %v661 = vmax.f32 %v584, 0.0
  %v662 = vmax.f32 %v589, 0.0
  %v663 = vmax.f32 %v592, 0.0
  %v664 = vmax.f32 %v597, 0.0
  %v665 = vmax.f32 %v600, 0.0
  %v666 = vmax.f32 %v605, 0.0
  %v667 = vmax.f32 %v608, 0.0
  %v668 = vmax.f32 %v613, 0.0
  %v669 = vmax.f32 %v616, 0.0
  %v670 = vmax.f32 %v621, 0.0
  %v671 = vmax.f32 %v624, 0.0
  %v672 = vmax.f32 %v629, 0.0
  %v673 = vmax.f32 %v632, 0.0
  %v674 = vmax.f32 %v637, 0.0
  %v675 = vmax.f32 %v640, 0.0
  %v676 = vmax.f32 %v645, 0.0
  %v677 = vmax.f32 %v648, 0.0
  %v678 = vmax.f32 %v653, 0.0
  %vm679 = vcmask 261120
  %680 = vst.msk [vmem:[%s3] sm:$0xff] %vm679, %v658
  %681 = vst.msk [vmem:[%s3 + $0x8] sm:$0xff] %vm679, %v659
  %682 = vst.msk [vmem:[%s3 + $0x10] sm:$0xff] %vm679, %v660
  %683 = vst.msk [vmem:[%s3 + $0x18] sm:$0xff] %vm679, %v661
  %684 = vst.msk [vmem:[%s3 + $0x20] sm:$0xff] %vm679, %v662
  %685 = vst.msk [vmem:[%s3 + $0x28] sm:$0xff] %vm679, %v663
  %686 = vst.msk [vmem:[%s3 + $0x30] sm:$0xff] %vm679, %v664
  %687 = vst.msk [vmem:[%s3 + $0x38] sm:$0xff] %vm679, %v665
  %688 = vst.msk [vmem:[%s3 + $0x40] sm:$0xff] %vm679, %v666
  %689 = vst.msk [vmem:[%s3 + $0x48] sm:$0xff] %vm679, %v667
  %690 = vst.msk [vmem:[%s3 + $0x50] sm:$0xff] %vm679, %v668
  %691 = vst.msk [vmem:[%s3 + $0x58] sm:$0xff] %vm679, %v669
  %692 = vst.msk [vmem:[%s3 + $0x60] sm:$0xff] %vm679, %v670
  %693 = vst.msk [vmem:[%s3 + $0x68] sm:$0xff] %vm679, %v671
  %694 = vst.msk [vmem:[%s3 + $0x70] sm:$0xff] %vm679, %v672
  %695 = vst.msk [vmem:[%s3 + $0x78] sm:$0xff] %vm679, %v673
  %696 = vst.msk [vmem:[%s3 + $0x80] sm:$0xff] %vm679, %v674
  %697 = vst.msk [vmem:[%s3 + $0x88] sm:$0xff] %vm679, %v675
  %698 = vst.msk [vmem:[%s3 + $0x90] sm:$0xff] %vm679, %v676
  %699 = vst.msk [vmem:[%s3 + $0x98] sm:$0xff] %vm679, %v677
  %700 = vst.msk [vmem:[%s3 + $0xa0] sm:$0xff] %vm679, %v678
  // Predicated region
  $region14: #{solo_v1_forward.20} parent=0 // pred_check
    _
  $region15: #{solo_v1_forward.20} parent=0 // pred_check_branch
    %702 = sbr.rel (0) target = $region17
  $region16: #{solo_v1_forward.20} parent=0 // pred_region
    _
  $region17: #{solo_v1_forward.20} parent=0 // pred_fallthru
    _
  // Predicated region
  $region18: #{solo_v1_forward.20} parent=0 // pred_check
    _
  $region19: #{solo_v1_forward.20} parent=0 // pred_check_branch
    %704 = sbr.rel (0) target = $region21
  $region20: #{solo_v1_forward.20} parent=0 // pred_region
    _
  $region21: #{solo_v1_forward.20} parent=0 // pred_fallthru
    _

// kernel: solo_v1_forward.21
$region0: #{solo_v1_forward.21}
  #allocation0 [shape = 'u32[]', space=smem, size = 0x4, offset = 0x4, fixed_abs, tag = 'smem constant byte address 0x4 - core index']
  #allocation1 [shape = 'u32[144,128]{1,0:T(1,128)}', space=vmem, size = 0x12000, scoped, tag = 'internal scratch']
  %s0 = inlined_call_operand.vmem [shape: bf16[168,32], index: 0, kind: input, shape index: {}]
  %s1 = inlined_call_operand.vmem [shape: bf16[32,84], index: 1, kind: input, shape index: {}]
  %s2 = inlined_call_operand.vmem [shape: f32[1,84], index: 2, kind: input, shape index: {}]
  %s3 = inlined_call_operand.vmem [shape: f32[168,84], index: 3, kind: output, shape index: {}]
  %s4 = sld [smem:[#allocation0]]
  $region22: #{solo_v1_forward.21} parent=0
    _
  %s6 = ssub.s32 1, %s4
  %s7 = scalar_select 0, %s6, %s4
  // Predicated region
  $region2: #{solo_v1_forward.21} parent=0 // pred_check
    _
  $region3: #{solo_v1_forward.21} parent=0 // pred_check_branch
    %9 = sbr.rel (0) target = $region5
  $region4: #{solo_v1_forward.21} parent=0 // pred_region
    _
  $region5: #{solo_v1_forward.21} parent=0 // pred_fallthru
    _
  // Predicated region
  $region6: #{solo_v1_forward.21} parent=0 // pred_check
    _
  $region7: #{solo_v1_forward.21} parent=0 // pred_check_branch
    %11 = sbr.rel (0) target = $region9
  $region8: #{solo_v1_forward.21} parent=0 // pred_region
    _
  $region9: #{solo_v1_forward.21} parent=0 // pred_fallthru
    _
  // Predicated region
  $region10: #{solo_v1_forward.21} parent=0 // pred_check
    _
  $region11: #{solo_v1_forward.21} parent=0 // pred_check_branch
    %13 = sbr.rel (0) target = $region13
  $region12: #{solo_v1_forward.21} parent=0 // pred_region
    _
  $region13: #{solo_v1_forward.21} parent=0 // pred_fallthru
    _
  %v15 = vld [vmem:[%s0] sm:$0xf]
  %v16 = vld [vmem:[%s0 + $0x4] sm:$0xf]
  %v17 = vld [vmem:[%s0 + $0x8] sm:$0xf]
  %v18 = vld [vmem:[%s0 + $0xc] sm:$0xf]
  %v19 = vld [vmem:[%s0 + $0x10] sm:$0xf]
  %v20 = vld [vmem:[%s0 + $0x14] sm:$0xf]
  %v21 = vld [vmem:[%s0 + $0x18] sm:$0xf]
  %v22 = vld [vmem:[%s0 + $0x1c] sm:$0xf]
  %v23 = vld [vmem:[%s0 + $0x20] sm:$0xf]
  %v24 = vld [vmem:[%s0 + $0x24] sm:$0xf]
  %v25 = vld [vmem:[%s0 + $0x28] sm:$0xf]
  %v26 = vld [vmem:[%s0 + $0x2c] sm:$0xf]
  %v27 = vld [vmem:[%s0 + $0x30] sm:$0xf]
  %v28 = vld [vmem:[%s0 + $0x34] sm:$0xf]
  %v29 = vld [vmem:[%s0 + $0x38] sm:$0xf]
  %v30 = vld [vmem:[%s0 + $0x3c] sm:$0xf]
  %v31 = vld [vmem:[%s0 + $0x40] sm:$0xf]
  %v32 = vld [vmem:[%s0 + $0x44] sm:$0xf]
  %v33 = vld [vmem:[%s0 + $0x48] sm:$0xf]
  %v34 = vld [vmem:[%s0 + $0x4c] sm:$0xf]
  %v35 = vld [vmem:[%s0 + $0x50] sm:$0xf]
  %v36 = vld [vmem:[%s1] sm:$0xf]
  %v37 = vld [vmem:[%s1 + $0x4] sm:$0xf]
  %v38 = vld [vmem:[%s1 + $0x8] sm:$0xf]
  %v39 = vld [vmem:[%s1 + $0xc] sm:$0xf]
  %v40 = vld [vmem:[%s2] sm:$0x1]
  %v42 = vlaneseq
  %v43 = vshrl.u32 %v42, 7
  %v44 = vsub.s32 0, %v43
  %v45 = vrot.slane %v40, %v44
  %v68 = vunpack.c.l.b16 %v15
  %v69 = vunpack.c.l.b16 %v16
  %v70 = vunpack.c.l.b16 %v17
  %v71 = vunpack.c.l.b16 %v18
  %v72 = vunpack.c.l.b16 %v19
  %v73 = vunpack.c.l.b16 %v20
  %v74 = vunpack.c.l.b16 %v21
  %v75 = vunpack.c.l.b16 %v22
  %v76 = vunpack.c.l.b16 %v23
  %v77 = vunpack.c.l.b16 %v24
  %v78 = vunpack.c.l.b16 %v25
  %v79 = vunpack.c.l.b16 %v26
  %v80 = vunpack.c.l.b16 %v27
  %v81 = vunpack.c.l.b16 %v28
  %v82 = vunpack.c.l.b16 %v29
  %v83 = vunpack.c.l.b16 %v30
  %v84 = vunpack.c.l.b16 %v31
  %v85 = vunpack.c.l.b16 %v32
  %v86 = vunpack.c.l.b16 %v33
  %v87 = vunpack.c.l.b16 %v34
  %v88 = vunpack.c.l.b16 %v35
  %v89 = vpack.c.b16 %v69, %v68
  %v90 = vpack.c.b16 %v71, %v70
  %v91 = vpack.c.b16 %v73, %v72
  %v92 = vpack.c.b16 %v75, %v74
  %v93 = vpack.c.b16 %v77, %v76
  %v94 = vpack.c.b16 %v79, %v78
  %v95 = vpack.c.b16 %v81, %v80
  %v96 = vpack.c.b16 %v83, %v82
  %v97 = vpack.c.b16 %v85, %v84
  %v98 = vpack.c.b16 %v87, %v86
  %v99 = vpack.c.b16 %v88, %v88
  %v104 = vunpack.c.l.b16 %v36
  %v105 = vunpack.c.l.b16 %v37
  %v106 = vunpack.c.l.b16 %v38
  %v107 = vunpack.c.l.b16 %v39
  %v108 = vpack.c.b16 %v105, %v104
  %v109 = vpack.c.b16 %v107, %v106
  %vm112 = vcmask 261120
  %v114 = vsel %vm112, %v89, 0
  %v117 = vsel %vm112, %v90, 0
  %v120 = vsel %vm112, %v91, 0
  %v123 = vsel %vm112, %v92, 0
  %v126 = vsel %vm112, %v93, 0
  %v129 = vsel %vm112, %v94, 0
  %v132 = vsel %vm112, %v95, 0
  %v135 = vsel %vm112, %v96, 0
  %v138 = vsel %vm112, %v97, 0
  %v141 = vsel %vm112, %v98, 0
  %v144 = vsel %vm112, %v99, 0
  %146 = vmatprep.subr.bf16.mxu0 0
  %147 = vmatpush1.bf16.msra.mxu0 %v108
  %148 = vmatprep.subr.bf16.mxu0 0
  %149 = vmatpush1.bf16.msra.mxu0 %v109
  %150 = vmatprep.subr.bf16.mxu0 0
  %151 = vmatpush1.bf16.msra.mxu0 0
  %152 = vmatprep.subr.bf16.mxu0 0
  %153 = vmatpush1.bf16.msra.mxu0 0
  %154 = vmatprep.subr.bf16.mxu0 0
  %155 = vmatpush1.bf16.msra.mxu0 0
  %156 = vmatprep.subr.bf16.mxu0 0
  %157 = vmatpush1.bf16.msra.mxu0 0
  %158 = vmatprep.subr.bf16.mxu0 0
  %159 = vmatpush1.bf16.msra.mxu0 0
  %160 = vmatprep.subr.bf16.mxu0 0
  %161 = vmatpush1.bf16.msra.mxu0 0
  %162 = vmatprep.subr.bf16.mxu0 0
  %163 = vmatpush1.bf16.msra.mxu0 0
  %164 = vmatprep.subr.bf16.mxu0 0
  %165 = vmatpush1.bf16.msra.mxu0 0
  %166 = vmatprep.subr.bf16.mxu0 0
  %167 = vmatpush1.bf16.msra.mxu0 0
  %168 = vmatprep.subr.bf16.mxu0 0
  %169 = vmatpush1.bf16.msra.mxu0 0
  %170 = vmatprep.subr.bf16.mxu0 0
  %171 = vmatpush1.bf16.msra.mxu0 0
  %172 = vmatprep.subr.bf16.mxu0 0
  %173 = vmatpush1.bf16.msra.mxu0 0
  %174 = vmatprep.subr.bf16.mxu0 0
  %175 = vmatpush1.bf16.msra.mxu0 0
  %176 = vmatprep.subr.bf16.mxu0 0
  %177 = vmatpush1.bf16.msra.mxu0 0
  %178 = vmatprep.mubr.bf16.mxu0 0
  %179 = vmatmul.mubr.bf16.gmra.mrb[0].mxu0 %v114
  %v180 = vpop.f32.mrb[0].mxu0
  %v181 = vadd.f32 %v45, %v180
  %v182 = vpop.f32.mrb[0].mxu0
  %v183 = vpop.f32.mrb[0].mxu0
  %v184 = vadd.f32 %v45, %v183
  %v185 = vpop.f32.mrb[0].mxu0
  %186 = vmatprep.mubr.bf16.mxu0 0
  %187 = vmatmul.mubr.bf16.gmra.mrb[0].mxu0 %v117
  %v188 = vpop.f32.mrb[0].mxu0
  %v189 = vadd.f32 %v45, %v188
  %v190 = vpop.f32.mrb[0].mxu0
  %v191 = vpop.f32.mrb[0].mxu0
  %v192 = vadd.f32 %v45, %v191
  %v193 = vpop.f32.mrb[0].mxu0
  %194 = vmatprep.mubr.bf16.mxu0 0
  %195 = vmatmul.mubr.bf16.gmra.mrb[0].mxu0 %v120
  %v196 = vpop.f32.mrb[0].mxu0
  %v197 = vadd.f32 %v45, %v196
  %v198 = vpop.f32.mrb[0].mxu0
  %v199 = vpop.f32.mrb[0].mxu0
  %v200 = vadd.f32 %v45, %v199
  %v201 = vpop.f32.mrb[0].mxu0
  %202 = vmatprep.mubr.bf16.mxu0 0
  %203 = vmatmul.mubr.bf16.gmra.mrb[0].mxu0 %v123
  %v204 = vpop.f32.mrb[0].mxu0
  %v205 = vadd.f32 %v45, %v204
  %v206 = vpop.f32.mrb[0].mxu0
  %v207 = vpop.f32.mrb[0].mxu0
  %v208 = vadd.f32 %v45, %v207
  %v209 = vpop.f32.mrb[0].mxu0
  %210 = vmatprep.mubr.bf16.mxu0 0
  %211 = vmatmul.mubr.bf16.gmra.mrb[0].mxu0 %v126
  %v212 = vpop.f32.mrb[0].mxu0
  %v213 = vadd.f32 %v45, %v212
  %v214 = vpop.f32.mrb[0].mxu0
  %v215 = vpop.f32.mrb[0].mxu0
  %v216 = vadd.f32 %v45, %v215
  %v217 = vpop.f32.mrb[0].mxu0
  %218 = vmatprep.mubr.bf16.mxu0 0
  %219 = vmatmul.mubr.bf16.gmra.mrb[0].mxu0 %v129
  %v220 = vpop.f32.mrb[0].mxu0
  %v221 = vadd.f32 %v45, %v220
  %v222 = vpop.f32.mrb[0].mxu0
  %v223 = vpop.f32.mrb[0].mxu0
  %v224 = vadd.f32 %v45, %v223
  %v225 = vpop.f32.mrb[0].mxu0
  %226 = vmatprep.mubr.bf16.mxu0 0
  %227 = vmatmul.mubr.bf16.gmra.mrb[0].mxu0 %v132
  %v228 = vpop.f32.mrb[0].mxu0
  %v229 = vadd.f32 %v45, %v228
  %v230 = vpop.f32.mrb[0].mxu0
  %v231 = vpop.f32.mrb[0].mxu0
  %v232 = vadd.f32 %v45, %v231
  %v233 = vpop.f32.mrb[0].mxu0
  %234 = vmatprep.mubr.bf16.mxu0 0
  %235 = vmatmul.mubr.bf16.gmra.mrb[0].mxu0 %v135
  %v236 = vpop.f32.mrb[0].mxu0
  %v237 = vadd.f32 %v45, %v236
  %v238 = vpop.f32.mrb[0].mxu0
  %v239 = vpop.f32.mrb[0].mxu0
  %v240 = vadd.f32 %v45, %v239
  %v241 = vpop.f32.mrb[0].mxu0
  %242 = vmatprep.mubr.bf16.mxu0 0
  %243 = vmatmul.mubr.bf16.gmra.mrb[0].mxu0 %v138
  %v244 = vpop.f32.mrb[0].mxu0
  %v245 = vadd.f32 %v45, %v244
  %v246 = vpop.f32.mrb[0].mxu0
  %v247 = vpop.f32.mrb[0].mxu0
  %v248 = vadd.f32 %v45, %v247
  %v249 = vpop.f32.mrb[0].mxu0
  %250 = vmatprep.mubr.bf16.mxu0 0
  %251 = vmatmul.mubr.bf16.gmra.mrb[0].mxu0 %v141
  %v252 = vpop.f32.mrb[0].mxu0
  %v253 = vadd.f32 %v45, %v252
  %v254 = vpop.f32.mrb[0].mxu0
  %v255 = vpop.f32.mrb[0].mxu0
  %v256 = vadd.f32 %v45, %v255
  %v257 = vpop.f32.mrb[0].mxu0
  %258 = vmatprep.mubr.bf16.mxu0 0
  %259 = vmatmul.mubr.bf16.gmra.mrb[0].mxu0 %v144
  %v260 = vpop.f32.mrb[0].mxu0
  %v261 = vadd.f32 %v45, %v260
  %v262 = vpop.f32.mrb[0].mxu0
  %v263 = vpop.f32.mrb[0].mxu0
  %v264 = vpop.f32.mrb[0].mxu0
  %265 = vdwg.mxu0
  %vm266 = vcmask 687104
  %267 = vst.msk [vmem:[%s3] sm:$0xff] %vm266, %v181
  %268 = vst.msk [vmem:[%s3 + $0x8] sm:$0xff] %vm266, %v184
  %269 = vst.msk [vmem:[%s3 + $0x10] sm:$0xff] %vm266, %v189
  %270 = vst.msk [vmem:[%s3 + $0x18] sm:$0xff] %vm266, %v192
  %271 = vst.msk [vmem:[%s3 + $0x20] sm:$0xff] %vm266, %v197
  %272 = vst.msk [vmem:[%s3 + $0x28] sm:$0xff] %vm266, %v200
  %273 = vst.msk [vmem:[%s3 + $0x30] sm:$0xff] %vm266, %v205
  %274 = vst.msk [vmem:[%s3 + $0x38] sm:$0xff] %vm266, %v208
  %275 = vst.msk [vmem:[%s3 + $0x40] sm:$0xff] %vm266, %v213
  %276 = vst.msk [vmem:[%s3 + $0x48] sm:$0xff] %vm266, %v216
  %277 = vst.msk [vmem:[%s3 + $0x50] sm:$0xff] %vm266, %v221
  %278 = vst.msk [vmem:[%s3 + $0x58] sm:$0xff] %vm266, %v224
  %279 = vst.msk [vmem:[%s3 + $0x60] sm:$0xff] %vm266, %v229
  %280 = vst.msk [vmem:[%s3 + $0x68] sm:$0xff] %vm266, %v232
  %281 = vst.msk [vmem:[%s3 + $0x70] sm:$0xff] %vm266, %v237
  %282 = vst.msk [vmem:[%s3 + $0x78] sm:$0xff] %vm266, %v240
  %283 = vst.msk [vmem:[%s3 + $0x80] sm:$0xff] %vm266, %v245
  %284 = vst.msk [vmem:[%s3 + $0x88] sm:$0xff] %vm266, %v248
  %285 = vst.msk [vmem:[%s3 + $0x90] sm:$0xff] %vm266, %v253
  %286 = vst.msk [vmem:[%s3 + $0x98] sm:$0xff] %vm266, %v256
  %287 = vst.msk [vmem:[%s3 + $0xa0] sm:$0xff] %vm266, %v261
  // Predicated region
  $region14: #{solo_v1_forward.21} parent=0 // pred_check
    _
  $region15: #{solo_v1_forward.21} parent=0 // pred_check_branch
    %289 = sbr.rel (0) target = $region17
  $region16: #{solo_v1_forward.21} parent=0 // pred_region
    _
  $region17: #{solo_v1_forward.21} parent=0 // pred_fallthru
    _
  // Predicated region
  $region18: #{solo_v1_forward.21} parent=0 // pred_check
    _
  $region19: #{solo_v1_forward.21} parent=0 // pred_check_branch
    %291 = sbr.rel (0) target = $region21
  $region20: #{solo_v1_forward.21} parent=0 // pred_region
    _
  $region21: #{solo_v1_forward.21} parent=0 // pred_fallthru
    _

</llo_original>
